<compile_context>
chip_gen: v7x
topology: tpu7x:2x2x1
jax: 0.10.0
libtpu: 0.0.40
codegen_flags: <defaults>
</compile_context>

<pallas_src>
import functools

import jax
import jax.numpy as jnp
from jax.experimental import pallas as pl
from jax.experimental.pallas import tpu as pltpu


def _round_up(x, m):
    return (x + m - 1) // m * m


def _largest_divisor_leq(n, cap):
    for d in range(min(n, cap), 0, -1):
        if n % d == 0:
            return d
    return 1


def _pick_channel_tile(C, cap):
    # Whole-C block when it fits the budget; otherwise the largest divisor of C
    # that is a multiple of 8 (BlockSpec second-to-last-dim constraint).
    if C <= cap:
        return C
    for d in range(min(C, cap), 0, -1):
        if C % d == 0 and d % 8 == 0:
            return d
    return C


_STATIC_CHAN_UNROLL = 16


def _spatial_attention_kernel(w_ref, x_ref, o_ref,
                              sum_ref, max_ref, pad_ref, col_ref,
                              *, H, W, K, C, Ct, Bt, NC):
    # w_ref   : SMEM (scalar-prefetched) flat (2*K*K,) f32 weights, (c, ky, kx) major.
    # x_ref   : VMEM (Bt, Ct, HW) input block (lane-dense spatial layout).
    # o_ref   : VMEM (Bt, 1, HW) output block.
    # sum_ref : VMEM (Bt, HW) f32 running channel sum   (used when NC > 1).
    # max_ref : VMEM (Bt, HW) f32 running channel max   (used when NC > 1).
    # pad_ref : VMEM (R, pad_w) f32 zero-padded avg|max maps, batch packed on lanes.
    # col_ref : VMEM (R, col_w) f32 lane-aligned kx column band (shared lane shift).
    HW = H * W
    p = K // 2
    Hp = H + 2 * p
    Wp = W + 2 * p
    col_w = col_ref.shape[1]
    c_idx = pl.program_id(1)

    def plane(c):
        return x_ref[:, pl.ds(c, 1), :].reshape(Bt, HW).astype(jnp.float32)

    # --- Partial channel reduction over this (Bt, Ct, HW) block (lane-dense). ---
    if Ct <= _STATIC_CHAN_UNROLL:
        planes = [plane(c) for c in range(Ct)]
        if Ct == 1:
            psum = planes[0]
            pmax = planes[0]
        else:
            # Two independent sum/max chains keep VALU slots busy.
            s0, s1 = planes[0], planes[1]
            m0, m1 = planes[0], planes[1]
            for c in range(2, Ct):
                if c & 1:
                    s1 = s1 + planes[c]
                    m1 = jnp.maximum(m1, planes[c])
                else:
                    s0 = s0 + planes[c]
                    m0 = jnp.maximum(m0, planes[c])
            psum = s0 + s1
            pmax = jnp.maximum(m0, m1)
    else:
        # Large channel tiles: pairwise loop, partial unroll, dual accumulators.
        p0, p1 = plane(0), plane(1)
        npairs = Ct // 2

        def pair_body(i, carry):
            s0, s1, m0, m1 = carry
            a = plane(2 * i)
            b = plane(2 * i + 1)
            return s0 + a, s1 + b, jnp.maximum(m0, a), jnp.maximum(m1, b)

        s0, s1, m0, m1 = jax.lax.fori_loop(
            1, npairs, pair_body, (p0, p1, p0, p1), unroll=4)
        if Ct % 2:
            t = plane(Ct - 1)
            s0 = s0 + t
            m0 = jnp.maximum(m0, t)
        psum = s0 + s1
        pmax = jnp.maximum(m0, m1)

    # --- Finalize: zero-pad, 7x7 conv as weighted shifted taps, sigmoid, store. ---
    def finalize(tot_sum, tot_max):
        avg = (tot_sum * (1.0 / C)).reshape(Bt, H, W)
        mx = tot_max.reshape(Bt, H, W)

        # Zero-padded maps in VMEM scratch: avg at rows [0, Hp), max at rows
        # [Hp, 2*Hp); batch element b occupies the lane band [b*Wp, (b+1)*Wp).
        pad_ref[...] = jnp.zeros(pad_ref.shape, jnp.float32)
        for b in range(Bt):
            c0 = b * Wp + p
            pad_ref[p:p + H, c0:c0 + W] = avg[b]
            pad_ref[Hp + p:Hp + p + H, c0:c0 + W] = mx[b]

        # 4 independent accumulators (avg/max x ky-parity) for VALU ILP.
        acc = [jnp.zeros((H, col_w), jnp.float32) for _ in range(4)]
        for kx in range(K):
            # One lane shift per kx, shared by both maps and all Bt batch elements.
            col_ref[...] = pad_ref[:, kx:kx + col_w]
            for ky in range(K):
                w_avg = w_ref[ky * K + kx]
                w_max = w_ref[K * K + ky * K + kx]
                op_a = col_ref[ky:ky + H, :]                # sublane-offset loads
                op_m = col_ref[Hp + ky:Hp + ky + H, :]      # (no register relayout)
                i = ky & 1
                acc[i] = acc[i] + w_avg * op_a
                acc[2 + i] = acc[2 + i] + w_max * op_m

        total = (acc[0] + acc[1]) + (acc[2] + acc[3])
        outs = [total[:, b * Wp:b * Wp + W] for b in range(Bt)]
        res = jax.nn.sigmoid(jnp.stack(outs, axis=0))       # (Bt, H, W)
        # Single lane-dense full-block store.
        o_ref[...] = res.reshape(Bt, 1, HW).astype(o_ref.dtype)

    if NC == 1:
        finalize(psum, pmax)
    else:
        @pl.when(c_idx == 0)
        def _():
            sum_ref[...] = psum
            max_ref[...] = pmax

        @pl.when(c_idx > 0)
        def _():
            sum_ref[...] = sum_ref[...] + psum
            max_ref[...] = jnp.maximum(max_ref[...], pmax)

        @pl.when(c_idx == NC - 1)
        def _():
            finalize(sum_ref[...], max_ref[...])


def spatial_attention(x, weight, kernel_size=7):
    """x: (B, C, H, W); weight: (1, 2, K, K) bias-free conv weight. -> (B, 1, H, W)."""
    B, C, H, W = x.shape
    K = kernel_size
    assert K % 2 == 1, "kernel_size must be odd (same-padding conv)"
    assert weight.shape == (1, 2, K, K)
    p = K // 2
    HW = H * W
    Hp, Wp = H + 2 * p, W + 2 * p
    itemsize = jnp.dtype(x.dtype).itemsize

    x_flat = x.reshape(B, C, HW)                       # lane-dense spatial layout
    w_flat = weight.reshape(-1).astype(jnp.float32)    # (2*K*K,), (c, ky, kx) major

    # --- Tile selection ------------------------------------------------------
    # Several batch elements per grid step (amortize fixed per-step cost, share
    # the conv's lane shifts across the batch).  NOTE(v7x): when B is tiny this
    # can leave a size-1 parallel grid (one TensorCore); with B >= 2*Bt both
    # cores get work via the "parallel" batch axis.
    Bt = _largest_divisor_leq(B, 8)
    # Channel tile: keep the (Bt, Ct, HW) block <= ~4 MiB; larger C is handled
    # by the channel reduction grid axis instead of a huge resident block.
    ct_cap = max(1, (4 << 20) // max(1, Bt * HW * itemsize))
    Ct = _pick_channel_tile(C, ct_cap)
    NB, NC = B // Bt, C // Ct

    R = _round_up(2 * Hp, 8)                           # rows: avg | max stacked
    col_w = _round_up(Bt * Wp, 128)                    # batch packed along lanes
    pad_w = col_w + 128                                # headroom for the kx shift

    kernel = functools.partial(_spatial_attention_kernel,
                               H=H, W=W, K=K, C=C, Ct=Ct, Bt=Bt, NC=NC)

    # --- VMEM limit: actual need + headroom, capped by the chip's capacity ----
    x_block = Bt * Ct * HW * itemsize
    o_block = Bt * HW * itemsize
    scratch = (2 * Bt * HW + R * pad_w + R * col_w) * 4
    need = 2 * (x_block + o_block) + scratch + (4 << 20)
    try:
        phys = getattr(pltpu.get_tpu_info(), "vmem_capacity_bytes", 64 << 20)
    except Exception:  # conservative fallback (v7x-sized VMEM)
        phys = 64 << 20
    cap = (phys * 3) // 4
    vmem_limit = int(min(max(need, 32 << 20), max(cap, need)))

    # TODO(synk): for very large H*W an H-tiled spatial grid axis with halo rows
    # would be needed; not required at these shapes.
    out_flat = pl.pallas_call(
        kernel,
        out_shape=jax.ShapeDtypeStruct((B, 1, HW), x.dtype),
        grid_spec=pltpu.PrefetchScalarGridSpec(
            num_scalar_prefetch=1,                     # conv weights -> SMEM
            grid=(NB, NC),                             # reduction (C) axis last
            in_specs=[
                pl.BlockSpec((Bt, Ct, HW), lambda b, c, w: (b, c, 0)),
            ],
            out_specs=pl.BlockSpec((Bt, 1, HW), lambda b, c, w: (b, 0, 0)),
            scratch_shapes=[
                pltpu.VMEM((Bt, HW), jnp.float32),     # running channel sum
                pltpu.VMEM((Bt, HW), jnp.float32),     # running channel max
                pltpu.VMEM((R, pad_w), jnp.float32),   # zero-padded avg|max maps
                pltpu.VMEM((R, col_w), jnp.float32),   # per-kx lane-aligned band
            ],
        ),
        compiler_params=pltpu.CompilerParams(
            dimension_semantics=("parallel", "arbitrary"),
            vmem_limit_bytes=vmem_limit,
        ),
    )(w_flat, x_flat)

    return out_flat.reshape(B, 1, H, W)


def _reference(x, weight, kernel_size=7):
    # Pure-JAX reference mirroring the PyTorch forward (sanity check).
    avg = jnp.mean(x, axis=1, keepdims=True)
    mx = jnp.max(x, axis=1, keepdims=True)
    cat = jnp.concatenate([avg, mx], axis=1)            # (B, 2, H, W)
    pad = kernel_size // 2
    out = jax.lax.conv_general_dilated(
        cat, weight, window_strides=(1, 1),
        padding=((pad, pad), (pad, pad)),
        dimension_numbers=("NCHW", "OIHW", "NCHW"))
    return jax.nn.sigmoid(out)


if __name__ == "__main__":
    key = jax.random.PRNGKey(0)
    k_x, k_w = jax.random.split(key)

    B, C, H, W, K = 2, 4, 16, 16, 7
    x = jax.random.normal(k_x, (B, C, H, W), dtype=jnp.float32)
    # Deterministic synthetic conv1 weight: (out=1, in=2, K, K), no bias.
    weight = 0.1 * jax.random.normal(k_w, (1, 2, K, K), dtype=jnp.float32)

    out = jax.block_until_ready(spatial_attention(x, weight, kernel_size=K))
    ref = jax.block_until_ready(_reference(x, weight, kernel_size=K))

    assert out.shape == (B, 1, H, W)
    err = float(jnp.max(jnp.abs(out - ref)))
    assert err < 1e-5, f"mismatch vs JAX reference: {err}"

    print("KERNEL_OK")
</pallas_src>

<mosaic_0001>
module attributes {stable_mosaic.version = 11 : i64} {
  func.func @_spatial_attention_kernel(%arg0: i32, %arg1: i32, %arg2: memref<98xf32, #tpu.memory_space<smem>>, %arg3: memref<2x4x256xf32, #tpu.memory_space<vmem>>, %arg4: memref<2x1x256xf32, #tpu.memory_space<vmem>>, %arg5: memref<2x256xf32, #tpu.memory_space<vmem>>, %arg6: memref<2x256xf32, #tpu.memory_space<vmem>>, %arg7: memref<48x256xf32, #tpu.memory_space<vmem>>, %arg8: memref<48x128xf32, #tpu.memory_space<vmem>>) attributes {dimension_semantics = [#tpu.dimension_semantics<parallel>, #tpu.dimension_semantics<arbitrary>], iteration_bounds = array<i64: 1, 1>, scalar_prefetch = 1 : i64, scratch_operands = 4 : i64, tpu.core_type = #tpu.core_type<tc>, window_params = [{transform_indices = @transform_0, window_bounds = array<i64: 2, 4, 256>}, {transform_indices = @transform_1, window_bounds = array<i64: 2, 1, 256>}]} {
    %c0 = arith.constant 0 : index
    %c0_0 = arith.constant 0 : index
    %c0_1 = arith.constant 0 : index
    %0 = vector.load %arg3[%c0, %c0_0, %c0_1] : memref<2x4x256xf32, #tpu.memory_space<vmem>>, vector<2x1x256xf32>
    %1 = vector.shape_cast %0 : vector<2x1x256xf32> to vector<2x256xf32>
    %c0_2 = arith.constant 0 : index
    %c1 = arith.constant 1 : index
    %c0_3 = arith.constant 0 : index
    %2 = vector.load %arg3[%c0_2, %c1, %c0_3] : memref<2x4x256xf32, #tpu.memory_space<vmem>>, vector<2x1x256xf32>
    %3 = vector.shape_cast %2 : vector<2x1x256xf32> to vector<2x256xf32>
    %c0_4 = arith.constant 0 : index
    %c2 = arith.constant 2 : index
    %c0_5 = arith.constant 0 : index
    %4 = vector.load %arg3[%c0_4, %c2, %c0_5] : memref<2x4x256xf32, #tpu.memory_space<vmem>>, vector<2x1x256xf32>
    %5 = vector.shape_cast %4 : vector<2x1x256xf32> to vector<2x256xf32>
    %c0_6 = arith.constant 0 : index
    %c3 = arith.constant 3 : index
    %c0_7 = arith.constant 0 : index
    %6 = vector.load %arg3[%c0_6, %c3, %c0_7] : memref<2x4x256xf32, #tpu.memory_space<vmem>>, vector<2x1x256xf32>
    %7 = vector.shape_cast %6 : vector<2x1x256xf32> to vector<2x256xf32>
    %8 = arith.addf %1, %5 : vector<2x256xf32>
    %9 = arith.maximumf %1, %5 : vector<2x256xf32>
    %10 = arith.addf %3, %7 : vector<2x256xf32>
    %11 = arith.maximumf %3, %7 : vector<2x256xf32>
    %12 = arith.addf %8, %10 : vector<2x256xf32>
    %13 = arith.maximumf %9, %11 : vector<2x256xf32>
    %cst = arith.constant 2.500000e-01 : f32
    %14 = vector.broadcast %cst : f32 to vector<2x256xf32>
    %15 = arith.mulf %12, %14 : vector<2x256xf32>
    %16 = vector.shape_cast %15 : vector<2x256xf32> to vector<2x16x16xf32>
    %17 = vector.shape_cast %13 : vector<2x256xf32> to vector<2x16x16xf32>
    %cst_8 = arith.constant 0.000000e+00 : f32
    %18 = vector.broadcast %cst_8 : f32 to vector<48x256xf32>
    %c0_9 = arith.constant 0 : index
    %c0_10 = arith.constant 0 : index
    %19 = vector.load %arg7[%c0_9, %c0_10] : memref<48x256xf32, #tpu.memory_space<vmem>>, vector<48x256xf32>
    tpu.vector_store %arg7[%c0_9, %c0_10], %18 {strides = array<i32>} : memref<48x256xf32, #tpu.memory_space<vmem>>, vector<48x256xf32>,
    %20 = vector.extract_strided_slice %16 {offsets = [0, 0, 0], sizes = [1, 16, 16], strides = [1, 1, 1]} : vector<2x16x16xf32> to vector<1x16x16xf32>
    %21 = vector.shape_cast %20 : vector<1x16x16xf32> to vector<16x16xf32>
    %c3_11 = arith.constant 3 : index
    %c3_12 = arith.constant 3 : index
    %22 = vector.load %arg7[%c3_11, %c3_12] : memref<48x256xf32, #tpu.memory_space<vmem>>, vector<16x16xf32>
    tpu.vector_store %arg7[%c3_11, %c3_12], %21 {strides = array<i32>} : memref<48x256xf32, #tpu.memory_space<vmem>>, vector<16x16xf32>,
    %23 = vector.extract_strided_slice %17 {offsets = [0, 0, 0], sizes = [1, 16, 16], strides = [1, 1, 1]} : vector<2x16x16xf32> to vector<1x16x16xf32>
    %24 = vector.shape_cast %23 : vector<1x16x16xf32> to vector<16x16xf32>
    %c25 = arith.constant 25 : index
    %c3_13 = arith.constant 3 : index
    %25 = vector.load %arg7[%c25, %c3_13] : memref<48x256xf32, #tpu.memory_space<vmem>>, vector<16x16xf32>
    tpu.vector_store %arg7[%c25, %c3_13], %24 {strides = array<i32>} : memref<48x256xf32, #tpu.memory_space<vmem>>, vector<16x16xf32>,
    %26 = vector.extract_strided_slice %16 {offsets = [1, 0, 0], sizes = [1, 16, 16], strides = [1, 1, 1]} : vector<2x16x16xf32> to vector<1x16x16xf32>
    %27 = vector.shape_cast %26 : vector<1x16x16xf32> to vector<16x16xf32>
    %c3_14 = arith.constant 3 : index
    %c25_15 = arith.constant 25 : index
    %28 = vector.load %arg7[%c3_14, %c25_15] : memref<48x256xf32, #tpu.memory_space<vmem>>, vector<16x16xf32>
    tpu.vector_store %arg7[%c3_14, %c25_15], %27 {strides = array<i32>} : memref<48x256xf32, #tpu.memory_space<vmem>>, vector<16x16xf32>,
    %29 = vector.extract_strided_slice %17 {offsets = [1, 0, 0], sizes = [1, 16, 16], strides = [1, 1, 1]} : vector<2x16x16xf32> to vector<1x16x16xf32>
    %30 = vector.shape_cast %29 : vector<1x16x16xf32> to vector<16x16xf32>
    %c25_16 = arith.constant 25 : index
    %c25_17 = arith.constant 25 : index
    %31 = vector.load %arg7[%c25_16, %c25_17] : memref<48x256xf32, #tpu.memory_space<vmem>>, vector<16x16xf32>
    tpu.vector_store %arg7[%c25_16, %c25_17], %30 {strides = array<i32>} : memref<48x256xf32, #tpu.memory_space<vmem>>, vector<16x16xf32>,
    %cst_18 = arith.constant 0.000000e+00 : f32
    %32 = vector.broadcast %cst_18 : f32 to vector<16x128xf32>
    %cst_19 = arith.constant 0.000000e+00 : f32
    %33 = vector.broadcast %cst_19 : f32 to vector<16x128xf32>
    %cst_20 = arith.constant 0.000000e+00 : f32
    %34 = vector.broadcast %cst_20 : f32 to vector<16x128xf32>
    %cst_21 = arith.constant 0.000000e+00 : f32
    %35 = vector.broadcast %cst_21 : f32 to vector<16x128xf32>
    %c0_22 = arith.constant 0 : index
    %c0_23 = arith.constant 0 : index
    %36 = vector.load %arg7[%c0_22, %c0_23] : memref<48x256xf32, #tpu.memory_space<vmem>>, vector<48x128xf32>
    %c0_24 = arith.constant 0 : index
    %c0_25 = arith.constant 0 : index
    %37 = vector.load %arg8[%c0_24, %c0_25] : memref<48x128xf32, #tpu.memory_space<vmem>>, vector<48x128xf32>
    tpu.vector_store %arg8[%c0_24, %c0_25], %36 {strides = array<i32>} : memref<48x128xf32, #tpu.memory_space<vmem>>, vector<48x128xf32>,
    %c0_26 = arith.constant 0 : index
    %38 = memref.load %arg2[%c0_26] : memref<98xf32, #tpu.memory_space<smem>>
    %c49 = arith.constant 49 : index
    %39 = memref.load %arg2[%c49] : memref<98xf32, #tpu.memory_space<smem>>
    %c0_27 = arith.constant 0 : index
    %c0_28 = arith.constant 0 : index
    %40 = vector.load %arg8[%c0_27, %c0_28] : memref<48x128xf32, #tpu.memory_space<vmem>>, vector<16x128xf32>
    %c22 = arith.constant 22 : index
    %c0_29 = arith.constant 0 : index
    %41 = vector.load %arg8[%c22, %c0_29] : memref<48x128xf32, #tpu.memory_space<vmem>>, vector<16x128xf32>
    %42 = vector.broadcast %38 : f32 to vector<16x128xf32>
    %43 = arith.mulf %42, %40 : vector<16x128xf32>
    %44 = arith.addf %32, %43 : vector<16x128xf32>
    %45 = vector.broadcast %39 : f32 to vector<16x128xf32>
    %46 = arith.mulf %45, %41 : vector<16x128xf32>
    %47 = arith.addf %34, %46 : vector<16x128xf32>
    %c7 = arith.constant 7 : index
    %48 = memref.load %arg2[%c7] : memref<98xf32, #tpu.memory_space<smem>>
    %c56 = arith.constant 56 : index
    %49 = memref.load %arg2[%c56] : memref<98xf32, #tpu.memory_space<smem>>
    %c1_30 = arith.constant 1 : index
    %c0_31 = arith.constant 0 : index
    %50 = vector.load %arg8[%c1_30, %c0_31] : memref<48x128xf32, #tpu.memory_space<vmem>>, vector<16x128xf32>
    %c23 = arith.constant 23 : index
    %c0_32 = arith.constant 0 : index
    %51 = vector.load %arg8[%c23, %c0_32] : memref<48x128xf32, #tpu.memory_space<vmem>>, vector<16x128xf32>
    %52 = vector.broadcast %48 : f32 to vector<16x128xf32>
    %53 = arith.mulf %52, %50 : vector<16x128xf32>
    %54 = arith.addf %33, %53 : vector<16x128xf32>
    %55 = vector.broadcast %49 : f32 to vector<16x128xf32>
    %56 = arith.mulf %55, %51 : vector<16x128xf32>
    %57 = arith.addf %35, %56 : vector<16x128xf32>
    %c14 = arith.constant 14 : index
    %58 = memref.load %arg2[%c14] : memref<98xf32, #tpu.memory_space<smem>>
    %c63 = arith.constant 63 : index
    %59 = memref.load %arg2[%c63] : memref<98xf32, #tpu.memory_space<smem>>
    %c2_33 = arith.constant 2 : index
    %c0_34 = arith.constant 0 : index
    %60 = vector.load %arg8[%c2_33, %c0_34] : memref<48x128xf32, #tpu.memory_space<vmem>>, vector<16x128xf32>
    %c24 = arith.constant 24 : index
    %c0_35 = arith.constant 0 : index
    %61 = vector.load %arg8[%c24, %c0_35] : memref<48x128xf32, #tpu.memory_space<vmem>>, vector<16x128xf32>
    %62 = vector.broadcast %58 : f32 to vector<16x128xf32>
    %63 = arith.mulf %62, %60 : vector<16x128xf32>
    %64 = arith.addf %44, %63 : vector<16x128xf32>
    %65 = vector.broadcast %59 : f32 to vector<16x128xf32>
    %66 = arith.mulf %65, %61 : vector<16x128xf32>
    %67 = arith.addf %47, %66 : vector<16x128xf32>
    %c21 = arith.constant 21 : index
    %68 = memref.load %arg2[%c21] : memref<98xf32, #tpu.memory_space<smem>>
    %c70 = arith.constant 70 : index
    %69 = memref.load %arg2[%c70] : memref<98xf32, #tpu.memory_space<smem>>
    %c3_36 = arith.constant 3 : index
    %c0_37 = arith.constant 0 : index
    %70 = vector.load %arg8[%c3_36, %c0_37] : memref<48x128xf32, #tpu.memory_space<vmem>>, vector<16x128xf32>
    %c25_38 = arith.constant 25 : index
    %c0_39 = arith.constant 0 : index
    %71 = vector.load %arg8[%c25_38, %c0_39] : memref<48x128xf32, #tpu.memory_space<vmem>>, vector<16x128xf32>
    %72 = vector.broadcast %68 : f32 to vector<16x128xf32>
    %73 = arith.mulf %72, %70 : vector<16x128xf32>
    %74 = arith.addf %54, %73 : vector<16x128xf32>
    %75 = vector.broadcast %69 : f32 to vector<16x128xf32>
    %76 = arith.mulf %75, %71 : vector<16x128xf32>
    %77 = arith.addf %57, %76 : vector<16x128xf32>
    %c28 = arith.constant 28 : index
    %78 = memref.load %arg2[%c28] : memref<98xf32, #tpu.memory_space<smem>>
    %c77 = arith.constant 77 : index
    %79 = memref.load %arg2[%c77] : memref<98xf32, #tpu.memory_space<smem>>
    %c4 = arith.constant 4 : index
    %c0_40 = arith.constant 0 : index
    %80 = vector.load %arg8[%c4, %c0_40] : memref<48x128xf32, #tpu.memory_space<vmem>>, vector<16x128xf32>
    %c26 = arith.constant 26 : index
    %c0_41 = arith.constant 0 : index
    %81 = vector.load %arg8[%c26, %c0_41] : memref<48x128xf32, #tpu.memory_space<vmem>>, vector<16x128xf32>
    %82 = vector.broadcast %78 : f32 to vector<16x128xf32>
    %83 = arith.mulf %82, %80 : vector<16x128xf32>
    %84 = arith.addf %64, %83 : vector<16x128xf32>
    %85 = vector.broadcast %79 : f32 to vector<16x128xf32>
    %86 = arith.mulf %85, %81 : vector<16x128xf32>
    %87 = arith.addf %67, %86 : vector<16x128xf32>
    %c35 = arith.constant 35 : index
    %88 = memref.load %arg2[%c35] : memref<98xf32, #tpu.memory_space<smem>>
    %c84 = arith.constant 84 : index
    %89 = memref.load %arg2[%c84] : memref<98xf32, #tpu.memory_space<smem>>
    %c5 = arith.constant 5 : index
    %c0_42 = arith.constant 0 : index
    %90 = vector.load %arg8[%c5, %c0_42] : memref<48x128xf32, #tpu.memory_space<vmem>>, vector<16x128xf32>
    %c27 = arith.constant 27 : index
    %c0_43 = arith.constant 0 : index
    %91 = vector.load %arg8[%c27, %c0_43] : memref<48x128xf32, #tpu.memory_space<vmem>>, vector<16x128xf32>
    %92 = vector.broadcast %88 : f32 to vector<16x128xf32>
    %93 = arith.mulf %92, %90 : vector<16x128xf32>
    %94 = arith.addf %74, %93 : vector<16x128xf32>
    %95 = vector.broadcast %89 : f32 to vector<16x128xf32>
    %96 = arith.mulf %95, %91 : vector<16x128xf32>
    %97 = arith.addf %77, %96 : vector<16x128xf32>
    %c42 = arith.constant 42 : index
    %98 = memref.load %arg2[%c42] : memref<98xf32, #tpu.memory_space<smem>>
    %c91 = arith.constant 91 : index
    %99 = memref.load %arg2[%c91] : memref<98xf32, #tpu.memory_space<smem>>
    %c6 = arith.constant 6 : index
    %c0_44 = arith.constant 0 : index
    %100 = vector.load %arg8[%c6, %c0_44] : memref<48x128xf32, #tpu.memory_space<vmem>>, vector<16x128xf32>
    %c28_45 = arith.constant 28 : index
    %c0_46 = arith.constant 0 : index
    %101 = vector.load %arg8[%c28_45, %c0_46] : memref<48x128xf32, #tpu.memory_space<vmem>>, vector<16x128xf32>
    %102 = vector.broadcast %98 : f32 to vector<16x128xf32>
    %103 = arith.mulf %102, %100 : vector<16x128xf32>
    %104 = arith.addf %84, %103 : vector<16x128xf32>
    %105 = vector.broadcast %99 : f32 to vector<16x128xf32>
    %106 = arith.mulf %105, %101 : vector<16x128xf32>
    %107 = arith.addf %87, %106 : vector<16x128xf32>
    %c0_47 = arith.constant 0 : index
    %c1_48 = arith.constant 1 : index
    %108 = vector.load %arg7[%c0_47, %c1_48] : memref<48x256xf32, #tpu.memory_space<vmem>>, vector<48x128xf32>
    %c0_49 = arith.constant 0 : index
    %c0_50 = arith.constant 0 : index
    %109 = vector.load %arg8[%c0_49, %c0_50] : memref<48x128xf32, #tpu.memory_space<vmem>>, vector<48x128xf32>
    tpu.vector_store %arg8[%c0_49, %c0_50], %108 {strides = array<i32>} : memref<48x128xf32, #tpu.memory_space<vmem>>, vector<48x128xf32>,
    %c1_51 = arith.constant 1 : index
    %110 = memref.load %arg2[%c1_51] : memref<98xf32, #tpu.memory_space<smem>>
    %c50 = arith.constant 50 : index
    %111 = memref.load %arg2[%c50] : memref<98xf32, #tpu.memory_space<smem>>
    %c0_52 = arith.constant 0 : index
    %c0_53 = arith.constant 0 : index
    %112 = vector.load %arg8[%c0_52, %c0_53] : memref<48x128xf32, #tpu.memory_space<vmem>>, vector<16x128xf32>
    %c22_54 = arith.constant 22 : index
    %c0_55 = arith.constant 0 : index
    %113 = vector.load %arg8[%c22_54, %c0_55] : memref<48x128xf32, #tpu.memory_space<vmem>>, vector<16x128xf32>
    %114 = vector.broadcast %110 : f32 to vector<16x128xf32>
    %115 = arith.mulf %114, %112 : vector<16x128xf32>
    %116 = arith.addf %104, %115 : vector<16x128xf32>
    %117 = vector.broadcast %111 : f32 to vector<16x128xf32>
    %118 = arith.mulf %117, %113 : vector<16x128xf32>
    %119 = arith.addf %107, %118 : vector<16x128xf32>
    %c8 = arith.constant 8 : index
    %120 = memref.load %arg2[%c8] : memref<98xf32, #tpu.memory_space<smem>>
    %c57 = arith.constant 57 : index
    %121 = memref.load %arg2[%c57] : memref<98xf32, #tpu.memory_space<smem>>
    %c1_56 = arith.constant 1 : index
    %c0_57 = arith.constant 0 : index
    %122 = vector.load %arg8[%c1_56, %c0_57] : memref<48x128xf32, #tpu.memory_space<vmem>>, vector<16x128xf32>
    %c23_58 = arith.constant 23 : index
    %c0_59 = arith.constant 0 : index
    %123 = vector.load %arg8[%c23_58, %c0_59] : memref<48x128xf32, #tpu.memory_space<vmem>>, vector<16x128xf32>
    %124 = vector.broadcast %120 : f32 to vector<16x128xf32>
    %125 = arith.mulf %124, %122 : vector<16x128xf32>
    %126 = arith.addf %94, %125 : vector<16x128xf32>
    %127 = vector.broadcast %121 : f32 to vector<16x128xf32>
    %128 = arith.mulf %127, %123 : vector<16x128xf32>
    %129 = arith.addf %97, %128 : vector<16x128xf32>
    %c15 = arith.constant 15 : index
    %130 = memref.load %arg2[%c15] : memref<98xf32, #tpu.memory_space<smem>>
    %c64 = arith.constant 64 : index
    %131 = memref.load %arg2[%c64] : memref<98xf32, #tpu.memory_space<smem>>
    %c2_60 = arith.constant 2 : index
    %c0_61 = arith.constant 0 : index
    %132 = vector.load %arg8[%c2_60, %c0_61] : memref<48x128xf32, #tpu.memory_space<vmem>>, vector<16x128xf32>
    %c24_62 = arith.constant 24 : index
    %c0_63 = arith.constant 0 : index
    %133 = vector.load %arg8[%c24_62, %c0_63] : memref<48x128xf32, #tpu.memory_space<vmem>>, vector<16x128xf32>
    %134 = vector.broadcast %130 : f32 to vector<16x128xf32>
    %135 = arith.mulf %134, %132 : vector<16x128xf32>
    %136 = arith.addf %116, %135 : vector<16x128xf32>
    %137 = vector.broadcast %131 : f32 to vector<16x128xf32>
    %138 = arith.mulf %137, %133 : vector<16x128xf32>
    %139 = arith.addf %119, %138 : vector<16x128xf32>
    %c22_64 = arith.constant 22 : index
    %140 = memref.load %arg2[%c22_64] : memref<98xf32, #tpu.memory_space<smem>>
    %c71 = arith.constant 71 : index
    %141 = memref.load %arg2[%c71] : memref<98xf32, #tpu.memory_space<smem>>
    %c3_65 = arith.constant 3 : index
    %c0_66 = arith.constant 0 : index
    %142 = vector.load %arg8[%c3_65, %c0_66] : memref<48x128xf32, #tpu.memory_space<vmem>>, vector<16x128xf32>
    %c25_67 = arith.constant 25 : index
    %c0_68 = arith.constant 0 : index
    %143 = vector.load %arg8[%c25_67, %c0_68] : memref<48x128xf32, #tpu.memory_space<vmem>>, vector<16x128xf32>
    %144 = vector.broadcast %140 : f32 to vector<16x128xf32>
    %145 = arith.mulf %144, %142 : vector<16x128xf32>
    %146 = arith.addf %126, %145 : vector<16x128xf32>
    %147 = vector.broadcast %141 : f32 to vector<16x128xf32>
    %148 = arith.mulf %147, %143 : vector<16x128xf32>
    %149 = arith.addf %129, %148 : vector<16x128xf32>
    %c29 = arith.constant 29 : index
    %150 = memref.load %arg2[%c29] : memref<98xf32, #tpu.memory_space<smem>>
    %c78 = arith.constant 78 : index
    %151 = memref.load %arg2[%c78] : memref<98xf32, #tpu.memory_space<smem>>
    %c4_69 = arith.constant 4 : index
    %c0_70 = arith.constant 0 : index
    %152 = vector.load %arg8[%c4_69, %c0_70] : memref<48x128xf32, #tpu.memory_space<vmem>>, vector<16x128xf32>
    %c26_71 = arith.constant 26 : index
    %c0_72 = arith.constant 0 : index
    %153 = vector.load %arg8[%c26_71, %c0_72] : memref<48x128xf32, #tpu.memory_space<vmem>>, vector<16x128xf32>
    %154 = vector.broadcast %150 : f32 to vector<16x128xf32>
    %155 = arith.mulf %154, %152 : vector<16x128xf32>
    %156 = arith.addf %136, %155 : vector<16x128xf32>
    %157 = vector.broadcast %151 : f32 to vector<16x128xf32>
    %158 = arith.mulf %157, %153 : vector<16x128xf32>
    %159 = arith.addf %139, %158 : vector<16x128xf32>
    %c36 = arith.constant 36 : index
    %160 = memref.load %arg2[%c36] : memref<98xf32, #tpu.memory_space<smem>>
    %c85 = arith.constant 85 : index
    %161 = memref.load %arg2[%c85] : memref<98xf32, #tpu.memory_space<smem>>
    %c5_73 = arith.constant 5 : index
    %c0_74 = arith.constant 0 : index
    %162 = vector.load %arg8[%c5_73, %c0_74] : memref<48x128xf32, #tpu.memory_space<vmem>>, vector<16x128xf32>
    %c27_75 = arith.constant 27 : index
    %c0_76 = arith.constant 0 : index
    %163 = vector.load %arg8[%c27_75, %c0_76] : memref<48x128xf32, #tpu.memory_space<vmem>>, vector<16x128xf32>
    %164 = vector.broadcast %160 : f32 to vector<16x128xf32>
    %165 = arith.mulf %164, %162 : vector<16x128xf32>
    %166 = arith.addf %146, %165 : vector<16x128xf32>
    %167 = vector.broadcast %161 : f32 to vector<16x128xf32>
    %168 = arith.mulf %167, %163 : vector<16x128xf32>
    %169 = arith.addf %149, %168 : vector<16x128xf32>
    %c43 = arith.constant 43 : index
    %170 = memref.load %arg2[%c43] : memref<98xf32, #tpu.memory_space<smem>>
    %c92 = arith.constant 92 : index
    %171 = memref.load %arg2[%c92] : memref<98xf32, #tpu.memory_space<smem>>
    %c6_77 = arith.constant 6 : index
    %c0_78 = arith.constant 0 : index
    %172 = vector.load %arg8[%c6_77, %c0_78] : memref<48x128xf32, #tpu.memory_space<vmem>>, vector<16x128xf32>
    %c28_79 = arith.constant 28 : index
    %c0_80 = arith.constant 0 : index
    %173 = vector.load %arg8[%c28_79, %c0_80] : memref<48x128xf32, #tpu.memory_space<vmem>>, vector<16x128xf32>
    %174 = vector.broadcast %170 : f32 to vector<16x128xf32>
    %175 = arith.mulf %174, %172 : vector<16x128xf32>
    %176 = arith.addf %156, %175 : vector<16x128xf32>
    %177 = vector.broadcast %171 : f32 to vector<16x128xf32>
    %178 = arith.mulf %177, %173 : vector<16x128xf32>
    %179 = arith.addf %159, %178 : vector<16x128xf32>
    %c0_81 = arith.constant 0 : index
    %c2_82 = arith.constant 2 : index
    %180 = vector.load %arg7[%c0_81, %c2_82] : memref<48x256xf32, #tpu.memory_space<vmem>>, vector<48x128xf32>
    %c0_83 = arith.constant 0 : index
    %c0_84 = arith.constant 0 : index
    %181 = vector.load %arg8[%c0_83, %c0_84] : memref<48x128xf32, #tpu.memory_space<vmem>>, vector<48x128xf32>
    tpu.vector_store %arg8[%c0_83, %c0_84], %180 {strides = array<i32>} : memref<48x128xf32, #tpu.memory_space<vmem>>, vector<48x128xf32>,
    %c2_85 = arith.constant 2 : index
    %182 = memref.load %arg2[%c2_85] : memref<98xf32, #tpu.memory_space<smem>>
    %c51 = arith.constant 51 : index
    %183 = memref.load %arg2[%c51] : memref<98xf32, #tpu.memory_space<smem>>
    %c0_86 = arith.constant 0 : index
    %c0_87 = arith.constant 0 : index
    %184 = vector.load %arg8[%c0_86, %c0_87] : memref<48x128xf32, #tpu.memory_space<vmem>>, vector<16x128xf32>
    %c22_88 = arith.constant 22 : index
    %c0_89 = arith.constant 0 : index
    %185 = vector.load %arg8[%c22_88, %c0_89] : memref<48x128xf32, #tpu.memory_space<vmem>>, vector<16x128xf32>
    %186 = vector.broadcast %182 : f32 to vector<16x128xf32>
    %187 = arith.mulf %186, %184 : vector<16x128xf32>
    %188 = arith.addf %176, %187 : vector<16x128xf32>
    %189 = vector.broadcast %183 : f32 to vector<16x128xf32>
    %190 = arith.mulf %189, %185 : vector<16x128xf32>
    %191 = arith.addf %179, %190 : vector<16x128xf32>
    %c9 = arith.constant 9 : index
    %192 = memref.load %arg2[%c9] : memref<98xf32, #tpu.memory_space<smem>>
    %c58 = arith.constant 58 : index
    %193 = memref.load %arg2[%c58] : memref<98xf32, #tpu.memory_space<smem>>
    %c1_90 = arith.constant 1 : index
    %c0_91 = arith.constant 0 : index
    %194 = vector.load %arg8[%c1_90, %c0_91] : memref<48x128xf32, #tpu.memory_space<vmem>>, vector<16x128xf32>
    %c23_92 = arith.constant 23 : index
    %c0_93 = arith.constant 0 : index
    %195 = vector.load %arg8[%c23_92, %c0_93] : memref<48x128xf32, #tpu.memory_space<vmem>>, vector<16x128xf32>
    %196 = vector.broadcast %192 : f32 to vector<16x128xf32>
    %197 = arith.mulf %196, %194 : vector<16x128xf32>
    %198 = arith.addf %166, %197 : vector<16x128xf32>
    %199 = vector.broadcast %193 : f32 to vector<16x128xf32>
    %200 = arith.mulf %199, %195 : vector<16x128xf32>
    %201 = arith.addf %169, %200 : vector<16x128xf32>
    %c16 = arith.constant 16 : index
    %202 = memref.load %arg2[%c16] : memref<98xf32, #tpu.memory_space<smem>>
    %c65 = arith.constant 65 : index
    %203 = memref.load %arg2[%c65] : memref<98xf32, #tpu.memory_space<smem>>
    %c2_94 = arith.constant 2 : index
    %c0_95 = arith.constant 0 : index
    %204 = vector.load %arg8[%c2_94, %c0_95] : memref<48x128xf32, #tpu.memory_space<vmem>>, vector<16x128xf32>
    %c24_96 = arith.constant 24 : index
    %c0_97 = arith.constant 0 : index
    %205 = vector.load %arg8[%c24_96, %c0_97] : memref<48x128xf32, #tpu.memory_space<vmem>>, vector<16x128xf32>
    %206 = vector.broadcast %202 : f32 to vector<16x128xf32>
    %207 = arith.mulf %206, %204 : vector<16x128xf32>
    %208 = arith.addf %188, %207 : vector<16x128xf32>
    %209 = vector.broadcast %203 : f32 to vector<16x128xf32>
    %210 = arith.mulf %209, %205 : vector<16x128xf32>
    %211 = arith.addf %191, %210 : vector<16x128xf32>
    %c23_98 = arith.constant 23 : index
    %212 = memref.load %arg2[%c23_98] : memref<98xf32, #tpu.memory_space<smem>>
    %c72 = arith.constant 72 : index
    %213 = memref.load %arg2[%c72] : memref<98xf32, #tpu.memory_space<smem>>
    %c3_99 = arith.constant 3 : index
    %c0_100 = arith.constant 0 : index
    %214 = vector.load %arg8[%c3_99, %c0_100] : memref<48x128xf32, #tpu.memory_space<vmem>>, vector<16x128xf32>
    %c25_101 = arith.constant 25 : index
    %c0_102 = arith.constant 0 : index
    %215 = vector.load %arg8[%c25_101, %c0_102] : memref<48x128xf32, #tpu.memory_space<vmem>>, vector<16x128xf32>
    %216 = vector.broadcast %212 : f32 to vector<16x128xf32>
    %217 = arith.mulf %216, %214 : vector<16x128xf32>
    %218 = arith.addf %198, %217 : vector<16x128xf32>
    %219 = vector.broadcast %213 : f32 to vector<16x128xf32>
    %220 = arith.mulf %219, %215 : vector<16x128xf32>
    %221 = arith.addf %201, %220 : vector<16x128xf32>
    %c30 = arith.constant 30 : index
    %222 = memref.load %arg2[%c30] : memref<98xf32, #tpu.memory_space<smem>>
    %c79 = arith.constant 79 : index
    %223 = memref.load %arg2[%c79] : memref<98xf32, #tpu.memory_space<smem>>
    %c4_103 = arith.constant 4 : index
    %c0_104 = arith.constant 0 : index
    %224 = vector.load %arg8[%c4_103, %c0_104] : memref<48x128xf32, #tpu.memory_space<vmem>>, vector<16x128xf32>
    %c26_105 = arith.constant 26 : index
    %c0_106 = arith.constant 0 : index
    %225 = vector.load %arg8[%c26_105, %c0_106] : memref<48x128xf32, #tpu.memory_space<vmem>>, vector<16x128xf32>
    %226 = vector.broadcast %222 : f32 to vector<16x128xf32>
    %227 = arith.mulf %226, %224 : vector<16x128xf32>
    %228 = arith.addf %208, %227 : vector<16x128xf32>
    %229 = vector.broadcast %223 : f32 to vector<16x128xf32>
    %230 = arith.mulf %229, %225 : vector<16x128xf32>
    %231 = arith.addf %211, %230 : vector<16x128xf32>
    %c37 = arith.constant 37 : index
    %232 = memref.load %arg2[%c37] : memref<98xf32, #tpu.memory_space<smem>>
    %c86 = arith.constant 86 : index
    %233 = memref.load %arg2[%c86] : memref<98xf32, #tpu.memory_space<smem>>
    %c5_107 = arith.constant 5 : index
    %c0_108 = arith.constant 0 : index
    %234 = vector.load %arg8[%c5_107, %c0_108] : memref<48x128xf32, #tpu.memory_space<vmem>>, vector<16x128xf32>
    %c27_109 = arith.constant 27 : index
    %c0_110 = arith.constant 0 : index
    %235 = vector.load %arg8[%c27_109, %c0_110] : memref<48x128xf32, #tpu.memory_space<vmem>>, vector<16x128xf32>
    %236 = vector.broadcast %232 : f32 to vector<16x128xf32>
    %237 = arith.mulf %236, %234 : vector<16x128xf32>
    %238 = arith.addf %218, %237 : vector<16x128xf32>
    %239 = vector.broadcast %233 : f32 to vector<16x128xf32>
    %240 = arith.mulf %239, %235 : vector<16x128xf32>
    %241 = arith.addf %221, %240 : vector<16x128xf32>
    %c44 = arith.constant 44 : index
    %242 = memref.load %arg2[%c44] : memref<98xf32, #tpu.memory_space<smem>>
    %c93 = arith.constant 93 : index
    %243 = memref.load %arg2[%c93] : memref<98xf32, #tpu.memory_space<smem>>
    %c6_111 = arith.constant 6 : index
    %c0_112 = arith.constant 0 : index
    %244 = vector.load %arg8[%c6_111, %c0_112] : memref<48x128xf32, #tpu.memory_space<vmem>>, vector<16x128xf32>
    %c28_113 = arith.constant 28 : index
    %c0_114 = arith.constant 0 : index
    %245 = vector.load %arg8[%c28_113, %c0_114] : memref<48x128xf32, #tpu.memory_space<vmem>>, vector<16x128xf32>
    %246 = vector.broadcast %242 : f32 to vector<16x128xf32>
    %247 = arith.mulf %246, %244 : vector<16x128xf32>
    %248 = arith.addf %228, %247 : vector<16x128xf32>
    %249 = vector.broadcast %243 : f32 to vector<16x128xf32>
    %250 = arith.mulf %249, %245 : vector<16x128xf32>
    %251 = arith.addf %231, %250 : vector<16x128xf32>
    %c0_115 = arith.constant 0 : index
    %c3_116 = arith.constant 3 : index
    %252 = vector.load %arg7[%c0_115, %c3_116] : memref<48x256xf32, #tpu.memory_space<vmem>>, vector<48x128xf32>
    %c0_117 = arith.constant 0 : index
    %c0_118 = arith.constant 0 : index
    %253 = vector.load %arg8[%c0_117, %c0_118] : memref<48x128xf32, #tpu.memory_space<vmem>>, vector<48x128xf32>
    tpu.vector_store %arg8[%c0_117, %c0_118], %252 {strides = array<i32>} : memref<48x128xf32, #tpu.memory_space<vmem>>, vector<48x128xf32>,
    %c3_119 = arith.constant 3 : index
    %254 = memref.load %arg2[%c3_119] : memref<98xf32, #tpu.memory_space<smem>>
    %c52 = arith.constant 52 : index
    %255 = memref.load %arg2[%c52] : memref<98xf32, #tpu.memory_space<smem>>
    %c0_120 = arith.constant 0 : index
    %c0_121 = arith.constant 0 : index
    %256 = vector.load %arg8[%c0_120, %c0_121] : memref<48x128xf32, #tpu.memory_space<vmem>>, vector<16x128xf32>
    %c22_122 = arith.constant 22 : index
    %c0_123 = arith.constant 0 : index
    %257 = vector.load %arg8[%c22_122, %c0_123] : memref<48x128xf32, #tpu.memory_space<vmem>>, vector<16x128xf32>
    %258 = vector.broadcast %254 : f32 to vector<16x128xf32>
    %259 = arith.mulf %258, %256 : vector<16x128xf32>
    %260 = arith.addf %248, %259 : vector<16x128xf32>
    %261 = vector.broadcast %255 : f32 to vector<16x128xf32>
    %262 = arith.mulf %261, %257 : vector<16x128xf32>
    %263 = arith.addf %251, %262 : vector<16x128xf32>
    %c10 = arith.constant 10 : index
    %264 = memref.load %arg2[%c10] : memref<98xf32, #tpu.memory_space<smem>>
    %c59 = arith.constant 59 : index
    %265 = memref.load %arg2[%c59] : memref<98xf32, #tpu.memory_space<smem>>
    %c1_124 = arith.constant 1 : index
    %c0_125 = arith.constant 0 : index
    %266 = vector.load %arg8[%c1_124, %c0_125] : memref<48x128xf32, #tpu.memory_space<vmem>>, vector<16x128xf32>
    %c23_126 = arith.constant 23 : index
    %c0_127 = arith.constant 0 : index
    %267 = vector.load %arg8[%c23_126, %c0_127] : memref<48x128xf32, #tpu.memory_space<vmem>>, vector<16x128xf32>
    %268 = vector.broadcast %264 : f32 to vector<16x128xf32>
    %269 = arith.mulf %268, %266 : vector<16x128xf32>
    %270 = arith.addf %238, %269 : vector<16x128xf32>
    %271 = vector.broadcast %265 : f32 to vector<16x128xf32>
    %272 = arith.mulf %271, %267 : vector<16x128xf32>
    %273 = arith.addf %241, %272 : vector<16x128xf32>
    %c17 = arith.constant 17 : index
    %274 = memref.load %arg2[%c17] : memref<98xf32, #tpu.memory_space<smem>>
    %c66 = arith.constant 66 : index
    %275 = memref.load %arg2[%c66] : memref<98xf32, #tpu.memory_space<smem>>
    %c2_128 = arith.constant 2 : index
    %c0_129 = arith.constant 0 : index
    %276 = vector.load %arg8[%c2_128, %c0_129] : memref<48x128xf32, #tpu.memory_space<vmem>>, vector<16x128xf32>
    %c24_130 = arith.constant 24 : index
    %c0_131 = arith.constant 0 : index
    %277 = vector.load %arg8[%c24_130, %c0_131] : memref<48x128xf32, #tpu.memory_space<vmem>>, vector<16x128xf32>
    %278 = vector.broadcast %274 : f32 to vector<16x128xf32>
    %279 = arith.mulf %278, %276 : vector<16x128xf32>
    %280 = arith.addf %260, %279 : vector<16x128xf32>
    %281 = vector.broadcast %275 : f32 to vector<16x128xf32>
    %282 = arith.mulf %281, %277 : vector<16x128xf32>
    %283 = arith.addf %263, %282 : vector<16x128xf32>
    %c24_132 = arith.constant 24 : index
    %284 = memref.load %arg2[%c24_132] : memref<98xf32, #tpu.memory_space<smem>>
    %c73 = arith.constant 73 : index
    %285 = memref.load %arg2[%c73] : memref<98xf32, #tpu.memory_space<smem>>
    %c3_133 = arith.constant 3 : index
    %c0_134 = arith.constant 0 : index
    %286 = vector.load %arg8[%c3_133, %c0_134] : memref<48x128xf32, #tpu.memory_space<vmem>>, vector<16x128xf32>
    %c25_135 = arith.constant 25 : index
    %c0_136 = arith.constant 0 : index
    %287 = vector.load %arg8[%c25_135, %c0_136] : memref<48x128xf32, #tpu.memory_space<vmem>>, vector<16x128xf32>
    %288 = vector.broadcast %284 : f32 to vector<16x128xf32>
    %289 = arith.mulf %288, %286 : vector<16x128xf32>
    %290 = arith.addf %270, %289 : vector<16x128xf32>
    %291 = vector.broadcast %285 : f32 to vector<16x128xf32>
    %292 = arith.mulf %291, %287 : vector<16x128xf32>
    %293 = arith.addf %273, %292 : vector<16x128xf32>
    %c31 = arith.constant 31 : index
    %294 = memref.load %arg2[%c31] : memref<98xf32, #tpu.memory_space<smem>>
    %c80 = arith.constant 80 : index
    %295 = memref.load %arg2[%c80] : memref<98xf32, #tpu.memory_space<smem>>
    %c4_137 = arith.constant 4 : index
    %c0_138 = arith.constant 0 : index
    %296 = vector.load %arg8[%c4_137, %c0_138] : memref<48x128xf32, #tpu.memory_space<vmem>>, vector<16x128xf32>
    %c26_139 = arith.constant 26 : index
    %c0_140 = arith.constant 0 : index
    %297 = vector.load %arg8[%c26_139, %c0_140] : memref<48x128xf32, #tpu.memory_space<vmem>>, vector<16x128xf32>
    %298 = vector.broadcast %294 : f32 to vector<16x128xf32>
    %299 = arith.mulf %298, %296 : vector<16x128xf32>
    %300 = arith.addf %280, %299 : vector<16x128xf32>
    %301 = vector.broadcast %295 : f32 to vector<16x128xf32>
    %302 = arith.mulf %301, %297 : vector<16x128xf32>
    %303 = arith.addf %283, %302 : vector<16x128xf32>
    %c38 = arith.constant 38 : index
    %304 = memref.load %arg2[%c38] : memref<98xf32, #tpu.memory_space<smem>>
    %c87 = arith.constant 87 : index
    %305 = memref.load %arg2[%c87] : memref<98xf32, #tpu.memory_space<smem>>
    %c5_141 = arith.constant 5 : index
    %c0_142 = arith.constant 0 : index
    %306 = vector.load %arg8[%c5_141, %c0_142] : memref<48x128xf32, #tpu.memory_space<vmem>>, vector<16x128xf32>
    %c27_143 = arith.constant 27 : index
    %c0_144 = arith.constant 0 : index
    %307 = vector.load %arg8[%c27_143, %c0_144] : memref<48x128xf32, #tpu.memory_space<vmem>>, vector<16x128xf32>
    %308 = vector.broadcast %304 : f32 to vector<16x128xf32>
    %309 = arith.mulf %308, %306 : vector<16x128xf32>
    %310 = arith.addf %290, %309 : vector<16x128xf32>
    %311 = vector.broadcast %305 : f32 to vector<16x128xf32>
    %312 = arith.mulf %311, %307 : vector<16x128xf32>
    %313 = arith.addf %293, %312 : vector<16x128xf32>
    %c45 = arith.constant 45 : index
    %314 = memref.load %arg2[%c45] : memref<98xf32, #tpu.memory_space<smem>>
    %c94 = arith.constant 94 : index
    %315 = memref.load %arg2[%c94] : memref<98xf32, #tpu.memory_space<smem>>
    %c6_145 = arith.constant 6 : index
    %c0_146 = arith.constant 0 : index
    %316 = vector.load %arg8[%c6_145, %c0_146] : memref<48x128xf32, #tpu.memory_space<vmem>>, vector<16x128xf32>
    %c28_147 = arith.constant 28 : index
    %c0_148 = arith.constant 0 : index
    %317 = vector.load %arg8[%c28_147, %c0_148] : memref<48x128xf32, #tpu.memory_space<vmem>>, vector<16x128xf32>
    %318 = vector.broadcast %314 : f32 to vector<16x128xf32>
    %319 = arith.mulf %318, %316 : vector<16x128xf32>
    %320 = arith.addf %300, %319 : vector<16x128xf32>
    %321 = vector.broadcast %315 : f32 to vector<16x128xf32>
    %322 = arith.mulf %321, %317 : vector<16x128xf32>
    %323 = arith.addf %303, %322 : vector<16x128xf32>
    %c0_149 = arith.constant 0 : index
    %c4_150 = arith.constant 4 : index
    %324 = vector.load %arg7[%c0_149, %c4_150] : memref<48x256xf32, #tpu.memory_space<vmem>>, vector<48x128xf32>
    %c0_151 = arith.constant 0 : index
    %c0_152 = arith.constant 0 : index
    %325 = vector.load %arg8[%c0_151, %c0_152] : memref<48x128xf32, #tpu.memory_space<vmem>>, vector<48x128xf32>
    tpu.vector_store %arg8[%c0_151, %c0_152], %324 {strides = array<i32>} : memref<48x128xf32, #tpu.memory_space<vmem>>, vector<48x128xf32>,
    %c4_153 = arith.constant 4 : index
    %326 = memref.load %arg2[%c4_153] : memref<98xf32, #tpu.memory_space<smem>>
    %c53 = arith.constant 53 : index
    %327 = memref.load %arg2[%c53] : memref<98xf32, #tpu.memory_space<smem>>
    %c0_154 = arith.constant 0 : index
    %c0_155 = arith.constant 0 : index
    %328 = vector.load %arg8[%c0_154, %c0_155] : memref<48x128xf32, #tpu.memory_space<vmem>>, vector<16x128xf32>
    %c22_156 = arith.constant 22 : index
    %c0_157 = arith.constant 0 : index
    %329 = vector.load %arg8[%c22_156, %c0_157] : memref<48x128xf32, #tpu.memory_space<vmem>>, vector<16x128xf32>
    %330 = vector.broadcast %326 : f32 to vector<16x128xf32>
    %331 = arith.mulf %330, %328 : vector<16x128xf32>
    %332 = arith.addf %320, %331 : vector<16x128xf32>
    %333 = vector.broadcast %327 : f32 to vector<16x128xf32>
    %334 = arith.mulf %333, %329 : vector<16x128xf32>
    %335 = arith.addf %323, %334 : vector<16x128xf32>
    %c11 = arith.constant 11 : index
    %336 = memref.load %arg2[%c11] : memref<98xf32, #tpu.memory_space<smem>>
    %c60 = arith.constant 60 : index
    %337 = memref.load %arg2[%c60] : memref<98xf32, #tpu.memory_space<smem>>
    %c1_158 = arith.constant 1 : index
    %c0_159 = arith.constant 0 : index
    %338 = vector.load %arg8[%c1_158, %c0_159] : memref<48x128xf32, #tpu.memory_space<vmem>>, vector<16x128xf32>
    %c23_160 = arith.constant 23 : index
    %c0_161 = arith.constant 0 : index
    %339 = vector.load %arg8[%c23_160, %c0_161] : memref<48x128xf32, #tpu.memory_space<vmem>>, vector<16x128xf32>
    %340 = vector.broadcast %336 : f32 to vector<16x128xf32>
    %341 = arith.mulf %340, %338 : vector<16x128xf32>
    %342 = arith.addf %310, %341 : vector<16x128xf32>
    %343 = vector.broadcast %337 : f32 to vector<16x128xf32>
    %344 = arith.mulf %343, %339 : vector<16x128xf32>
    %345 = arith.addf %313, %344 : vector<16x128xf32>
    %c18 = arith.constant 18 : index
    %346 = memref.load %arg2[%c18] : memref<98xf32, #tpu.memory_space<smem>>
    %c67 = arith.constant 67 : index
    %347 = memref.load %arg2[%c67] : memref<98xf32, #tpu.memory_space<smem>>
    %c2_162 = arith.constant 2 : index
    %c0_163 = arith.constant 0 : index
    %348 = vector.load %arg8[%c2_162, %c0_163] : memref<48x128xf32, #tpu.memory_space<vmem>>, vector<16x128xf32>
    %c24_164 = arith.constant 24 : index
    %c0_165 = arith.constant 0 : index
    %349 = vector.load %arg8[%c24_164, %c0_165] : memref<48x128xf32, #tpu.memory_space<vmem>>, vector<16x128xf32>
    %350 = vector.broadcast %346 : f32 to vector<16x128xf32>
    %351 = arith.mulf %350, %348 : vector<16x128xf32>
    %352 = arith.addf %332, %351 : vector<16x128xf32>
    %353 = vector.broadcast %347 : f32 to vector<16x128xf32>
    %354 = arith.mulf %353, %349 : vector<16x128xf32>
    %355 = arith.addf %335, %354 : vector<16x128xf32>
    %c25_166 = arith.constant 25 : index
    %356 = memref.load %arg2[%c25_166] : memref<98xf32, #tpu.memory_space<smem>>
    %c74 = arith.constant 74 : index
    %357 = memref.load %arg2[%c74] : memref<98xf32, #tpu.memory_space<smem>>
    %c3_167 = arith.constant 3 : index
    %c0_168 = arith.constant 0 : index
    %358 = vector.load %arg8[%c3_167, %c0_168] : memref<48x128xf32, #tpu.memory_space<vmem>>, vector<16x128xf32>
    %c25_169 = arith.constant 25 : index
    %c0_170 = arith.constant 0 : index
    %359 = vector.load %arg8[%c25_169, %c0_170] : memref<48x128xf32, #tpu.memory_space<vmem>>, vector<16x128xf32>
    %360 = vector.broadcast %356 : f32 to vector<16x128xf32>
    %361 = arith.mulf %360, %358 : vector<16x128xf32>
    %362 = arith.addf %342, %361 : vector<16x128xf32>
    %363 = vector.broadcast %357 : f32 to vector<16x128xf32>
    %364 = arith.mulf %363, %359 : vector<16x128xf32>
    %365 = arith.addf %345, %364 : vector<16x128xf32>
    %c32 = arith.constant 32 : index
    %366 = memref.load %arg2[%c32] : memref<98xf32, #tpu.memory_space<smem>>
    %c81 = arith.constant 81 : index
    %367 = memref.load %arg2[%c81] : memref<98xf32, #tpu.memory_space<smem>>
    %c4_171 = arith.constant 4 : index
    %c0_172 = arith.constant 0 : index
    %368 = vector.load %arg8[%c4_171, %c0_172] : memref<48x128xf32, #tpu.memory_space<vmem>>, vector<16x128xf32>
    %c26_173 = arith.constant 26 : index
    %c0_174 = arith.constant 0 : index
    %369 = vector.load %arg8[%c26_173, %c0_174] : memref<48x128xf32, #tpu.memory_space<vmem>>, vector<16x128xf32>
    %370 = vector.broadcast %366 : f32 to vector<16x128xf32>
    %371 = arith.mulf %370, %368 : vector<16x128xf32>
    %372 = arith.addf %352, %371 : vector<16x128xf32>
    %373 = vector.broadcast %367 : f32 to vector<16x128xf32>
    %374 = arith.mulf %373, %369 : vector<16x128xf32>
    %375 = arith.addf %355, %374 : vector<16x128xf32>
    %c39 = arith.constant 39 : index
    %376 = memref.load %arg2[%c39] : memref<98xf32, #tpu.memory_space<smem>>
    %c88 = arith.constant 88 : index
    %377 = memref.load %arg2[%c88] : memref<98xf32, #tpu.memory_space<smem>>
    %c5_175 = arith.constant 5 : index
    %c0_176 = arith.constant 0 : index
    %378 = vector.load %arg8[%c5_175, %c0_176] : memref<48x128xf32, #tpu.memory_space<vmem>>, vector<16x128xf32>
    %c27_177 = arith.constant 27 : index
    %c0_178 = arith.constant 0 : index
    %379 = vector.load %arg8[%c27_177, %c0_178] : memref<48x128xf32, #tpu.memory_space<vmem>>, vector<16x128xf32>
    %380 = vector.broadcast %376 : f32 to vector<16x128xf32>
    %381 = arith.mulf %380, %378 : vector<16x128xf32>
    %382 = arith.addf %362, %381 : vector<16x128xf32>
    %383 = vector.broadcast %377 : f32 to vector<16x128xf32>
    %384 = arith.mulf %383, %379 : vector<16x128xf32>
    %385 = arith.addf %365, %384 : vector<16x128xf32>
    %c46 = arith.constant 46 : index
    %386 = memref.load %arg2[%c46] : memref<98xf32, #tpu.memory_space<smem>>
    %c95 = arith.constant 95 : index
    %387 = memref.load %arg2[%c95] : memref<98xf32, #tpu.memory_space<smem>>
    %c6_179 = arith.constant 6 : index
    %c0_180 = arith.constant 0 : index
    %388 = vector.load %arg8[%c6_179, %c0_180] : memref<48x128xf32, #tpu.memory_space<vmem>>, vector<16x128xf32>
    %c28_181 = arith.constant 28 : index
    %c0_182 = arith.constant 0 : index
    %389 = vector.load %arg8[%c28_181, %c0_182] : memref<48x128xf32, #tpu.memory_space<vmem>>, vector<16x128xf32>
    %390 = vector.broadcast %386 : f32 to vector<16x128xf32>
    %391 = arith.mulf %390, %388 : vector<16x128xf32>
    %392 = arith.addf %372, %391 : vector<16x128xf32>
    %393 = vector.broadcast %387 : f32 to vector<16x128xf32>
    %394 = arith.mulf %393, %389 : vector<16x128xf32>
    %395 = arith.addf %375, %394 : vector<16x128xf32>
    %c0_183 = arith.constant 0 : index
    %c5_184 = arith.constant 5 : index
    %396 = vector.load %arg7[%c0_183, %c5_184] : memref<48x256xf32, #tpu.memory_space<vmem>>, vector<48x128xf32>
    %c0_185 = arith.constant 0 : index
    %c0_186 = arith.constant 0 : index
    %397 = vector.load %arg8[%c0_185, %c0_186] : memref<48x128xf32, #tpu.memory_space<vmem>>, vector<48x128xf32>
    tpu.vector_store %arg8[%c0_185, %c0_186], %396 {strides = array<i32>} : memref<48x128xf32, #tpu.memory_space<vmem>>, vector<48x128xf32>,
    %c5_187 = arith.constant 5 : index
    %398 = memref.load %arg2[%c5_187] : memref<98xf32, #tpu.memory_space<smem>>
    %c54 = arith.constant 54 : index
    %399 = memref.load %arg2[%c54] : memref<98xf32, #tpu.memory_space<smem>>
    %c0_188 = arith.constant 0 : index
    %c0_189 = arith.constant 0 : index
    %400 = vector.load %arg8[%c0_188, %c0_189] : memref<48x128xf32, #tpu.memory_space<vmem>>, vector<16x128xf32>
    %c22_190 = arith.constant 22 : index
    %c0_191 = arith.constant 0 : index
    %401 = vector.load %arg8[%c22_190, %c0_191] : memref<48x128xf32, #tpu.memory_space<vmem>>, vector<16x128xf32>
    %402 = vector.broadcast %398 : f32 to vector<16x128xf32>
    %403 = arith.mulf %402, %400 : vector<16x128xf32>
    %404 = arith.addf %392, %403 : vector<16x128xf32>
    %405 = vector.broadcast %399 : f32 to vector<16x128xf32>
    %406 = arith.mulf %405, %401 : vector<16x128xf32>
    %407 = arith.addf %395, %406 : vector<16x128xf32>
    %c12 = arith.constant 12 : index
    %408 = memref.load %arg2[%c12] : memref<98xf32, #tpu.memory_space<smem>>
    %c61 = arith.constant 61 : index
    %409 = memref.load %arg2[%c61] : memref<98xf32, #tpu.memory_space<smem>>
    %c1_192 = arith.constant 1 : index
    %c0_193 = arith.constant 0 : index
    %410 = vector.load %arg8[%c1_192, %c0_193] : memref<48x128xf32, #tpu.memory_space<vmem>>, vector<16x128xf32>
    %c23_194 = arith.constant 23 : index
    %c0_195 = arith.constant 0 : index
    %411 = vector.load %arg8[%c23_194, %c0_195] : memref<48x128xf32, #tpu.memory_space<vmem>>, vector<16x128xf32>
    %412 = vector.broadcast %408 : f32 to vector<16x128xf32>
    %413 = arith.mulf %412, %410 : vector<16x128xf32>
    %414 = arith.addf %382, %413 : vector<16x128xf32>
    %415 = vector.broadcast %409 : f32 to vector<16x128xf32>
    %416 = arith.mulf %415, %411 : vector<16x128xf32>
    %417 = arith.addf %385, %416 : vector<16x128xf32>
    %c19 = arith.constant 19 : index
    %418 = memref.load %arg2[%c19] : memref<98xf32, #tpu.memory_space<smem>>
    %c68 = arith.constant 68 : index
    %419 = memref.load %arg2[%c68] : memref<98xf32, #tpu.memory_space<smem>>
    %c2_196 = arith.constant 2 : index
    %c0_197 = arith.constant 0 : index
    %420 = vector.load %arg8[%c2_196, %c0_197] : memref<48x128xf32, #tpu.memory_space<vmem>>, vector<16x128xf32>
    %c24_198 = arith.constant 24 : index
    %c0_199 = arith.constant 0 : index
    %421 = vector.load %arg8[%c24_198, %c0_199] : memref<48x128xf32, #tpu.memory_space<vmem>>, vector<16x128xf32>
    %422 = vector.broadcast %418 : f32 to vector<16x128xf32>
    %423 = arith.mulf %422, %420 : vector<16x128xf32>
    %424 = arith.addf %404, %423 : vector<16x128xf32>
    %425 = vector.broadcast %419 : f32 to vector<16x128xf32>
    %426 = arith.mulf %425, %421 : vector<16x128xf32>
    %427 = arith.addf %407, %426 : vector<16x128xf32>
    %c26_200 = arith.constant 26 : index
    %428 = memref.load %arg2[%c26_200] : memref<98xf32, #tpu.memory_space<smem>>
    %c75 = arith.constant 75 : index
    %429 = memref.load %arg2[%c75] : memref<98xf32, #tpu.memory_space<smem>>
    %c3_201 = arith.constant 3 : index
    %c0_202 = arith.constant 0 : index
    %430 = vector.load %arg8[%c3_201, %c0_202] : memref<48x128xf32, #tpu.memory_space<vmem>>, vector<16x128xf32>
    %c25_203 = arith.constant 25 : index
    %c0_204 = arith.constant 0 : index
    %431 = vector.load %arg8[%c25_203, %c0_204] : memref<48x128xf32, #tpu.memory_space<vmem>>, vector<16x128xf32>
    %432 = vector.broadcast %428 : f32 to vector<16x128xf32>
    %433 = arith.mulf %432, %430 : vector<16x128xf32>
    %434 = arith.addf %414, %433 : vector<16x128xf32>
    %435 = vector.broadcast %429 : f32 to vector<16x128xf32>
    %436 = arith.mulf %435, %431 : vector<16x128xf32>
    %437 = arith.addf %417, %436 : vector<16x128xf32>
    %c33 = arith.constant 33 : index
    %438 = memref.load %arg2[%c33] : memref<98xf32, #tpu.memory_space<smem>>
    %c82 = arith.constant 82 : index
    %439 = memref.load %arg2[%c82] : memref<98xf32, #tpu.memory_space<smem>>
    %c4_205 = arith.constant 4 : index
    %c0_206 = arith.constant 0 : index
    %440 = vector.load %arg8[%c4_205, %c0_206] : memref<48x128xf32, #tpu.memory_space<vmem>>, vector<16x128xf32>
    %c26_207 = arith.constant 26 : index
    %c0_208 = arith.constant 0 : index
    %441 = vector.load %arg8[%c26_207, %c0_208] : memref<48x128xf32, #tpu.memory_space<vmem>>, vector<16x128xf32>
    %442 = vector.broadcast %438 : f32 to vector<16x128xf32>
    %443 = arith.mulf %442, %440 : vector<16x128xf32>
    %444 = arith.addf %424, %443 : vector<16x128xf32>
    %445 = vector.broadcast %439 : f32 to vector<16x128xf32>
    %446 = arith.mulf %445, %441 : vector<16x128xf32>
    %447 = arith.addf %427, %446 : vector<16x128xf32>
    %c40 = arith.constant 40 : index
    %448 = memref.load %arg2[%c40] : memref<98xf32, #tpu.memory_space<smem>>
    %c89 = arith.constant 89 : index
    %449 = memref.load %arg2[%c89] : memref<98xf32, #tpu.memory_space<smem>>
    %c5_209 = arith.constant 5 : index
    %c0_210 = arith.constant 0 : index
    %450 = vector.load %arg8[%c5_209, %c0_210] : memref<48x128xf32, #tpu.memory_space<vmem>>, vector<16x128xf32>
    %c27_211 = arith.constant 27 : index
    %c0_212 = arith.constant 0 : index
    %451 = vector.load %arg8[%c27_211, %c0_212] : memref<48x128xf32, #tpu.memory_space<vmem>>, vector<16x128xf32>
    %452 = vector.broadcast %448 : f32 to vector<16x128xf32>
    %453 = arith.mulf %452, %450 : vector<16x128xf32>
    %454 = arith.addf %434, %453 : vector<16x128xf32>
    %455 = vector.broadcast %449 : f32 to vector<16x128xf32>
    %456 = arith.mulf %455, %451 : vector<16x128xf32>
    %457 = arith.addf %437, %456 : vector<16x128xf32>
    %c47 = arith.constant 47 : index
    %458 = memref.load %arg2[%c47] : memref<98xf32, #tpu.memory_space<smem>>
    %c96 = arith.constant 96 : index
    %459 = memref.load %arg2[%c96] : memref<98xf32, #tpu.memory_space<smem>>
    %c6_213 = arith.constant 6 : index
    %c0_214 = arith.constant 0 : index
    %460 = vector.load %arg8[%c6_213, %c0_214] : memref<48x128xf32, #tpu.memory_space<vmem>>, vector<16x128xf32>
    %c28_215 = arith.constant 28 : index
    %c0_216 = arith.constant 0 : index
    %461 = vector.load %arg8[%c28_215, %c0_216] : memref<48x128xf32, #tpu.memory_space<vmem>>, vector<16x128xf32>
    %462 = vector.broadcast %458 : f32 to vector<16x128xf32>
    %463 = arith.mulf %462, %460 : vector<16x128xf32>
    %464 = arith.addf %444, %463 : vector<16x128xf32>
    %465 = vector.broadcast %459 : f32 to vector<16x128xf32>
    %466 = arith.mulf %465, %461 : vector<16x128xf32>
    %467 = arith.addf %447, %466 : vector<16x128xf32>
    %c0_217 = arith.constant 0 : index
    %c6_218 = arith.constant 6 : index
    %468 = vector.load %arg7[%c0_217, %c6_218] : memref<48x256xf32, #tpu.memory_space<vmem>>, vector<48x128xf32>
    %c0_219 = arith.constant 0 : index
    %c0_220 = arith.constant 0 : index
    %469 = vector.load %arg8[%c0_219, %c0_220] : memref<48x128xf32, #tpu.memory_space<vmem>>, vector<48x128xf32>
    tpu.vector_store %arg8[%c0_219, %c0_220], %468 {strides = array<i32>} : memref<48x128xf32, #tpu.memory_space<vmem>>, vector<48x128xf32>,
    %c6_221 = arith.constant 6 : index
    %470 = memref.load %arg2[%c6_221] : memref<98xf32, #tpu.memory_space<smem>>
    %c55 = arith.constant 55 : index
    %471 = memref.load %arg2[%c55] : memref<98xf32, #tpu.memory_space<smem>>
    %c0_222 = arith.constant 0 : index
    %c0_223 = arith.constant 0 : index
    %472 = vector.load %arg8[%c0_222, %c0_223] : memref<48x128xf32, #tpu.memory_space<vmem>>, vector<16x128xf32>
    %c22_224 = arith.constant 22 : index
    %c0_225 = arith.constant 0 : index
    %473 = vector.load %arg8[%c22_224, %c0_225] : memref<48x128xf32, #tpu.memory_space<vmem>>, vector<16x128xf32>
    %474 = vector.broadcast %470 : f32 to vector<16x128xf32>
    %475 = arith.mulf %474, %472 : vector<16x128xf32>
    %476 = arith.addf %464, %475 : vector<16x128xf32>
    %477 = vector.broadcast %471 : f32 to vector<16x128xf32>
    %478 = arith.mulf %477, %473 : vector<16x128xf32>
    %479 = arith.addf %467, %478 : vector<16x128xf32>
    %c13 = arith.constant 13 : index
    %480 = memref.load %arg2[%c13] : memref<98xf32, #tpu.memory_space<smem>>
    %c62 = arith.constant 62 : index
    %481 = memref.load %arg2[%c62] : memref<98xf32, #tpu.memory_space<smem>>
    %c1_226 = arith.constant 1 : index
    %c0_227 = arith.constant 0 : index
    %482 = vector.load %arg8[%c1_226, %c0_227] : memref<48x128xf32, #tpu.memory_space<vmem>>, vector<16x128xf32>
    %c23_228 = arith.constant 23 : index
    %c0_229 = arith.constant 0 : index
    %483 = vector.load %arg8[%c23_228, %c0_229] : memref<48x128xf32, #tpu.memory_space<vmem>>, vector<16x128xf32>
    %484 = vector.broadcast %480 : f32 to vector<16x128xf32>
    %485 = arith.mulf %484, %482 : vector<16x128xf32>
    %486 = arith.addf %454, %485 : vector<16x128xf32>
    %487 = vector.broadcast %481 : f32 to vector<16x128xf32>
    %488 = arith.mulf %487, %483 : vector<16x128xf32>
    %489 = arith.addf %457, %488 : vector<16x128xf32>
    %c20 = arith.constant 20 : index
    %490 = memref.load %arg2[%c20] : memref<98xf32, #tpu.memory_space<smem>>
    %c69 = arith.constant 69 : index
    %491 = memref.load %arg2[%c69] : memref<98xf32, #tpu.memory_space<smem>>
    %c2_230 = arith.constant 2 : index
    %c0_231 = arith.constant 0 : index
    %492 = vector.load %arg8[%c2_230, %c0_231] : memref<48x128xf32, #tpu.memory_space<vmem>>, vector<16x128xf32>
    %c24_232 = arith.constant 24 : index
    %c0_233 = arith.constant 0 : index
    %493 = vector.load %arg8[%c24_232, %c0_233] : memref<48x128xf32, #tpu.memory_space<vmem>>, vector<16x128xf32>
    %494 = vector.broadcast %490 : f32 to vector<16x128xf32>
    %495 = arith.mulf %494, %492 : vector<16x128xf32>
    %496 = arith.addf %476, %495 : vector<16x128xf32>
    %497 = vector.broadcast %491 : f32 to vector<16x128xf32>
    %498 = arith.mulf %497, %493 : vector<16x128xf32>
    %499 = arith.addf %479, %498 : vector<16x128xf32>
    %c27_234 = arith.constant 27 : index
    %500 = memref.load %arg2[%c27_234] : memref<98xf32, #tpu.memory_space<smem>>
    %c76 = arith.constant 76 : index
    %501 = memref.load %arg2[%c76] : memref<98xf32, #tpu.memory_space<smem>>
    %c3_235 = arith.constant 3 : index
    %c0_236 = arith.constant 0 : index
    %502 = vector.load %arg8[%c3_235, %c0_236] : memref<48x128xf32, #tpu.memory_space<vmem>>, vector<16x128xf32>
    %c25_237 = arith.constant 25 : index
    %c0_238 = arith.constant 0 : index
    %503 = vector.load %arg8[%c25_237, %c0_238] : memref<48x128xf32, #tpu.memory_space<vmem>>, vector<16x128xf32>
    %504 = vector.broadcast %500 : f32 to vector<16x128xf32>
    %505 = arith.mulf %504, %502 : vector<16x128xf32>
    %506 = arith.addf %486, %505 : vector<16x128xf32>
    %507 = vector.broadcast %501 : f32 to vector<16x128xf32>
    %508 = arith.mulf %507, %503 : vector<16x128xf32>
    %509 = arith.addf %489, %508 : vector<16x128xf32>
    %c34 = arith.constant 34 : index
    %510 = memref.load %arg2[%c34] : memref<98xf32, #tpu.memory_space<smem>>
    %c83 = arith.constant 83 : index
    %511 = memref.load %arg2[%c83] : memref<98xf32, #tpu.memory_space<smem>>
    %c4_239 = arith.constant 4 : index
    %c0_240 = arith.constant 0 : index
    %512 = vector.load %arg8[%c4_239, %c0_240] : memref<48x128xf32, #tpu.memory_space<vmem>>, vector<16x128xf32>
    %c26_241 = arith.constant 26 : index
    %c0_242 = arith.constant 0 : index
    %513 = vector.load %arg8[%c26_241, %c0_242] : memref<48x128xf32, #tpu.memory_space<vmem>>, vector<16x128xf32>
    %514 = vector.broadcast %510 : f32 to vector<16x128xf32>
    %515 = arith.mulf %514, %512 : vector<16x128xf32>
    %516 = arith.addf %496, %515 : vector<16x128xf32>
    %517 = vector.broadcast %511 : f32 to vector<16x128xf32>
    %518 = arith.mulf %517, %513 : vector<16x128xf32>
    %519 = arith.addf %499, %518 : vector<16x128xf32>
    %c41 = arith.constant 41 : index
    %520 = memref.load %arg2[%c41] : memref<98xf32, #tpu.memory_space<smem>>
    %c90 = arith.constant 90 : index
    %521 = memref.load %arg2[%c90] : memref<98xf32, #tpu.memory_space<smem>>
    %c5_243 = arith.constant 5 : index
    %c0_244 = arith.constant 0 : index
    %522 = vector.load %arg8[%c5_243, %c0_244] : memref<48x128xf32, #tpu.memory_space<vmem>>, vector<16x128xf32>
    %c27_245 = arith.constant 27 : index
    %c0_246 = arith.constant 0 : index
    %523 = vector.load %arg8[%c27_245, %c0_246] : memref<48x128xf32, #tpu.memory_space<vmem>>, vector<16x128xf32>
    %524 = vector.broadcast %520 : f32 to vector<16x128xf32>
    %525 = arith.mulf %524, %522 : vector<16x128xf32>
    %526 = arith.addf %506, %525 : vector<16x128xf32>
    %527 = vector.broadcast %521 : f32 to vector<16x128xf32>
    %528 = arith.mulf %527, %523 : vector<16x128xf32>
    %529 = arith.addf %509, %528 : vector<16x128xf32>
    %c48 = arith.constant 48 : index
    %530 = memref.load %arg2[%c48] : memref<98xf32, #tpu.memory_space<smem>>
    %c97 = arith.constant 97 : index
    %531 = memref.load %arg2[%c97] : memref<98xf32, #tpu.memory_space<smem>>
    %c6_247 = arith.constant 6 : index
    %c0_248 = arith.constant 0 : index
    %532 = vector.load %arg8[%c6_247, %c0_248] : memref<48x128xf32, #tpu.memory_space<vmem>>, vector<16x128xf32>
    %c28_249 = arith.constant 28 : index
    %c0_250 = arith.constant 0 : index
    %533 = vector.load %arg8[%c28_249, %c0_250] : memref<48x128xf32, #tpu.memory_space<vmem>>, vector<16x128xf32>
    %534 = vector.broadcast %530 : f32 to vector<16x128xf32>
    %535 = arith.mulf %534, %532 : vector<16x128xf32>
    %536 = arith.addf %516, %535 : vector<16x128xf32>
    %537 = vector.broadcast %531 : f32 to vector<16x128xf32>
    %538 = arith.mulf %537, %533 : vector<16x128xf32>
    %539 = arith.addf %519, %538 : vector<16x128xf32>
    %540 = arith.addf %536, %526 : vector<16x128xf32>
    %541 = arith.addf %539, %529 : vector<16x128xf32>
    %542 = arith.addf %540, %541 : vector<16x128xf32>
    %543 = vector.extract_strided_slice %542 {offsets = [0, 0], sizes = [16, 16], strides = [1, 1]} : vector<16x128xf32> to vector<16x16xf32>
    %544 = vector.extract_strided_slice %542 {offsets = [0, 22], sizes = [16, 16], strides = [1, 1]} : vector<16x128xf32> to vector<16x16xf32>
    %545 = vector.shape_cast %543 : vector<16x16xf32> to vector<1x16x16xf32>
    %546 = vector.shape_cast %544 : vector<16x16xf32> to vector<1x16x16xf32>
    %547 = tpu.concatenate %545, %546 in 0 : vector<1x16x16xf32>, vector<1x16x16xf32> -> vector<2x16x16xf32>
    %548 = arith.negf %547 : vector<2x16x16xf32>
    %549 = math.exp %548 : vector<2x16x16xf32>
    %cst_251 = arith.constant 1.000000e+00 : f32
    %550 = vector.broadcast %cst_251 : f32 to vector<2x16x16xf32>
    %551 = arith.addf %550, %549 : vector<2x16x16xf32>
    %552 = arith.divf %550, %551 : vector<2x16x16xf32>
    %553 = vector.shape_cast %552 : vector<2x16x16xf32> to vector<2x1x256xf32>
    %c0_252 = arith.constant 0 : index
    %c0_253 = arith.constant 0 : index
    %c0_254 = arith.constant 0 : index
    %554 = vector.load %arg4[%c0_252, %c0_253, %c0_254] : memref<2x1x256xf32, #tpu.memory_space<vmem>>, vector<2x1x256xf32>
    tpu.vector_store %arg4[%c0_252, %c0_253, %c0_254], %553 {strides = array<i32>} : memref<2x1x256xf32, #tpu.memory_space<vmem>>, vector<2x1x256xf32>,
    return
  }
  func.func @transform_0(%arg0: i32, %arg1: i32, %arg2: memref<98xf32, #tpu.memory_space<smem>>) -> (i32, i32, i32) {
    %c0_i32 = arith.constant 0 : i32
    %c0_i32_0 = arith.constant 0 : i32
    return %arg0, %arg1, %c0_i32 : i32, i32, i32
  }
  func.func @transform_1(%arg0: i32, %arg1: i32, %arg2: memref<98xf32, #tpu.memory_space<smem>>) -> (i32, i32, i32) {
    %c0_i32 = arith.constant 0 : i32
    %c0_i32_0 = arith.constant 0 : i32
    %c0_i32_1 = arith.constant 0 : i32
    return %arg0, %c0_i32, %c0_i32_0 : i32, i32, i32
  }
}

</mosaic_0001>

<llo_original>
// kernel: tpu_custom_call.1
$region0: #{tpu_custom_call.1}
  #allocation0 [shape = 'u32[]', space=smem, size = 0x4, offset = 0x4, fixed_abs, tag = 'smem constant byte address 0x4 - core index']
  #allocation1 [shape = 'u32[144,128]{1,0:T(1,128)}', space=vmem, size = 0x12000, scoped, tag = 'internal scratch']
  #allocation2 [shape = 'f32[2,256]{1,0:T(2,128)}', space=vmem, size = 0x800, scoped, tag = 'scratch operand']
  #allocation3 [shape = 'f32[2,256]{1,0:T(2,128)}', space=vmem, size = 0x800, scoped, tag = 'scratch operand']
  #allocation4 [shape = 'f32[48,256]{1,0:T(8,128)}', space=vmem, size = 0xc000, scoped, tag = 'scratch operand']
  #allocation5 [shape = 'f32[48,128]{1,0:T(8,128)}', space=vmem, size = 0x6000, scoped, tag = 'scratch operand']
  #allocation6 [shape = 's32[1]{0}', space=sflag, size = 0x4, scoped, tag = 'scoped memory for tpu_custom_call.1']
  #allocation7 [shape = 'u8[512]{0}', space=smem, size = 0x200, scoped, tag = 'prefetched SMEM operand 0']
  %s0 = inlined_call_operand.hbm [shape: f32[98], index: 0, kind: input, shape index: {}]
  %s1 = inlined_call_operand.hbm [shape: f32[2,4,256], index: 1, kind: input, shape index: {}]
  %s2 = inlined_call_operand.hbm [shape: f32[2,1,256], index: 2, kind: output, shape index: {}]
  %s3 = sld [smem:[#allocation0]]
  $region18: #{tpu_custom_call.1} parent=0
    _
  %s5 = ssub.s32 1, %s3
  %s6 = scalar_select 0, %s5, %s3
  %8 = dma.hbm_to_smem %s0, 16, [#allocation7], [#allocation6]
  %9 = dma.done [#allocation6], 16
  %10 = sfence
  $region1: #{tpu_custom_call.1} parent=0
    #allocation8 [shape = 'u8[8192]{0}', space=vmem, size = 0x2000, scoped, tag = 'input window, operand 1, single buffered']
    #allocation9 [shape = 's32[1]{0}', space=sflag, size = 0x4, scoped, tag = 'scoped memory for tpu_custom_call.1']
    #allocation10 [shape = 's32[1]{0}', space=sflag, size = 0x4, scoped, tag = 'scoped memory for tpu_custom_call.1']
    #allocation11 [shape = 'u8[2048]{0}', space=vmem, size = 0x800, scoped, tag = 'output window, operand 0, single buffered']
    %11 = vsyncpa [#allocation9], 0
    %12 = vsyncpa [#allocation10], 0
    // Predicated region
    $region2: #{tpu_custom_call.1} parent=1 // pred_check
      _
    $region3: #{tpu_custom_call.1} parent=1 // pred_check_branch
      %14 = sbr.rel (0) target = $region5
    $region4: #{tpu_custom_call.1} parent=1 // pred_region
      %s16 = ssub.s32 256, 256
      %17 = vsyncadd [#allocation9], %s16
      %s18 = sshll.u32 [#allocation8], 4
      %s19 = int_to_ptr.vmem [resolvable:$true] %s18
      %24 = dma.hbm_to_vmem [thread:$0]  %s1, 256, %s19, [#allocation9], 128, 128, 8
    $region5: #{tpu_custom_call.1} parent=1 // pred_fallthru
      _
    // Predicated region
    $region6: #{tpu_custom_call.1} parent=1 // pred_check
      _
    $region7: #{tpu_custom_call.1} parent=1 // pred_check_branch
      %26 = sbr.rel (0) target = $region9
    $region8: #{tpu_custom_call.1} parent=1 // pred_region
      %27 = dma.done [#allocation9], 256
    $region9: #{tpu_custom_call.1} parent=1 // pred_fallthru
      _
    %v28 = vld [vmem:[#allocation8] ss:$4 sm:$0x3]
    %s29 = scalar_lea.vmem [#allocation8], 8
    %v30 = vld [vmem:[%s29] ss:$4 sm:$0x3]
    %s31 = scalar_lea.vmem [#allocation8], 1
    %v32 = vld [vmem:[%s31] ss:$4 sm:$0x3]
    %s33 = scalar_lea.vmem [#allocation8], 9
    %v34 = vld [vmem:[%s33] ss:$4 sm:$0x3]
    %s35 = scalar_lea.vmem [#allocation8], 2
    %v36 = vld [vmem:[%s35] ss:$4 sm:$0x3]
    %s37 = scalar_lea.vmem [#allocation8], 10
    %v38 = vld [vmem:[%s37] ss:$4 sm:$0x3]
    %s39 = scalar_lea.vmem [#allocation8], 3
    %v40 = vld [vmem:[%s39] ss:$4 sm:$0x3]
    %s41 = scalar_lea.vmem [#allocation8], 11
    %v42 = vld [vmem:[%s41] ss:$4 sm:$0x3]
    %v43 = vadd.f32 %v28, %v36
    %v44 = vadd.f32 %v30, %v38
    %v45 = vmax.f32 %v28, %v36
    %v46 = vmax.f32 %v30, %v38
    %v47 = vadd.f32 %v32, %v40
    %v48 = vadd.f32 %v34, %v42
    %v49 = vmax.f32 %v32, %v40
    %v50 = vmax.f32 %v34, %v42
    %v51 = vadd.f32 %v43, %v47
    %v52 = vadd.f32 %v44, %v48
    %v53 = vmax.f32 %v45, %v49
    %v54 = vmax.f32 %v46, %v50
    %v55 = vmul.f32 %v51, 0.25
    %v56 = vmul.f32 %v52, 0.25
    %v59 = vrot.slane %v55, 1
    %v60 = vrot.slane %v56, 1
    %61 = vrot.lane.b32.xlu0 %v55, 112
    %v62 = vpop.permute.xlu0 %61
    %63 = vrot.lane.b32.xlu0 %v56, 112
    %v64 = vpop.permute.xlu0 %63
    %v65 = vrot.slane %v62, 1
    %v66 = vrot.slane %v64, 1
    %67 = vrot.lane.b32.xlu0 %v55, 96
    %v68 = vpop.permute.xlu0 %67
    %69 = vrot.lane.b32.xlu0 %v56, 96
    %v70 = vpop.permute.xlu0 %69
    %v71 = vrot.slane %v68, 1
    %v72 = vrot.slane %v70, 1
    %73 = vrot.lane.b32.xlu0 %v55, 80
    %v74 = vpop.permute.xlu0 %73
    %75 = vrot.lane.b32.xlu0 %v56, 80
    %v76 = vpop.permute.xlu0 %75
    %v77 = vrot.slane %v74, 1
    %v78 = vrot.slane %v76, 1
    %79 = vrot.lane.b32.xlu0 %v55, 64
    %v80 = vpop.permute.xlu0 %79
    %81 = vrot.lane.b32.xlu0 %v56, 64
    %v82 = vpop.permute.xlu0 %81
    %v83 = vrot.slane %v80, 1
    %v84 = vrot.slane %v82, 1
    %85 = vrot.lane.b32.xlu0 %v55, 48
    %v86 = vpop.permute.xlu0 %85
    %87 = vrot.lane.b32.xlu0 %v56, 48
    %v88 = vpop.permute.xlu0 %87
    %v89 = vrot.slane %v86, 1
    %v90 = vrot.slane %v88, 1
    %91 = vrot.lane.b32.xlu0 %v55, 32
    %v92 = vpop.permute.xlu0 %91
    %93 = vrot.lane.b32.xlu0 %v56, 32
    %v94 = vpop.permute.xlu0 %93
    %v95 = vrot.slane %v92, 1
    %v96 = vrot.slane %v94, 1
    %97 = vrot.lane.b32.xlu0 %v55, 16
    %v98 = vpop.permute.xlu0 %97
    %99 = vrot.lane.b32.xlu0 %v56, 16
    %v100 = vpop.permute.xlu0 %99
    %v101 = vrot.slane %v98, 1
    %v102 = vrot.slane %v100, 1
    %v105 = vrot.slane %v53, 1
    %v106 = vrot.slane %v54, 1
    %107 = vrot.lane.b32.xlu0 %v53, 112
    %v108 = vpop.permute.xlu0 %107
    %109 = vrot.lane.b32.xlu0 %v54, 112
    %v110 = vpop.permute.xlu0 %109
    %v111 = vrot.slane %v108, 1
    %v112 = vrot.slane %v110, 1
    %113 = vrot.lane.b32.xlu0 %v53, 96
    %v114 = vpop.permute.xlu0 %113
    %115 = vrot.lane.b32.xlu0 %v54, 96
    %v116 = vpop.permute.xlu0 %115
    %v117 = vrot.slane %v114, 1
    %v118 = vrot.slane %v116, 1
    %119 = vrot.lane.b32.xlu0 %v53, 80
    %v120 = vpop.permute.xlu0 %119
    %121 = vrot.lane.b32.xlu0 %v54, 80
    %v122 = vpop.permute.xlu0 %121
    %v123 = vrot.slane %v120, 1
    %v124 = vrot.slane %v122, 1
    %125 = vrot.lane.b32.xlu0 %v53, 64
    %v126 = vpop.permute.xlu0 %125
    %127 = vrot.lane.b32.xlu0 %v54, 64
    %v128 = vpop.permute.xlu0 %127
    %v129 = vrot.slane %v126, 1
    %v130 = vrot.slane %v128, 1
    %131 = vrot.lane.b32.xlu0 %v53, 48
    %v132 = vpop.permute.xlu0 %131
    %133 = vrot.lane.b32.xlu0 %v54, 48
    %v134 = vpop.permute.xlu0 %133
    %v135 = vrot.slane %v132, 1
    %v136 = vrot.slane %v134, 1
    %137 = vrot.lane.b32.xlu0 %v53, 32
    %v138 = vpop.permute.xlu0 %137
    %139 = vrot.lane.b32.xlu0 %v54, 32
    %v140 = vpop.permute.xlu0 %139
    %v141 = vrot.slane %v138, 1
    %v142 = vrot.slane %v140, 1
    %143 = vrot.lane.b32.xlu0 %v53, 16
    %v144 = vpop.permute.xlu0 %143
    %145 = vrot.lane.b32.xlu0 %v54, 16
    %v146 = vpop.permute.xlu0 %145
    %v147 = vrot.slane %v144, 1
    %v148 = vrot.slane %v146, 1
    %149 = vst [vmem:[#allocation4] sm:$0xff] 0.0
    %150 = vst [vmem:[#allocation4 + $0x8] sm:$0xff] 0.0
    %151 = vst [vmem:[#allocation4 + $0x10] sm:$0xff] 0.0
    %152 = vst [vmem:[#allocation4 + $0x18] sm:$0xff] 0.0
    %153 = vst [vmem:[#allocation4 + $0x20] sm:$0xff] 0.0
    %154 = vst [vmem:[#allocation4 + $0x28] sm:$0xff] 0.0
    %155 = vst [vmem:[#allocation4 + $0x30] sm:$0xff] 0.0
    %156 = vst [vmem:[#allocation4 + $0x38] sm:$0xff] 0.0
    %157 = vst [vmem:[#allocation4 + $0x40] sm:$0xff] 0.0
    %158 = vst [vmem:[#allocation4 + $0x48] sm:$0xff] 0.0
    %159 = vst [vmem:[#allocation4 + $0x50] sm:$0xff] 0.0
    %160 = vst [vmem:[#allocation4 + $0x58] sm:$0xff] 0.0
    %v161 = vcombine.low %v55, %v55
    %v162 = vcombine.low %v62, %v68
    %v163 = vcombine.low %v74, %v80
    %v165 = vunpack.c.l.s4 1966171168
    %v166 = vunpack.c.0.s8 %v165
    %v167 = vlaneseq
    %v168 = vshrl.u32 %v167, 7
    %v169 = vsub.s32 %v166, %v168
    %v170 = vrot.slane %v161, %v169
    %v172 = vunpack.c.l.s4 1966171168
    %v173 = vunpack.c.0.s8 %v172
    %v174 = vlaneseq
    %v175 = vshrl.u32 %v174, 7
    %v176 = vsub.s32 %v173, %v175
    %v177 = vrot.slane %v162, %v176
    %v179 = vunpack.c.l.s4 1966171168
    %v180 = vunpack.c.0.s8 %v179
    %v181 = vlaneseq
    %v182 = vshrl.u32 %v181, 7
    %v183 = vsub.s32 %v180, %v182
    %v184 = vrot.slane %v163, %v183
    %v185 = vcombine.low %v170, %v170
    %v186 = vcombine.low %v177, %v184
    %v188 = vunpack.c.l.s4 1966171168
    %v189 = vunpack.c.0.s8 %v188
    %v190 = vlaneseq
    %v191 = vshrl.u32 %v190, 7
    %v192 = vsub.s32 %v189, %v191
    %v193 = vrot.slane %v185, %v192
    %v195 = vunpack.c.l.s4 1966171168
    %v196 = vunpack.c.0.s8 %v195
    %v197 = vlaneseq
    %v198 = vshrl.u32 %v197, 7
    %v199 = vsub.s32 %v196, %v198
    %v200 = vrot.slane %v186, %v199
    %v201 = vcombine.low %v193, %v200
    %v202 = vcombine.low %v86, %v92
    %v203 = vcombine.low %v98, %v59
    %v204 = vcombine.low %v65, %v71
    %v205 = vcombine.low %v77, %v83
    %v207 = vunpack.c.l.s4 1966171168
    %v208 = vunpack.c.0.s8 %v207
    %v209 = vlaneseq
    %v210 = vshrl.u32 %v209, 7
    %v211 = vsub.s32 %v208, %v210
    %v212 = vrot.slane %v202, %v211
    %v214 = vunpack.c.l.s4 1966171168
    %v215 = vunpack.c.0.s8 %v214
    %v216 = vlaneseq
    %v217 = vshrl.u32 %v216, 7
    %v218 = vsub.s32 %v215, %v217
    %v219 = vrot.slane %v203, %v218
    %v221 = vunpack.c.l.s4 1966171168
    %v222 = vunpack.c.0.s8 %v221
    %v223 = vlaneseq
    %v224 = vshrl.u32 %v223, 7
    %v225 = vsub.s32 %v222, %v224
    %v226 = vrot.slane %v204, %v225
    %v228 = vunpack.c.l.s4 1966171168
    %v229 = vunpack.c.0.s8 %v228
    %v230 = vlaneseq
    %v231 = vshrl.u32 %v230, 7
    %v232 = vsub.s32 %v229, %v231
    %v233 = vrot.slane %v205, %v232
    %v234 = vcombine.low %v212, %v219
    %v235 = vcombine.low %v226, %v233
    %v237 = vunpack.c.l.s4 1966171168
    %v238 = vunpack.c.0.s8 %v237
    %v239 = vlaneseq
    %v240 = vshrl.u32 %v239, 7
    %v241 = vsub.s32 %v238, %v240
    %v242 = vrot.slane %v234, %v241
    %v244 = vunpack.c.l.s4 1966171168
    %v245 = vunpack.c.0.s8 %v244
    %v246 = vlaneseq
    %v247 = vshrl.u32 %v246, 7
    %v248 = vsub.s32 %v245, %v247
    %v249 = vrot.slane %v235, %v248
    %v250 = vcombine.low %v242, %v249
    %v251 = vcombine.low %v89, %v95
    %v253 = vunpack.c.l.s4 1966171168
    %v254 = vunpack.c.0.s8 %v253
    %v255 = vlaneseq
    %v256 = vshrl.u32 %v255, 7
    %v257 = vsub.s32 %v254, %v256
    %v258 = vrot.slane %v251, %v257
    %v260 = vunpack.c.l.s4 1966171168
    %v261 = vunpack.c.0.s8 %v260
    %v262 = vlaneseq
    %v263 = vshrl.u32 %v262, 7
    %v264 = vsub.s32 %v261, %v263
    %v265 = vrot.slane %v101, %v264
    %v266 = vcombine.low %v258, %v265
    %v268 = vunpack.c.l.s4 1966171168
    %v269 = vunpack.c.0.s8 %v268
    %v270 = vlaneseq
    %v271 = vshrl.u32 %v270, 7
    %v272 = vsub.s32 %v269, %v271
    %v273 = vrot.slane %v266, %v272
    %274 = vrot.lane.b32.xlu0 %v201, 3
    %v275 = vpop.permute.xlu0 %274
    %276 = vrot.lane.b32.xlu0 %v250, 3
    %v277 = vpop.permute.xlu0 %276
    %278 = vrot.lane.b32.xlu0 %v273, 3
    %v279 = vpop.permute.xlu0 %278
    %vm283 = vcmask 154651
    %284 = vst.msk [vmem:[#allocation4] sm:$0xf8] %vm283, %v275
    %vm285 = vcmask 154648
    %286 = vst.msk [vmem:[#allocation4 + $0x10] sm:$0xff] %vm285, %v277
    %vm287 = vcmask 149528
    %288 = vst.msk [vmem:[#allocation4 + $0x20] sm:$0x7] %vm287, %v279
    %v289 = vcombine.low %v53, %v53
    %v290 = vcombine.low %v108, %v114
    %v291 = vcombine.low %v120, %v126
    %v292 = vcombine.low %v132, %v138
    %v294 = vunpack.c.l.s4 1966171168
    %v295 = vunpack.c.0.s8 %v294
    %v296 = vlaneseq
    %v297 = vshrl.u32 %v296, 7
    %v298 = vsub.s32 %v295, %v297
    %v299 = vrot.slane %v289, %v298
    %v301 = vunpack.c.l.s4 1966171168
    %v302 = vunpack.c.0.s8 %v301
    %v303 = vlaneseq
    %v304 = vshrl.u32 %v303, 7
    %v305 = vsub.s32 %v302, %v304
    %v306 = vrot.slane %v290, %v305
    %v308 = vunpack.c.l.s4 1966171168
    %v309 = vunpack.c.0.s8 %v308
    %v310 = vlaneseq
    %v311 = vshrl.u32 %v310, 7
    %v312 = vsub.s32 %v309, %v311
    %v313 = vrot.slane %v291, %v312
    %v315 = vunpack.c.l.s4 1966171168
    %v316 = vunpack.c.0.s8 %v315
    %v317 = vlaneseq
    %v318 = vshrl.u32 %v317, 7
    %v319 = vsub.s32 %v316, %v318
    %v320 = vrot.slane %v292, %v319
    %v321 = vcombine.low %v299, %v306
    %v322 = vcombine.low %v313, %v320
    %v324 = vunpack.c.l.s4 1966171168
    %v325 = vunpack.c.0.s8 %v324
    %v326 = vlaneseq
    %v327 = vshrl.u32 %v326, 7
    %v328 = vsub.s32 %v325, %v327
    %v329 = vrot.slane %v321, %v328
    %v331 = vunpack.c.l.s4 1966171168
    %v332 = vunpack.c.0.s8 %v331
    %v333 = vlaneseq
    %v334 = vshrl.u32 %v333, 7
    %v335 = vsub.s32 %v332, %v334
    %v336 = vrot.slane %v322, %v335
    %v337 = vcombine.low %v329, %v336
    %v338 = vcombine.low %v144, %v105
    %v339 = vcombine.low %v111, %v117
    %v340 = vcombine.low %v123, %v129
    %v341 = vcombine.low %v135, %v141
    %v343 = vunpack.c.l.s4 1966171168
    %v344 = vunpack.c.0.s8 %v343
    %v345 = vlaneseq
    %v346 = vshrl.u32 %v345, 7
    %v347 = vsub.s32 %v344, %v346
    %v348 = vrot.slane %v338, %v347
    %v350 = vunpack.c.l.s4 1966171168
    %v351 = vunpack.c.0.s8 %v350
    %v352 = vlaneseq
    %v353 = vshrl.u32 %v352, 7
    %v354 = vsub.s32 %v351, %v353
    %v355 = vrot.slane %v339, %v354
    %v357 = vunpack.c.l.s4 1966171168
    %v358 = vunpack.c.0.s8 %v357
    %v359 = vlaneseq
    %v360 = vshrl.u32 %v359, 7
    %v361 = vsub.s32 %v358, %v360
    %v362 = vrot.slane %v340, %v361
    %v364 = vunpack.c.l.s4 1966171168
    %v365 = vunpack.c.0.s8 %v364
    %v366 = vlaneseq
    %v367 = vshrl.u32 %v366, 7
    %v368 = vsub.s32 %v365, %v367
    %v369 = vrot.slane %v341, %v368
    %v370 = vcombine.low %v348, %v355
    %v371 = vcombine.low %v362, %v369
    %v373 = vunpack.c.l.s4 1966171168
    %v374 = vunpack.c.0.s8 %v373
    %v375 = vlaneseq
    %v376 = vshrl.u32 %v375, 7
    %v377 = vsub.s32 %v374, %v376
    %v378 = vrot.slane %v370, %v377
    %v380 = vunpack.c.l.s4 1966171168
    %v381 = vunpack.c.0.s8 %v380
    %v382 = vlaneseq
    %v383 = vshrl.u32 %v382, 7
    %v384 = vsub.s32 %v381, %v383
    %v385 = vrot.slane %v371, %v384
    %v386 = vcombine.low %v378, %v385
    %v388 = vunpack.c.l.s4 1966171168
    %v389 = vunpack.c.0.s8 %v388
    %v390 = vlaneseq
    %v391 = vshrl.u32 %v390, 7
    %v392 = vsub.s32 %v389, %v391
    %v393 = vrot.slane %v147, %v392
    %v395 = vunpack.c.l.s4 1966171168
    %v396 = vunpack.c.0.s8 %v395
    %v397 = vlaneseq
    %v398 = vshrl.u32 %v397, 7
    %v399 = vsub.s32 %v396, %v398
    %v400 = vrot.slane %v393, %v399
    %401 = vrot.lane.b32.xlu0 %v337, 3
    %v402 = vpop.permute.xlu0 %401
    %403 = vrot.lane.b32.xlu0 %v386, 3
    %v404 = vpop.permute.xlu0 %403
    %405 = vrot.lane.b32.xlu0 %v400, 3
    %v406 = vpop.permute.xlu0 %405
    %vm410 = vcmask 154649
    %411 = vst.msk [vmem:[#allocation4 + $0x30] sm:$0xfe] %vm410, %v402
    %412 = vst.msk [vmem:[#allocation4 + $0x40] sm:$0xff] %vm285, %v404
    %vm413 = vcmask 147480
    %414 = vst.msk [vmem:[#allocation4 + $0x50] sm:$0x1] %vm413, %v406
    %v415 = vcombine.low %v56, %v56
    %v416 = vcombine.low %v64, %v70
    %v417 = vcombine.low %v76, %v82
    %v419 = vunpack.c.l.s4 1966171168
    %v420 = vunpack.c.0.s8 %v419
    %v421 = vlaneseq
    %v422 = vshrl.u32 %v421, 7
    %v423 = vsub.s32 %v420, %v422
    %v424 = vrot.slane %v415, %v423
    %v426 = vunpack.c.l.s4 1966171168
    %v427 = vunpack.c.0.s8 %v426
    %v428 = vlaneseq
    %v429 = vshrl.u32 %v428, 7
    %v430 = vsub.s32 %v427, %v429
    %v431 = vrot.slane %v416, %v430
    %v433 = vunpack.c.l.s4 1966171168
    %v434 = vunpack.c.0.s8 %v433
    %v435 = vlaneseq
    %v436 = vshrl.u32 %v435, 7
    %v437 = vsub.s32 %v434, %v436
    %v438 = vrot.slane %v417, %v437
    %v439 = vcombine.low %v424, %v424
    %v440 = vcombine.low %v431, %v438
    %v442 = vunpack.c.l.s4 1966171168
    %v443 = vunpack.c.0.s8 %v442
    %v444 = vlaneseq
    %v445 = vshrl.u32 %v444, 7
    %v446 = vsub.s32 %v443, %v445
    %v447 = vrot.slane %v439, %v446
    %v449 = vunpack.c.l.s4 1966171168
    %v450 = vunpack.c.0.s8 %v449
    %v451 = vlaneseq
    %v452 = vshrl.u32 %v451, 7
    %v453 = vsub.s32 %v450, %v452
    %v454 = vrot.slane %v440, %v453
    %v455 = vcombine.low %v447, %v454
    %v456 = vcombine.low %v88, %v94
    %v457 = vcombine.low %v100, %v60
    %v458 = vcombine.low %v66, %v72
    %v459 = vcombine.low %v78, %v84
    %v461 = vunpack.c.l.s4 1966171168
    %v462 = vunpack.c.0.s8 %v461
    %v463 = vlaneseq
    %v464 = vshrl.u32 %v463, 7
    %v465 = vsub.s32 %v462, %v464
    %v466 = vrot.slane %v456, %v465
    %v468 = vunpack.c.l.s4 1966171168
    %v469 = vunpack.c.0.s8 %v468
    %v470 = vlaneseq
    %v471 = vshrl.u32 %v470, 7
    %v472 = vsub.s32 %v469, %v471
    %v473 = vrot.slane %v457, %v472
    %v475 = vunpack.c.l.s4 1966171168
    %v476 = vunpack.c.0.s8 %v475
    %v477 = vlaneseq
    %v478 = vshrl.u32 %v477, 7
    %v479 = vsub.s32 %v476, %v478
    %v480 = vrot.slane %v458, %v479
    %v482 = vunpack.c.l.s4 1966171168
    %v483 = vunpack.c.0.s8 %v482
    %v484 = vlaneseq
    %v485 = vshrl.u32 %v484, 7
    %v486 = vsub.s32 %v483, %v485
    %v487 = vrot.slane %v459, %v486
    %v488 = vcombine.low %v466, %v473
    %v489 = vcombine.low %v480, %v487
    %v491 = vunpack.c.l.s4 1966171168
    %v492 = vunpack.c.0.s8 %v491
    %v493 = vlaneseq
    %v494 = vshrl.u32 %v493, 7
    %v495 = vsub.s32 %v492, %v494
    %v496 = vrot.slane %v488, %v495
    %v498 = vunpack.c.l.s4 1966171168
    %v499 = vunpack.c.0.s8 %v498
    %v500 = vlaneseq
    %v501 = vshrl.u32 %v500, 7
    %v502 = vsub.s32 %v499, %v501
    %v503 = vrot.slane %v489, %v502
    %v504 = vcombine.low %v496, %v503
    %v505 = vcombine.low %v90, %v96
    %v507 = vunpack.c.l.s4 1966171168
    %v508 = vunpack.c.0.s8 %v507
    %v509 = vlaneseq
    %v510 = vshrl.u32 %v509, 7
    %v511 = vsub.s32 %v508, %v510
    %v512 = vrot.slane %v505, %v511
    %v514 = vunpack.c.l.s4 1966171168
    %v515 = vunpack.c.0.s8 %v514
    %v516 = vlaneseq
    %v517 = vshrl.u32 %v516, 7
    %v518 = vsub.s32 %v515, %v517
    %v519 = vrot.slane %v102, %v518
    %v520 = vcombine.low %v512, %v519
    %v522 = vunpack.c.l.s4 1966171168
    %v523 = vunpack.c.0.s8 %v522
    %v524 = vlaneseq
    %v525 = vshrl.u32 %v524, 7
    %v526 = vsub.s32 %v523, %v525
    %v527 = vrot.slane %v520, %v526
    %528 = vrot.lane.b32.xlu0 %v455, 25
    %v529 = vpop.permute.xlu0 %528
    %530 = vrot.lane.b32.xlu0 %v504, 25
    %v531 = vpop.permute.xlu0 %530
    %532 = vrot.lane.b32.xlu0 %v527, 25
    %v533 = vpop.permute.xlu0 %532
    %vm537 = vcmask 335051
    %538 = vst.msk [vmem:[#allocation4] sm:$0xf8] %vm537, %v529
    %vm539 = vcmask 335048
    %540 = vst.msk [vmem:[#allocation4 + $0x10] sm:$0xff] %vm539, %v531
    %vm541 = vcmask 329928
    %542 = vst.msk [vmem:[#allocation4 + $0x20] sm:$0x7] %vm541, %v533
    %v543 = vcombine.low %v54, %v54
    %v544 = vcombine.low %v110, %v116
    %v545 = vcombine.low %v122, %v128
    %v546 = vcombine.low %v134, %v140
    %v548 = vunpack.c.l.s4 1966171168
    %v549 = vunpack.c.0.s8 %v548
    %v550 = vlaneseq
    %v551 = vshrl.u32 %v550, 7
    %v552 = vsub.s32 %v549, %v551
    %v553 = vrot.slane %v543, %v552
    %v555 = vunpack.c.l.s4 1966171168
    %v556 = vunpack.c.0.s8 %v555
    %v557 = vlaneseq
    %v558 = vshrl.u32 %v557, 7
    %v559 = vsub.s32 %v556, %v558
    %v560 = vrot.slane %v544, %v559
    %v562 = vunpack.c.l.s4 1966171168
    %v563 = vunpack.c.0.s8 %v562
    %v564 = vlaneseq
    %v565 = vshrl.u32 %v564, 7
    %v566 = vsub.s32 %v563, %v565
    %v567 = vrot.slane %v545, %v566
    %v569 = vunpack.c.l.s4 1966171168
    %v570 = vunpack.c.0.s8 %v569
    %v571 = vlaneseq
    %v572 = vshrl.u32 %v571, 7
    %v573 = vsub.s32 %v570, %v572
    %v574 = vrot.slane %v546, %v573
    %v575 = vcombine.low %v553, %v560
    %v576 = vcombine.low %v567, %v574
    %v578 = vunpack.c.l.s4 1966171168
    %v579 = vunpack.c.0.s8 %v578
    %v580 = vlaneseq
    %v581 = vshrl.u32 %v580, 7
    %v582 = vsub.s32 %v579, %v581
    %v583 = vrot.slane %v575, %v582
    %v585 = vunpack.c.l.s4 1966171168
    %v586 = vunpack.c.0.s8 %v585
    %v587 = vlaneseq
    %v588 = vshrl.u32 %v587, 7
    %v589 = vsub.s32 %v586, %v588
    %v590 = vrot.slane %v576, %v589
    %v591 = vcombine.low %v583, %v590
    %v592 = vcombine.low %v146, %v106
    %v593 = vcombine.low %v112, %v118
    %v594 = vcombine.low %v124, %v130
    %v595 = vcombine.low %v136, %v142
    %v597 = vunpack.c.l.s4 1966171168
    %v598 = vunpack.c.0.s8 %v597
    %v599 = vlaneseq
    %v600 = vshrl.u32 %v599, 7
    %v601 = vsub.s32 %v598, %v600
    %v602 = vrot.slane %v592, %v601
    %v604 = vunpack.c.l.s4 1966171168
    %v605 = vunpack.c.0.s8 %v604
    %v606 = vlaneseq
    %v607 = vshrl.u32 %v606, 7
    %v608 = vsub.s32 %v605, %v607
    %v609 = vrot.slane %v593, %v608
    %v611 = vunpack.c.l.s4 1966171168
    %v612 = vunpack.c.0.s8 %v611
    %v613 = vlaneseq
    %v614 = vshrl.u32 %v613, 7
    %v615 = vsub.s32 %v612, %v614
    %v616 = vrot.slane %v594, %v615
    %v618 = vunpack.c.l.s4 1966171168
    %v619 = vunpack.c.0.s8 %v618
    %v620 = vlaneseq
    %v621 = vshrl.u32 %v620, 7
    %v622 = vsub.s32 %v619, %v621
    %v623 = vrot.slane %v595, %v622
    %v624 = vcombine.low %v602, %v609
    %v625 = vcombine.low %v616, %v623
    %v627 = vunpack.c.l.s4 1966171168
    %v628 = vunpack.c.0.s8 %v627
    %v629 = vlaneseq
    %v630 = vshrl.u32 %v629, 7
    %v631 = vsub.s32 %v628, %v630
    %v632 = vrot.slane %v624, %v631
    %v634 = vunpack.c.l.s4 1966171168
    %v635 = vunpack.c.0.s8 %v634
    %v636 = vlaneseq
    %v637 = vshrl.u32 %v636, 7
    %v638 = vsub.s32 %v635, %v637
    %v639 = vrot.slane %v625, %v638
    %v640 = vcombine.low %v632, %v639
    %v642 = vunpack.c.l.s4 1966171168
    %v643 = vunpack.c.0.s8 %v642
    %v644 = vlaneseq
    %v645 = vshrl.u32 %v644, 7
    %v646 = vsub.s32 %v643, %v645
    %v647 = vrot.slane %v148, %v646
    %v649 = vunpack.c.l.s4 1966171168
    %v650 = vunpack.c.0.s8 %v649
    %v651 = vlaneseq
    %v652 = vshrl.u32 %v651, 7
    %v653 = vsub.s32 %v650, %v652
    %v654 = vrot.slane %v647, %v653
    %655 = vrot.lane.b32.xlu0 %v591, 25
    %v656 = vpop.permute.xlu0 %655
    %657 = vrot.lane.b32.xlu0 %v640, 25
    %v658 = vpop.permute.xlu0 %657
    %659 = vrot.lane.b32.xlu0 %v654, 25
    %v660 = vpop.permute.xlu0 %659
    %vm664 = vcmask 335049
    %665 = vst.msk [vmem:[#allocation4 + $0x30] sm:$0xfe] %vm664, %v656
    %666 = vst.msk [vmem:[#allocation4 + $0x40] sm:$0xff] %vm539, %v658
    %vm667 = vcmask 327880
    %668 = vst.msk [vmem:[#allocation4 + $0x50] sm:$0x1] %vm667, %v660
    %v669 = vld [vmem:[#allocation4] sm:$0xff]
    %v670 = vld [vmem:[#allocation4 + $0x10] sm:$0xff]
    %v671 = vld [vmem:[#allocation4 + $0x20] sm:$0xff]
    %v672 = vld [vmem:[#allocation4 + $0x30] sm:$0xff]
    %v673 = vld [vmem:[#allocation4 + $0x40] sm:$0xff]
    %v674 = vld [vmem:[#allocation4 + $0x50] sm:$0xff]
    %675 = vst [vmem:[#allocation5] sm:$0xff] %v669
    %676 = vst [vmem:[#allocation5 + $0x8] sm:$0xff] %v670
    %677 = vst [vmem:[#allocation5 + $0x10] sm:$0xff] %v671
    %678 = vst [vmem:[#allocation5 + $0x18] sm:$0xff] %v672
    %679 = vst [vmem:[#allocation5 + $0x20] sm:$0xff] %v673
    %680 = vst [vmem:[#allocation5 + $0x28] sm:$0xff] %v674
    %s681 = sld [smem:[#allocation7]]
    %s682 = sld [smem:[#allocation7 + $0x31]]
    %v683 = vld [vmem:[#allocation5] sm:$0xff]
    %v684 = vld [vmem:[#allocation5 + $0x8] sm:$0xff]
    %v685 = vld [vmem:[#allocation5 + $0x16] sm:$0xff]
    %v686 = vld [vmem:[#allocation5 + $0x1e] sm:$0xff]
    %v687 = vstv %s681
    %v688 = vmul.f32 %v687, %v683
    %v689 = vmul.f32 %v687, %v684
    %v690 = vadd.f32 %v688, 0.0
    %v691 = vadd.f32 %v689, 0.0
    %v692 = vstv %s682
    %v693 = vmul.f32 %v692, %v685
    %v694 = vmul.f32 %v692, %v686
    %v695 = vadd.f32 %v693, 0.0
    %v696 = vadd.f32 %v694, 0.0
    %s697 = sld [smem:[#allocation7 + $0x7]]
    %s698 = sld [smem:[#allocation7 + $0x38]]
    %v699 = vld [vmem:[#allocation5 + $0x1] sm:$0xff]
    %v700 = vld [vmem:[#allocation5 + $0x9] sm:$0xff]
    %v701 = vld [vmem:[#allocation5 + $0x17] sm:$0xff]
    %v702 = vld [vmem:[#allocation5 + $0x1f] sm:$0xff]
    %v703 = vstv %s697
    %v704 = vmul.f32 %v703, %v699
    %v705 = vmul.f32 %v703, %v700
    %v706 = vadd.f32 %v704, 0.0
    %v707 = vadd.f32 %v705, 0.0
    %v708 = vstv %s698
    %v709 = vmul.f32 %v708, %v701
    %v710 = vmul.f32 %v708, %v702
    %v711 = vadd.f32 %v709, 0.0
    %v712 = vadd.f32 %v710, 0.0
    %s713 = sld [smem:[#allocation7 + $0xe]]
    %s714 = sld [smem:[#allocation7 + $0x3f]]
    %v715 = vld [vmem:[#allocation5 + $0x2] sm:$0xff]
    %v716 = vld [vmem:[#allocation5 + $0xa] sm:$0xff]
    %v717 = vld [vmem:[#allocation5 + $0x18] sm:$0xff]
    %v718 = vld [vmem:[#allocation5 + $0x20] sm:$0xff]
    %v719 = vstv %s713
    %v720 = vmul.f32 %v719, %v715
    %v721 = vmul.f32 %v719, %v716
    %v722 = vadd.f32 %v690, %v720
    %v723 = vadd.f32 %v691, %v721
    %v724 = vstv %s714
    %v725 = vmul.f32 %v724, %v717
    %v726 = vmul.f32 %v724, %v718
    %v727 = vadd.f32 %v695, %v725
    %v728 = vadd.f32 %v696, %v726
    %s729 = sld [smem:[#allocation7 + $0x15]]
    %s730 = sld [smem:[#allocation7 + $0x46]]
    %v731 = vld [vmem:[#allocation5 + $0x3] sm:$0xff]
    %v732 = vld [vmem:[#allocation5 + $0xb] sm:$0xff]
    %v733 = vld [vmem:[#allocation5 + $0x19] sm:$0xff]
    %v734 = vld [vmem:[#allocation5 + $0x21] sm:$0xff]
    %v735 = vstv %s729
    %v736 = vmul.f32 %v735, %v731
    %v737 = vmul.f32 %v735, %v732
    %v738 = vadd.f32 %v706, %v736
    %v739 = vadd.f32 %v707, %v737
    %v740 = vstv %s730
    %v741 = vmul.f32 %v740, %v733
    %v742 = vmul.f32 %v740, %v734
    %v743 = vadd.f32 %v711, %v741
    %v744 = vadd.f32 %v712, %v742
    %s745 = sld [smem:[#allocation7 + $0x1c]]
    %s746 = sld [smem:[#allocation7 + $0x4d]]
    %v747 = vld [vmem:[#allocation5 + $0x4] sm:$0xff]
    %v748 = vld [vmem:[#allocation5 + $0xc] sm:$0xff]
    %v749 = vld [vmem:[#allocation5 + $0x1a] sm:$0xff]
    %v750 = vld [vmem:[#allocation5 + $0x22] sm:$0xff]
    %v751 = vstv %s745
    %v752 = vmul.f32 %v751, %v747
    %v753 = vmul.f32 %v751, %v748
    %v754 = vadd.f32 %v722, %v752
    %v755 = vadd.f32 %v723, %v753
    %v756 = vstv %s746
    %v757 = vmul.f32 %v756, %v749
    %v758 = vmul.f32 %v756, %v750
    %v759 = vadd.f32 %v727, %v757
    %v760 = vadd.f32 %v728, %v758
    %s761 = sld [smem:[#allocation7 + $0x23]]
    %s762 = sld [smem:[#allocation7 + $0x54]]
    %v763 = vld [vmem:[#allocation5 + $0x5] sm:$0xff]
    %v764 = vld [vmem:[#allocation5 + $0xd] sm:$0xff]
    %v765 = vld [vmem:[#allocation5 + $0x1b] sm:$0xff]
    %v766 = vld [vmem:[#allocation5 + $0x23] sm:$0xff]
    %v767 = vstv %s761
    %v768 = vmul.f32 %v767, %v763
    %v769 = vmul.f32 %v767, %v764
    %v770 = vadd.f32 %v738, %v768
    %v771 = vadd.f32 %v739, %v769
    %v772 = vstv %s762
    %v773 = vmul.f32 %v772, %v765
    %v774 = vmul.f32 %v772, %v766
    %v775 = vadd.f32 %v743, %v773
    %v776 = vadd.f32 %v744, %v774
    %s777 = sld [smem:[#allocation7 + $0x2a]]
    %s778 = sld [smem:[#allocation7 + $0x5b]]
    %v779 = vld [vmem:[#allocation5 + $0x6] sm:$0xff]
    %v780 = vld [vmem:[#allocation5 + $0xe] sm:$0xff]
    %v781 = vld [vmem:[#allocation5 + $0x1c] sm:$0xff]
    %v782 = vld [vmem:[#allocation5 + $0x24] sm:$0xff]
    %v783 = vstv %s777
    %v784 = vmul.f32 %v783, %v779
    %v785 = vmul.f32 %v783, %v780
    %v786 = vadd.f32 %v754, %v784
    %v787 = vadd.f32 %v755, %v785
    %v788 = vstv %s778
    %v789 = vmul.f32 %v788, %v781
    %v790 = vmul.f32 %v788, %v782
    %v791 = vadd.f32 %v759, %v789
    %v792 = vadd.f32 %v760, %v790
    %v793 = vld [vmem:[#allocation4] sm:$0xff]
    %v794 = vld [vmem:[#allocation4 + $0x8] sm:$0xff]
    %v795 = vld [vmem:[#allocation4 + $0x10] sm:$0xff]
    %v796 = vld [vmem:[#allocation4 + $0x18] sm:$0xff]
    %v797 = vld [vmem:[#allocation4 + $0x20] sm:$0xff]
    %v798 = vld [vmem:[#allocation4 + $0x28] sm:$0xff]
    %v799 = vld [vmem:[#allocation4 + $0x30] sm:$0xff]
    %v800 = vld [vmem:[#allocation4 + $0x38] sm:$0xff]
    %v801 = vld [vmem:[#allocation4 + $0x40] sm:$0xff]
    %v802 = vld [vmem:[#allocation4 + $0x48] sm:$0xff]
    %v803 = vld [vmem:[#allocation4 + $0x50] sm:$0xff]
    %v804 = vld [vmem:[#allocation4 + $0x58] sm:$0xff]
    %817 = vrot.lane.b32.xlu0 %v793, 127
    %v818 = vpop.permute.xlu0 %817
    %819 = vrot.lane.b32.xlu0 %v794, 127
    %v820 = vpop.permute.xlu0 %819
    %821 = vrot.lane.b32.xlu0 %v795, 127
    %v822 = vpop.permute.xlu0 %821
    %823 = vrot.lane.b32.xlu0 %v796, 127
    %v824 = vpop.permute.xlu0 %823
    %825 = vrot.lane.b32.xlu0 %v797, 127
    %v826 = vpop.permute.xlu0 %825
    %827 = vrot.lane.b32.xlu0 %v798, 127
    %v828 = vpop.permute.xlu0 %827
    %829 = vrot.lane.b32.xlu0 %v799, 127
    %v830 = vpop.permute.xlu0 %829
    %831 = vrot.lane.b32.xlu0 %v800, 127
    %v832 = vpop.permute.xlu0 %831
    %833 = vrot.lane.b32.xlu0 %v801, 127
    %v834 = vpop.permute.xlu0 %833
    %835 = vrot.lane.b32.xlu0 %v802, 127
    %v836 = vpop.permute.xlu0 %835
    %837 = vrot.lane.b32.xlu0 %v803, 127
    %v838 = vpop.permute.xlu0 %837
    %839 = vrot.lane.b32.xlu0 %v804, 127
    %v840 = vpop.permute.xlu0 %839
    %vm841 = vcmask 1039360
    %v842 = vsel %vm841, %v818, %v820
    %v843 = vsel %vm841, %v822, %v824
    %v844 = vsel %vm841, %v826, %v828
    %v845 = vsel %vm841, %v830, %v832
    %v846 = vsel %vm841, %v834, %v836
    %v847 = vsel %vm841, %v838, %v840
    %854 = vst [vmem:[#allocation5] sm:$0xff] %v842
    %855 = vst [vmem:[#allocation5 + $0x8] sm:$0xff] %v843
    %856 = vst [vmem:[#allocation5 + $0x10] sm:$0xff] %v844
    %857 = vst [vmem:[#allocation5 + $0x18] sm:$0xff] %v845
    %858 = vst [vmem:[#allocation5 + $0x20] sm:$0xff] %v846
    %859 = vst [vmem:[#allocation5 + $0x28] sm:$0xff] %v847
    %s860 = sld [smem:[#allocation7 + $0x1]]
    %s861 = sld [smem:[#allocation7 + $0x32]]
    %v862 = vld [vmem:[#allocation5] sm:$0xff]
    %v863 = vld [vmem:[#allocation5 + $0x8] sm:$0xff]
    %v864 = vld [vmem:[#allocation5 + $0x16] sm:$0xff]
    %v865 = vld [vmem:[#allocation5 + $0x1e] sm:$0xff]
    %v866 = vstv %s860
    %v867 = vmul.f32 %v866, %v862
    %v868 = vmul.f32 %v866, %v863
    %v869 = vadd.f32 %v786, %v867
    %v870 = vadd.f32 %v787, %v868
    %v871 = vstv %s861
    %v872 = vmul.f32 %v871, %v864
    %v873 = vmul.f32 %v871, %v865
    %v874 = vadd.f32 %v791, %v872
    %v875 = vadd.f32 %v792, %v873
    %s876 = sld [smem:[#allocation7 + $0x8]]
    %s877 = sld [smem:[#allocation7 + $0x39]]
    %v878 = vld [vmem:[#allocation5 + $0x1] sm:$0xff]
    %v879 = vld [vmem:[#allocation5 + $0x9] sm:$0xff]
    %v880 = vld [vmem:[#allocation5 + $0x17] sm:$0xff]
    %v881 = vld [vmem:[#allocation5 + $0x1f] sm:$0xff]
    %v882 = vstv %s876
    %v883 = vmul.f32 %v882, %v878
    %v884 = vmul.f32 %v882, %v879
    %v885 = vadd.f32 %v770, %v883
    %v886 = vadd.f32 %v771, %v884
    %v887 = vstv %s877
    %v888 = vmul.f32 %v887, %v880
    %v889 = vmul.f32 %v887, %v881
    %v890 = vadd.f32 %v775, %v888
    %v891 = vadd.f32 %v776, %v889
    %s892 = sld [smem:[#allocation7 + $0xf]]
    %s893 = sld [smem:[#allocation7 + $0x40]]
    %v894 = vld [vmem:[#allocation5 + $0x2] sm:$0xff]
    %v895 = vld [vmem:[#allocation5 + $0xa] sm:$0xff]
    %v896 = vld [vmem:[#allocation5 + $0x18] sm:$0xff]
    %v897 = vld [vmem:[#allocation5 + $0x20] sm:$0xff]
    %v898 = vstv %s892
    %v899 = vmul.f32 %v898, %v894
    %v900 = vmul.f32 %v898, %v895
    %v901 = vadd.f32 %v869, %v899
    %v902 = vadd.f32 %v870, %v900
    %v903 = vstv %s893
    %v904 = vmul.f32 %v903, %v896
    %v905 = vmul.f32 %v903, %v897
    %v906 = vadd.f32 %v874, %v904
    %v907 = vadd.f32 %v875, %v905
    %s908 = sld [smem:[#allocation7 + $0x16]]
    %s909 = sld [smem:[#allocation7 + $0x47]]
    %v910 = vld [vmem:[#allocation5 + $0x3] sm:$0xff]
    %v911 = vld [vmem:[#allocation5 + $0xb] sm:$0xff]
    %v912 = vld [vmem:[#allocation5 + $0x19] sm:$0xff]
    %v913 = vld [vmem:[#allocation5 + $0x21] sm:$0xff]
    %v914 = vstv %s908
    %v915 = vmul.f32 %v914, %v910
    %v916 = vmul.f32 %v914, %v911
    %v917 = vadd.f32 %v885, %v915
    %v918 = vadd.f32 %v886, %v916
    %v919 = vstv %s909
    %v920 = vmul.f32 %v919, %v912
    %v921 = vmul.f32 %v919, %v913
    %v922 = vadd.f32 %v890, %v920
    %v923 = vadd.f32 %v891, %v921
    %s924 = sld [smem:[#allocation7 + $0x1d]]
    %s925 = sld [smem:[#allocation7 + $0x4e]]
    %v926 = vld [vmem:[#allocation5 + $0x4] sm:$0xff]
    %v927 = vld [vmem:[#allocation5 + $0xc] sm:$0xff]
    %v928 = vld [vmem:[#allocation5 + $0x1a] sm:$0xff]
    %v929 = vld [vmem:[#allocation5 + $0x22] sm:$0xff]
    %v930 = vstv %s924
    %v931 = vmul.f32 %v930, %v926
    %v932 = vmul.f32 %v930, %v927
    %v933 = vadd.f32 %v901, %v931
    %v934 = vadd.f32 %v902, %v932
    %v935 = vstv %s925
    %v936 = vmul.f32 %v935, %v928
    %v937 = vmul.f32 %v935, %v929
    %v938 = vadd.f32 %v906, %v936
    %v939 = vadd.f32 %v907, %v937
    %s940 = sld [smem:[#allocation7 + $0x24]]
    %s941 = sld [smem:[#allocation7 + $0x55]]
    %v942 = vld [vmem:[#allocation5 + $0x5] sm:$0xff]
    %v943 = vld [vmem:[#allocation5 + $0xd] sm:$0xff]
    %v944 = vld [vmem:[#allocation5 + $0x1b] sm:$0xff]
    %v945 = vld [vmem:[#allocation5 + $0x23] sm:$0xff]
    %v946 = vstv %s940
    %v947 = vmul.f32 %v946, %v942
    %v948 = vmul.f32 %v946, %v943
    %v949 = vadd.f32 %v917, %v947
    %v950 = vadd.f32 %v918, %v948
    %v951 = vstv %s941
    %v952 = vmul.f32 %v951, %v944
    %v953 = vmul.f32 %v951, %v945
    %v954 = vadd.f32 %v922, %v952
    %v955 = vadd.f32 %v923, %v953
    %s956 = sld [smem:[#allocation7 + $0x2b]]
    %s957 = sld [smem:[#allocation7 + $0x5c]]
    %v958 = vld [vmem:[#allocation5 + $0x6] sm:$0xff]
    %v959 = vld [vmem:[#allocation5 + $0xe] sm:$0xff]
    %v960 = vld [vmem:[#allocation5 + $0x1c] sm:$0xff]
    %v961 = vld [vmem:[#allocation5 + $0x24] sm:$0xff]
    %v962 = vstv %s956
    %v963 = vmul.f32 %v962, %v958
    %v964 = vmul.f32 %v962, %v959
    %v965 = vadd.f32 %v933, %v963
    %v966 = vadd.f32 %v934, %v964
    %v967 = vstv %s957
    %v968 = vmul.f32 %v967, %v960
    %v969 = vmul.f32 %v967, %v961
    %v970 = vadd.f32 %v938, %v968
    %v971 = vadd.f32 %v939, %v969
    %v972 = vld [vmem:[#allocation4] sm:$0xff]
    %v973 = vld [vmem:[#allocation4 + $0x8] sm:$0xff]
    %v974 = vld [vmem:[#allocation4 + $0x10] sm:$0xff]
    %v975 = vld [vmem:[#allocation4 + $0x18] sm:$0xff]
    %v976 = vld [vmem:[#allocation4 + $0x20] sm:$0xff]
    %v977 = vld [vmem:[#allocation4 + $0x28] sm:$0xff]
    %v978 = vld [vmem:[#allocation4 + $0x30] sm:$0xff]
    %v979 = vld [vmem:[#allocation4 + $0x38] sm:$0xff]
    %v980 = vld [vmem:[#allocation4 + $0x40] sm:$0xff]
    %v981 = vld [vmem:[#allocation4 + $0x48] sm:$0xff]
    %v982 = vld [vmem:[#allocation4 + $0x50] sm:$0xff]
    %v983 = vld [vmem:[#allocation4 + $0x58] sm:$0xff]
    %996 = vrot.lane.b32.xlu0 %v972, 126
    %v997 = vpop.permute.xlu0 %996
    %998 = vrot.lane.b32.xlu0 %v973, 126
    %v999 = vpop.permute.xlu0 %998
    %1000 = vrot.lane.b32.xlu0 %v974, 126
    %v1001 = vpop.permute.xlu0 %1000
    %1002 = vrot.lane.b32.xlu0 %v975, 126
    %v1003 = vpop.permute.xlu0 %1002
    %1004 = vrot.lane.b32.xlu0 %v976, 126
    %v1005 = vpop.permute.xlu0 %1004
    %1006 = vrot.lane.b32.xlu0 %v977, 126
    %v1007 = vpop.permute.xlu0 %1006
    %1008 = vrot.lane.b32.xlu0 %v978, 126
    %v1009 = vpop.permute.xlu0 %1008
    %1010 = vrot.lane.b32.xlu0 %v979, 126
    %v1011 = vpop.permute.xlu0 %1010
    %1012 = vrot.lane.b32.xlu0 %v980, 126
    %v1013 = vpop.permute.xlu0 %1012
    %1014 = vrot.lane.b32.xlu0 %v981, 126
    %v1015 = vpop.permute.xlu0 %1014
    %1016 = vrot.lane.b32.xlu0 %v982, 126
    %v1017 = vpop.permute.xlu0 %1016
    %1018 = vrot.lane.b32.xlu0 %v983, 126
    %v1019 = vpop.permute.xlu0 %1018
    %vm1020 = vcmask 1031168
    %v1021 = vsel %vm1020, %v997, %v999
    %v1022 = vsel %vm1020, %v1001, %v1003
    %v1023 = vsel %vm1020, %v1005, %v1007
    %v1024 = vsel %vm1020, %v1009, %v1011
    %v1025 = vsel %vm1020, %v1013, %v1015
    %v1026 = vsel %vm1020, %v1017, %v1019
    %1033 = vst [vmem:[#allocation5] sm:$0xff] %v1021
    %1034 = vst [vmem:[#allocation5 + $0x8] sm:$0xff] %v1022
    %1035 = vst [vmem:[#allocation5 + $0x10] sm:$0xff] %v1023
    %1036 = vst [vmem:[#allocation5 + $0x18] sm:$0xff] %v1024
    %1037 = vst [vmem:[#allocation5 + $0x20] sm:$0xff] %v1025
    %1038 = vst [vmem:[#allocation5 + $0x28] sm:$0xff] %v1026
    %s1039 = sld [smem:[#allocation7 + $0x2]]
    %s1040 = sld [smem:[#allocation7 + $0x33]]
    %v1041 = vld [vmem:[#allocation5] sm:$0xff]
    %v1042 = vld [vmem:[#allocation5 + $0x8] sm:$0xff]
    %v1043 = vld [vmem:[#allocation5 + $0x16] sm:$0xff]
    %v1044 = vld [vmem:[#allocation5 + $0x1e] sm:$0xff]
    %v1045 = vstv %s1039
    %v1046 = vmul.f32 %v1045, %v1041
    %v1047 = vmul.f32 %v1045, %v1042
    %v1048 = vadd.f32 %v965, %v1046
    %v1049 = vadd.f32 %v966, %v1047
    %v1050 = vstv %s1040
    %v1051 = vmul.f32 %v1050, %v1043
    %v1052 = vmul.f32 %v1050, %v1044
    %v1053 = vadd.f32 %v970, %v1051
    %v1054 = vadd.f32 %v971, %v1052
    %s1055 = sld [smem:[#allocation7 + $0x9]]
    %s1056 = sld [smem:[#allocation7 + $0x3a]]
    %v1057 = vld [vmem:[#allocation5 + $0x1] sm:$0xff]
    %v1058 = vld [vmem:[#allocation5 + $0x9] sm:$0xff]
    %v1059 = vld [vmem:[#allocation5 + $0x17] sm:$0xff]
    %v1060 = vld [vmem:[#allocation5 + $0x1f] sm:$0xff]
    %v1061 = vstv %s1055
    %v1062 = vmul.f32 %v1061, %v1057
    %v1063 = vmul.f32 %v1061, %v1058
    %v1064 = vadd.f32 %v949, %v1062
    %v1065 = vadd.f32 %v950, %v1063
    %v1066 = vstv %s1056
    %v1067 = vmul.f32 %v1066, %v1059
    %v1068 = vmul.f32 %v1066, %v1060
    %v1069 = vadd.f32 %v954, %v1067
    %v1070 = vadd.f32 %v955, %v1068
    %s1071 = sld [smem:[#allocation7 + $0x10]]
    %s1072 = sld [smem:[#allocation7 + $0x41]]
    %v1073 = vld [vmem:[#allocation5 + $0x2] sm:$0xff]
    %v1074 = vld [vmem:[#allocation5 + $0xa] sm:$0xff]
    %v1075 = vld [vmem:[#allocation5 + $0x18] sm:$0xff]
    %v1076 = vld [vmem:[#allocation5 + $0x20] sm:$0xff]
    %v1077 = vstv %s1071
    %v1078 = vmul.f32 %v1077, %v1073
    %v1079 = vmul.f32 %v1077, %v1074
    %v1080 = vadd.f32 %v1048, %v1078
    %v1081 = vadd.f32 %v1049, %v1079
    %v1082 = vstv %s1072
    %v1083 = vmul.f32 %v1082, %v1075
    %v1084 = vmul.f32 %v1082, %v1076
    %v1085 = vadd.f32 %v1053, %v1083
    %v1086 = vadd.f32 %v1054, %v1084
    %s1087 = sld [smem:[#allocation7 + $0x17]]
    %s1088 = sld [smem:[#allocation7 + $0x48]]
    %v1089 = vld [vmem:[#allocation5 + $0x3] sm:$0xff]
    %v1090 = vld [vmem:[#allocation5 + $0xb] sm:$0xff]
    %v1091 = vld [vmem:[#allocation5 + $0x19] sm:$0xff]
    %v1092 = vld [vmem:[#allocation5 + $0x21] sm:$0xff]
    %v1093 = vstv %s1087
    %v1094 = vmul.f32 %v1093, %v1089
    %v1095 = vmul.f32 %v1093, %v1090
    %v1096 = vadd.f32 %v1064, %v1094
    %v1097 = vadd.f32 %v1065, %v1095
    %v1098 = vstv %s1088
    %v1099 = vmul.f32 %v1098, %v1091
    %v1100 = vmul.f32 %v1098, %v1092
    %v1101 = vadd.f32 %v1069, %v1099
    %v1102 = vadd.f32 %v1070, %v1100
    %s1103 = sld [smem:[#allocation7 + $0x1e]]
    %s1104 = sld [smem:[#allocation7 + $0x4f]]
    %v1105 = vld [vmem:[#allocation5 + $0x4] sm:$0xff]
    %v1106 = vld [vmem:[#allocation5 + $0xc] sm:$0xff]
    %v1107 = vld [vmem:[#allocation5 + $0x1a] sm:$0xff]
    %v1108 = vld [vmem:[#allocation5 + $0x22] sm:$0xff]
    %v1109 = vstv %s1103
    %v1110 = vmul.f32 %v1109, %v1105
    %v1111 = vmul.f32 %v1109, %v1106
    %v1112 = vadd.f32 %v1080, %v1110
    %v1113 = vadd.f32 %v1081, %v1111
    %v1114 = vstv %s1104
    %v1115 = vmul.f32 %v1114, %v1107
    %v1116 = vmul.f32 %v1114, %v1108
    %v1117 = vadd.f32 %v1085, %v1115
    %v1118 = vadd.f32 %v1086, %v1116
    %s1119 = sld [smem:[#allocation7 + $0x25]]
    %s1120 = sld [smem:[#allocation7 + $0x56]]
    %v1121 = vld [vmem:[#allocation5 + $0x5] sm:$0xff]
    %v1122 = vld [vmem:[#allocation5 + $0xd] sm:$0xff]
    %v1123 = vld [vmem:[#allocation5 + $0x1b] sm:$0xff]
    %v1124 = vld [vmem:[#allocation5 + $0x23] sm:$0xff]
    %v1125 = vstv %s1119
    %v1126 = vmul.f32 %v1125, %v1121
    %v1127 = vmul.f32 %v1125, %v1122
    %v1128 = vadd.f32 %v1096, %v1126
    %v1129 = vadd.f32 %v1097, %v1127
    %v1130 = vstv %s1120
    %v1131 = vmul.f32 %v1130, %v1123
    %v1132 = vmul.f32 %v1130, %v1124
    %v1133 = vadd.f32 %v1101, %v1131
    %v1134 = vadd.f32 %v1102, %v1132
    %s1135 = sld [smem:[#allocation7 + $0x2c]]
    %s1136 = sld [smem:[#allocation7 + $0x5d]]
    %v1137 = vld [vmem:[#allocation5 + $0x6] sm:$0xff]
    %v1138 = vld [vmem:[#allocation5 + $0xe] sm:$0xff]
    %v1139 = vld [vmem:[#allocation5 + $0x1c] sm:$0xff]
    %v1140 = vld [vmem:[#allocation5 + $0x24] sm:$0xff]
    %v1141 = vstv %s1135
    %v1142 = vmul.f32 %v1141, %v1137
    %v1143 = vmul.f32 %v1141, %v1138
    %v1144 = vadd.f32 %v1112, %v1142
    %v1145 = vadd.f32 %v1113, %v1143
    %v1146 = vstv %s1136
    %v1147 = vmul.f32 %v1146, %v1139
    %v1148 = vmul.f32 %v1146, %v1140
    %v1149 = vadd.f32 %v1117, %v1147
    %v1150 = vadd.f32 %v1118, %v1148
    %v1151 = vld [vmem:[#allocation4] sm:$0xff]
    %v1152 = vld [vmem:[#allocation4 + $0x8] sm:$0xff]
    %v1153 = vld [vmem:[#allocation4 + $0x10] sm:$0xff]
    %v1154 = vld [vmem:[#allocation4 + $0x18] sm:$0xff]
    %v1155 = vld [vmem:[#allocation4 + $0x20] sm:$0xff]
    %v1156 = vld [vmem:[#allocation4 + $0x28] sm:$0xff]
    %v1157 = vld [vmem:[#allocation4 + $0x30] sm:$0xff]
    %v1158 = vld [vmem:[#allocation4 + $0x38] sm:$0xff]
    %v1159 = vld [vmem:[#allocation4 + $0x40] sm:$0xff]
    %v1160 = vld [vmem:[#allocation4 + $0x48] sm:$0xff]
    %v1161 = vld [vmem:[#allocation4 + $0x50] sm:$0xff]
    %v1162 = vld [vmem:[#allocation4 + $0x58] sm:$0xff]
    %1175 = vrot.lane.b32.xlu0 %v1151, 125
    %v1176 = vpop.permute.xlu0 %1175
    %1177 = vrot.lane.b32.xlu0 %v1152, 125
    %v1178 = vpop.permute.xlu0 %1177
    %1179 = vrot.lane.b32.xlu0 %v1153, 125
    %v1180 = vpop.permute.xlu0 %1179
    %1181 = vrot.lane.b32.xlu0 %v1154, 125
    %v1182 = vpop.permute.xlu0 %1181
    %1183 = vrot.lane.b32.xlu0 %v1155, 125
    %v1184 = vpop.permute.xlu0 %1183
    %1185 = vrot.lane.b32.xlu0 %v1156, 125
    %v1186 = vpop.permute.xlu0 %1185
    %1187 = vrot.lane.b32.xlu0 %v1157, 125
    %v1188 = vpop.permute.xlu0 %1187
    %1189 = vrot.lane.b32.xlu0 %v1158, 125
    %v1190 = vpop.permute.xlu0 %1189
    %1191 = vrot.lane.b32.xlu0 %v1159, 125
    %v1192 = vpop.permute.xlu0 %1191
    %1193 = vrot.lane.b32.xlu0 %v1160, 125
    %v1194 = vpop.permute.xlu0 %1193
    %1195 = vrot.lane.b32.xlu0 %v1161, 125
    %v1196 = vpop.permute.xlu0 %1195
    %1197 = vrot.lane.b32.xlu0 %v1162, 125
    %v1198 = vpop.permute.xlu0 %1197
    %vm1199 = vcmask 1022976
    %v1200 = vsel %vm1199, %v1176, %v1178
    %v1201 = vsel %vm1199, %v1180, %v1182
    %v1202 = vsel %vm1199, %v1184, %v1186
    %v1203 = vsel %vm1199, %v1188, %v1190
    %v1204 = vsel %vm1199, %v1192, %v1194
    %v1205 = vsel %vm1199, %v1196, %v1198
    %1212 = vst [vmem:[#allocation5] sm:$0xff] %v1200
    %1213 = vst [vmem:[#allocation5 + $0x8] sm:$0xff] %v1201
    %1214 = vst [vmem:[#allocation5 + $0x10] sm:$0xff] %v1202
    %1215 = vst [vmem:[#allocation5 + $0x18] sm:$0xff] %v1203
    %1216 = vst [vmem:[#allocation5 + $0x20] sm:$0xff] %v1204
    %1217 = vst [vmem:[#allocation5 + $0x28] sm:$0xff] %v1205
    %s1218 = sld [smem:[#allocation7 + $0x3]]
    %s1219 = sld [smem:[#allocation7 + $0x34]]
    %v1220 = vld [vmem:[#allocation5] sm:$0xff]
    %v1221 = vld [vmem:[#allocation5 + $0x8] sm:$0xff]
    %v1222 = vld [vmem:[#allocation5 + $0x16] sm:$0xff]
    %v1223 = vld [vmem:[#allocation5 + $0x1e] sm:$0xff]
    %v1224 = vstv %s1218
    %v1225 = vmul.f32 %v1224, %v1220
    %v1226 = vmul.f32 %v1224, %v1221
    %v1227 = vadd.f32 %v1144, %v1225
    %v1228 = vadd.f32 %v1145, %v1226
    %v1229 = vstv %s1219
    %v1230 = vmul.f32 %v1229, %v1222
    %v1231 = vmul.f32 %v1229, %v1223
    %v1232 = vadd.f32 %v1149, %v1230
    %v1233 = vadd.f32 %v1150, %v1231
    %s1234 = sld [smem:[#allocation7 + $0xa]]
    %s1235 = sld [smem:[#allocation7 + $0x3b]]
    %v1236 = vld [vmem:[#allocation5 + $0x1] sm:$0xff]
    %v1237 = vld [vmem:[#allocation5 + $0x9] sm:$0xff]
    %v1238 = vld [vmem:[#allocation5 + $0x17] sm:$0xff]
    %v1239 = vld [vmem:[#allocation5 + $0x1f] sm:$0xff]
    %v1240 = vstv %s1234
    %v1241 = vmul.f32 %v1240, %v1236
    %v1242 = vmul.f32 %v1240, %v1237
    %v1243 = vadd.f32 %v1128, %v1241
    %v1244 = vadd.f32 %v1129, %v1242
    %v1245 = vstv %s1235
    %v1246 = vmul.f32 %v1245, %v1238
    %v1247 = vmul.f32 %v1245, %v1239
    %v1248 = vadd.f32 %v1133, %v1246
    %v1249 = vadd.f32 %v1134, %v1247
    %s1250 = sld [smem:[#allocation7 + $0x11]]
    %s1251 = sld [smem:[#allocation7 + $0x42]]
    %v1252 = vld [vmem:[#allocation5 + $0x2] sm:$0xff]
    %v1253 = vld [vmem:[#allocation5 + $0xa] sm:$0xff]
    %v1254 = vld [vmem:[#allocation5 + $0x18] sm:$0xff]
    %v1255 = vld [vmem:[#allocation5 + $0x20] sm:$0xff]
    %v1256 = vstv %s1250
    %v1257 = vmul.f32 %v1256, %v1252
    %v1258 = vmul.f32 %v1256, %v1253
    %v1259 = vadd.f32 %v1227, %v1257
    %v1260 = vadd.f32 %v1228, %v1258
    %v1261 = vstv %s1251
    %v1262 = vmul.f32 %v1261, %v1254
    %v1263 = vmul.f32 %v1261, %v1255
    %v1264 = vadd.f32 %v1232, %v1262
    %v1265 = vadd.f32 %v1233, %v1263
    %s1266 = sld [smem:[#allocation7 + $0x18]]
    %s1267 = sld [smem:[#allocation7 + $0x49]]
    %v1268 = vld [vmem:[#allocation5 + $0x3] sm:$0xff]
    %v1269 = vld [vmem:[#allocation5 + $0xb] sm:$0xff]
    %v1270 = vld [vmem:[#allocation5 + $0x19] sm:$0xff]
    %v1271 = vld [vmem:[#allocation5 + $0x21] sm:$0xff]
    %v1272 = vstv %s1266
    %v1273 = vmul.f32 %v1272, %v1268
    %v1274 = vmul.f32 %v1272, %v1269
    %v1275 = vadd.f32 %v1243, %v1273
    %v1276 = vadd.f32 %v1244, %v1274
    %v1277 = vstv %s1267
    %v1278 = vmul.f32 %v1277, %v1270
    %v1279 = vmul.f32 %v1277, %v1271
    %v1280 = vadd.f32 %v1248, %v1278
    %v1281 = vadd.f32 %v1249, %v1279
    %s1282 = sld [smem:[#allocation7 + $0x1f]]
    %s1283 = sld [smem:[#allocation7 + $0x50]]
    %v1284 = vld [vmem:[#allocation5 + $0x4] sm:$0xff]
    %v1285 = vld [vmem:[#allocation5 + $0xc] sm:$0xff]
    %v1286 = vld [vmem:[#allocation5 + $0x1a] sm:$0xff]
    %v1287 = vld [vmem:[#allocation5 + $0x22] sm:$0xff]
    %v1288 = vstv %s1282
    %v1289 = vmul.f32 %v1288, %v1284
    %v1290 = vmul.f32 %v1288, %v1285
    %v1291 = vadd.f32 %v1259, %v1289
    %v1292 = vadd.f32 %v1260, %v1290
    %v1293 = vstv %s1283
    %v1294 = vmul.f32 %v1293, %v1286
    %v1295 = vmul.f32 %v1293, %v1287
    %v1296 = vadd.f32 %v1264, %v1294
    %v1297 = vadd.f32 %v1265, %v1295
    %s1298 = sld [smem:[#allocation7 + $0x26]]
    %s1299 = sld [smem:[#allocation7 + $0x57]]
    %v1300 = vld [vmem:[#allocation5 + $0x5] sm:$0xff]
    %v1301 = vld [vmem:[#allocation5 + $0xd] sm:$0xff]
    %v1302 = vld [vmem:[#allocation5 + $0x1b] sm:$0xff]
    %v1303 = vld [vmem:[#allocation5 + $0x23] sm:$0xff]
    %v1304 = vstv %s1298
    %v1305 = vmul.f32 %v1304, %v1300
    %v1306 = vmul.f32 %v1304, %v1301
    %v1307 = vadd.f32 %v1275, %v1305
    %v1308 = vadd.f32 %v1276, %v1306
    %v1309 = vstv %s1299
    %v1310 = vmul.f32 %v1309, %v1302
    %v1311 = vmul.f32 %v1309, %v1303
    %v1312 = vadd.f32 %v1280, %v1310
    %v1313 = vadd.f32 %v1281, %v1311
    %s1314 = sld [smem:[#allocation7 + $0x2d]]
    %s1315 = sld [smem:[#allocation7 + $0x5e]]
    %v1316 = vld [vmem:[#allocation5 + $0x6] sm:$0xff]
    %v1317 = vld [vmem:[#allocation5 + $0xe] sm:$0xff]
    %v1318 = vld [vmem:[#allocation5 + $0x1c] sm:$0xff]
    %v1319 = vld [vmem:[#allocation5 + $0x24] sm:$0xff]
    %v1320 = vstv %s1314
    %v1321 = vmul.f32 %v1320, %v1316
    %v1322 = vmul.f32 %v1320, %v1317
    %v1323 = vadd.f32 %v1291, %v1321
    %v1324 = vadd.f32 %v1292, %v1322
    %v1325 = vstv %s1315
    %v1326 = vmul.f32 %v1325, %v1318
    %v1327 = vmul.f32 %v1325, %v1319
    %v1328 = vadd.f32 %v1296, %v1326
    %v1329 = vadd.f32 %v1297, %v1327
    %v1330 = vld [vmem:[#allocation4] sm:$0xff]
    %v1331 = vld [vmem:[#allocation4 + $0x8] sm:$0xff]
    %v1332 = vld [vmem:[#allocation4 + $0x10] sm:$0xff]
    %v1333 = vld [vmem:[#allocation4 + $0x18] sm:$0xff]
    %v1334 = vld [vmem:[#allocation4 + $0x20] sm:$0xff]
    %v1335 = vld [vmem:[#allocation4 + $0x28] sm:$0xff]
    %v1336 = vld [vmem:[#allocation4 + $0x30] sm:$0xff]
    %v1337 = vld [vmem:[#allocation4 + $0x38] sm:$0xff]
    %v1338 = vld [vmem:[#allocation4 + $0x40] sm:$0xff]
    %v1339 = vld [vmem:[#allocation4 + $0x48] sm:$0xff]
    %v1340 = vld [vmem:[#allocation4 + $0x50] sm:$0xff]
    %v1341 = vld [vmem:[#allocation4 + $0x58] sm:$0xff]
    %1354 = vrot.lane.b32.xlu0 %v1330, 124
    %v1355 = vpop.permute.xlu0 %1354
    %1356 = vrot.lane.b32.xlu0 %v1331, 124
    %v1357 = vpop.permute.xlu0 %1356
    %1358 = vrot.lane.b32.xlu0 %v1332, 124
    %v1359 = vpop.permute.xlu0 %1358
    %1360 = vrot.lane.b32.xlu0 %v1333, 124
    %v1361 = vpop.permute.xlu0 %1360
    %1362 = vrot.lane.b32.xlu0 %v1334, 124
    %v1363 = vpop.permute.xlu0 %1362
    %1364 = vrot.lane.b32.xlu0 %v1335, 124
    %v1365 = vpop.permute.xlu0 %1364
    %1366 = vrot.lane.b32.xlu0 %v1336, 124
    %v1367 = vpop.permute.xlu0 %1366
    %1368 = vrot.lane.b32.xlu0 %v1337, 124
    %v1369 = vpop.permute.xlu0 %1368
    %1370 = vrot.lane.b32.xlu0 %v1338, 124
    %v1371 = vpop.permute.xlu0 %1370
    %1372 = vrot.lane.b32.xlu0 %v1339, 124
    %v1373 = vpop.permute.xlu0 %1372
    %1374 = vrot.lane.b32.xlu0 %v1340, 124
    %v1375 = vpop.permute.xlu0 %1374
    %1376 = vrot.lane.b32.xlu0 %v1341, 124
    %v1377 = vpop.permute.xlu0 %1376
    %vm1378 = vcmask 1014784
    %v1379 = vsel %vm1378, %v1355, %v1357
    %v1380 = vsel %vm1378, %v1359, %v1361
    %v1381 = vsel %vm1378, %v1363, %v1365
    %v1382 = vsel %vm1378, %v1367, %v1369
    %v1383 = vsel %vm1378, %v1371, %v1373
    %v1384 = vsel %vm1378, %v1375, %v1377
    %1391 = vst [vmem:[#allocation5] sm:$0xff] %v1379
    %1392 = vst [vmem:[#allocation5 + $0x8] sm:$0xff] %v1380
    %1393 = vst [vmem:[#allocation5 + $0x10] sm:$0xff] %v1381
    %1394 = vst [vmem:[#allocation5 + $0x18] sm:$0xff] %v1382
    %1395 = vst [vmem:[#allocation5 + $0x20] sm:$0xff] %v1383
    %1396 = vst [vmem:[#allocation5 + $0x28] sm:$0xff] %v1384
    %s1397 = sld [smem:[#allocation7 + $0x4]]
    %s1398 = sld [smem:[#allocation7 + $0x35]]
    %v1399 = vld [vmem:[#allocation5] sm:$0xff]
    %v1400 = vld [vmem:[#allocation5 + $0x8] sm:$0xff]
    %v1401 = vld [vmem:[#allocation5 + $0x16] sm:$0xff]
    %v1402 = vld [vmem:[#allocation5 + $0x1e] sm:$0xff]
    %v1403 = vstv %s1397
    %v1404 = vmul.f32 %v1403, %v1399
    %v1405 = vmul.f32 %v1403, %v1400
    %v1406 = vadd.f32 %v1323, %v1404
    %v1407 = vadd.f32 %v1324, %v1405
    %v1408 = vstv %s1398
    %v1409 = vmul.f32 %v1408, %v1401
    %v1410 = vmul.f32 %v1408, %v1402
    %v1411 = vadd.f32 %v1328, %v1409
    %v1412 = vadd.f32 %v1329, %v1410
    %s1413 = sld [smem:[#allocation7 + $0xb]]
    %s1414 = sld [smem:[#allocation7 + $0x3c]]
    %v1415 = vld [vmem:[#allocation5 + $0x1] sm:$0xff]
    %v1416 = vld [vmem:[#allocation5 + $0x9] sm:$0xff]
    %v1417 = vld [vmem:[#allocation5 + $0x17] sm:$0xff]
    %v1418 = vld [vmem:[#allocation5 + $0x1f] sm:$0xff]
    %v1419 = vstv %s1413
    %v1420 = vmul.f32 %v1419, %v1415
    %v1421 = vmul.f32 %v1419, %v1416
    %v1422 = vadd.f32 %v1307, %v1420
    %v1423 = vadd.f32 %v1308, %v1421
    %v1424 = vstv %s1414
    %v1425 = vmul.f32 %v1424, %v1417
    %v1426 = vmul.f32 %v1424, %v1418
    %v1427 = vadd.f32 %v1312, %v1425
    %v1428 = vadd.f32 %v1313, %v1426
    %s1429 = sld [smem:[#allocation7 + $0x12]]
    %s1430 = sld [smem:[#allocation7 + $0x43]]
    %v1431 = vld [vmem:[#allocation5 + $0x2] sm:$0xff]
    %v1432 = vld [vmem:[#allocation5 + $0xa] sm:$0xff]
    %v1433 = vld [vmem:[#allocation5 + $0x18] sm:$0xff]
    %v1434 = vld [vmem:[#allocation5 + $0x20] sm:$0xff]
    %v1435 = vstv %s1429
    %v1436 = vmul.f32 %v1435, %v1431
    %v1437 = vmul.f32 %v1435, %v1432
    %v1438 = vadd.f32 %v1406, %v1436
    %v1439 = vadd.f32 %v1407, %v1437
    %v1440 = vstv %s1430
    %v1441 = vmul.f32 %v1440, %v1433
    %v1442 = vmul.f32 %v1440, %v1434
    %v1443 = vadd.f32 %v1411, %v1441
    %v1444 = vadd.f32 %v1412, %v1442
    %s1445 = sld [smem:[#allocation7 + $0x19]]
    %s1446 = sld [smem:[#allocation7 + $0x4a]]
    %v1447 = vld [vmem:[#allocation5 + $0x3] sm:$0xff]
    %v1448 = vld [vmem:[#allocation5 + $0xb] sm:$0xff]
    %v1449 = vld [vmem:[#allocation5 + $0x19] sm:$0xff]
    %v1450 = vld [vmem:[#allocation5 + $0x21] sm:$0xff]
    %v1451 = vstv %s1445
    %v1452 = vmul.f32 %v1451, %v1447
    %v1453 = vmul.f32 %v1451, %v1448
    %v1454 = vadd.f32 %v1422, %v1452
    %v1455 = vadd.f32 %v1423, %v1453
    %v1456 = vstv %s1446
    %v1457 = vmul.f32 %v1456, %v1449
    %v1458 = vmul.f32 %v1456, %v1450
    %v1459 = vadd.f32 %v1427, %v1457
    %v1460 = vadd.f32 %v1428, %v1458
    %s1461 = sld [smem:[#allocation7 + $0x20]]
    %s1462 = sld [smem:[#allocation7 + $0x51]]
    %v1463 = vld [vmem:[#allocation5 + $0x4] sm:$0xff]
    %v1464 = vld [vmem:[#allocation5 + $0xc] sm:$0xff]
    %v1465 = vld [vmem:[#allocation5 + $0x1a] sm:$0xff]
    %v1466 = vld [vmem:[#allocation5 + $0x22] sm:$0xff]
    %v1467 = vstv %s1461
    %v1468 = vmul.f32 %v1467, %v1463
    %v1469 = vmul.f32 %v1467, %v1464
    %v1470 = vadd.f32 %v1438, %v1468
    %v1471 = vadd.f32 %v1439, %v1469
    %v1472 = vstv %s1462
    %v1473 = vmul.f32 %v1472, %v1465
    %v1474 = vmul.f32 %v1472, %v1466
    %v1475 = vadd.f32 %v1443, %v1473
    %v1476 = vadd.f32 %v1444, %v1474
    %s1477 = sld [smem:[#allocation7 + $0x27]]
    %s1478 = sld [smem:[#allocation7 + $0x58]]
    %v1479 = vld [vmem:[#allocation5 + $0x5] sm:$0xff]
    %v1480 = vld [vmem:[#allocation5 + $0xd] sm:$0xff]
    %v1481 = vld [vmem:[#allocation5 + $0x1b] sm:$0xff]
    %v1482 = vld [vmem:[#allocation5 + $0x23] sm:$0xff]
    %v1483 = vstv %s1477
    %v1484 = vmul.f32 %v1483, %v1479
    %v1485 = vmul.f32 %v1483, %v1480
    %v1486 = vadd.f32 %v1454, %v1484
    %v1487 = vadd.f32 %v1455, %v1485
    %v1488 = vstv %s1478
    %v1489 = vmul.f32 %v1488, %v1481
    %v1490 = vmul.f32 %v1488, %v1482
    %v1491 = vadd.f32 %v1459, %v1489
    %v1492 = vadd.f32 %v1460, %v1490
    %s1493 = sld [smem:[#allocation7 + $0x2e]]
    %s1494 = sld [smem:[#allocation7 + $0x5f]]
    %v1495 = vld [vmem:[#allocation5 + $0x6] sm:$0xff]
    %v1496 = vld [vmem:[#allocation5 + $0xe] sm:$0xff]
    %v1497 = vld [vmem:[#allocation5 + $0x1c] sm:$0xff]
    %v1498 = vld [vmem:[#allocation5 + $0x24] sm:$0xff]
    %v1499 = vstv %s1493
    %v1500 = vmul.f32 %v1499, %v1495
    %v1501 = vmul.f32 %v1499, %v1496
    %v1502 = vadd.f32 %v1470, %v1500
    %v1503 = vadd.f32 %v1471, %v1501
    %v1504 = vstv %s1494
    %v1505 = vmul.f32 %v1504, %v1497
    %v1506 = vmul.f32 %v1504, %v1498
    %v1507 = vadd.f32 %v1475, %v1505
    %v1508 = vadd.f32 %v1476, %v1506
    %v1509 = vld [vmem:[#allocation4] sm:$0xff]
    %v1510 = vld [vmem:[#allocation4 + $0x8] sm:$0xff]
    %v1511 = vld [vmem:[#allocation4 + $0x10] sm:$0xff]
    %v1512 = vld [vmem:[#allocation4 + $0x18] sm:$0xff]
    %v1513 = vld [vmem:[#allocation4 + $0x20] sm:$0xff]
    %v1514 = vld [vmem:[#allocation4 + $0x28] sm:$0xff]
    %v1515 = vld [vmem:[#allocation4 + $0x30] sm:$0xff]
    %v1516 = vld [vmem:[#allocation4 + $0x38] sm:$0xff]
    %v1517 = vld [vmem:[#allocation4 + $0x40] sm:$0xff]
    %v1518 = vld [vmem:[#allocation4 + $0x48] sm:$0xff]
    %v1519 = vld [vmem:[#allocation4 + $0x50] sm:$0xff]
    %v1520 = vld [vmem:[#allocation4 + $0x58] sm:$0xff]
    %1533 = vrot.lane.b32.xlu0 %v1509, 123
    %v1534 = vpop.permute.xlu0 %1533
    %1535 = vrot.lane.b32.xlu0 %v1510, 123
    %v1536 = vpop.permute.xlu0 %1535
    %1537 = vrot.lane.b32.xlu0 %v1511, 123
    %v1538 = vpop.permute.xlu0 %1537
    %1539 = vrot.lane.b32.xlu0 %v1512, 123
    %v1540 = vpop.permute.xlu0 %1539
    %1541 = vrot.lane.b32.xlu0 %v1513, 123
    %v1542 = vpop.permute.xlu0 %1541
    %1543 = vrot.lane.b32.xlu0 %v1514, 123
    %v1544 = vpop.permute.xlu0 %1543
    %1545 = vrot.lane.b32.xlu0 %v1515, 123
    %v1546 = vpop.permute.xlu0 %1545
    %1547 = vrot.lane.b32.xlu0 %v1516, 123
    %v1548 = vpop.permute.xlu0 %1547
    %1549 = vrot.lane.b32.xlu0 %v1517, 123
    %v1550 = vpop.permute.xlu0 %1549
    %1551 = vrot.lane.b32.xlu0 %v1518, 123
    %v1552 = vpop.permute.xlu0 %1551
    %1553 = vrot.lane.b32.xlu0 %v1519, 123
    %v1554 = vpop.permute.xlu0 %1553
    %1555 = vrot.lane.b32.xlu0 %v1520, 123
    %v1556 = vpop.permute.xlu0 %1555
    %vm1557 = vcmask 1006592
    %v1558 = vsel %vm1557, %v1534, %v1536
    %v1559 = vsel %vm1557, %v1538, %v1540
    %v1560 = vsel %vm1557, %v1542, %v1544
    %v1561 = vsel %vm1557, %v1546, %v1548
    %v1562 = vsel %vm1557, %v1550, %v1552
    %v1563 = vsel %vm1557, %v1554, %v1556
    %1570 = vst [vmem:[#allocation5] sm:$0xff] %v1558
    %1571 = vst [vmem:[#allocation5 + $0x8] sm:$0xff] %v1559
    %1572 = vst [vmem:[#allocation5 + $0x10] sm:$0xff] %v1560
    %1573 = vst [vmem:[#allocation5 + $0x18] sm:$0xff] %v1561
    %1574 = vst [vmem:[#allocation5 + $0x20] sm:$0xff] %v1562
    %1575 = vst [vmem:[#allocation5 + $0x28] sm:$0xff] %v1563
    %s1576 = sld [smem:[#allocation7 + $0x5]]
    %s1577 = sld [smem:[#allocation7 + $0x36]]
    %v1578 = vld [vmem:[#allocation5] sm:$0xff]
    %v1579 = vld [vmem:[#allocation5 + $0x8] sm:$0xff]
    %v1580 = vld [vmem:[#allocation5 + $0x16] sm:$0xff]
    %v1581 = vld [vmem:[#allocation5 + $0x1e] sm:$0xff]
    %v1582 = vstv %s1576
    %v1583 = vmul.f32 %v1582, %v1578
    %v1584 = vmul.f32 %v1582, %v1579
    %v1585 = vadd.f32 %v1502, %v1583
    %v1586 = vadd.f32 %v1503, %v1584
    %v1587 = vstv %s1577
    %v1588 = vmul.f32 %v1587, %v1580
    %v1589 = vmul.f32 %v1587, %v1581
    %v1590 = vadd.f32 %v1507, %v1588
    %v1591 = vadd.f32 %v1508, %v1589
    %s1592 = sld [smem:[#allocation7 + $0xc]]
    %s1593 = sld [smem:[#allocation7 + $0x3d]]
    %v1594 = vld [vmem:[#allocation5 + $0x1] sm:$0xff]
    %v1595 = vld [vmem:[#allocation5 + $0x9] sm:$0xff]
    %v1596 = vld [vmem:[#allocation5 + $0x17] sm:$0xff]
    %v1597 = vld [vmem:[#allocation5 + $0x1f] sm:$0xff]
    %v1598 = vstv %s1592
    %v1599 = vmul.f32 %v1598, %v1594
    %v1600 = vmul.f32 %v1598, %v1595
    %v1601 = vadd.f32 %v1486, %v1599
    %v1602 = vadd.f32 %v1487, %v1600
    %v1603 = vstv %s1593
    %v1604 = vmul.f32 %v1603, %v1596
    %v1605 = vmul.f32 %v1603, %v1597
    %v1606 = vadd.f32 %v1491, %v1604
    %v1607 = vadd.f32 %v1492, %v1605
    %s1608 = sld [smem:[#allocation7 + $0x13]]
    %s1609 = sld [smem:[#allocation7 + $0x44]]
    %v1610 = vld [vmem:[#allocation5 + $0x2] sm:$0xff]
    %v1611 = vld [vmem:[#allocation5 + $0xa] sm:$0xff]
    %v1612 = vld [vmem:[#allocation5 + $0x18] sm:$0xff]
    %v1613 = vld [vmem:[#allocation5 + $0x20] sm:$0xff]
    %v1614 = vstv %s1608
    %v1615 = vmul.f32 %v1614, %v1610
    %v1616 = vmul.f32 %v1614, %v1611
    %v1617 = vadd.f32 %v1585, %v1615
    %v1618 = vadd.f32 %v1586, %v1616
    %v1619 = vstv %s1609
    %v1620 = vmul.f32 %v1619, %v1612
    %v1621 = vmul.f32 %v1619, %v1613
    %v1622 = vadd.f32 %v1590, %v1620
    %v1623 = vadd.f32 %v1591, %v1621
    %s1624 = sld [smem:[#allocation7 + $0x1a]]
    %s1625 = sld [smem:[#allocation7 + $0x4b]]
    %v1626 = vld [vmem:[#allocation5 + $0x3] sm:$0xff]
    %v1627 = vld [vmem:[#allocation5 + $0xb] sm:$0xff]
    %v1628 = vld [vmem:[#allocation5 + $0x19] sm:$0xff]
    %v1629 = vld [vmem:[#allocation5 + $0x21] sm:$0xff]
    %v1630 = vstv %s1624
    %v1631 = vmul.f32 %v1630, %v1626
    %v1632 = vmul.f32 %v1630, %v1627
    %v1633 = vadd.f32 %v1601, %v1631
    %v1634 = vadd.f32 %v1602, %v1632
    %v1635 = vstv %s1625
    %v1636 = vmul.f32 %v1635, %v1628
    %v1637 = vmul.f32 %v1635, %v1629
    %v1638 = vadd.f32 %v1606, %v1636
    %v1639 = vadd.f32 %v1607, %v1637
    %s1640 = sld [smem:[#allocation7 + $0x21]]
    %s1641 = sld [smem:[#allocation7 + $0x52]]
    %v1642 = vld [vmem:[#allocation5 + $0x4] sm:$0xff]
    %v1643 = vld [vmem:[#allocation5 + $0xc] sm:$0xff]
    %v1644 = vld [vmem:[#allocation5 + $0x1a] sm:$0xff]
    %v1645 = vld [vmem:[#allocation5 + $0x22] sm:$0xff]
    %v1646 = vstv %s1640
    %v1647 = vmul.f32 %v1646, %v1642
    %v1648 = vmul.f32 %v1646, %v1643
    %v1649 = vadd.f32 %v1617, %v1647
    %v1650 = vadd.f32 %v1618, %v1648
    %v1651 = vstv %s1641
    %v1652 = vmul.f32 %v1651, %v1644
    %v1653 = vmul.f32 %v1651, %v1645
    %v1654 = vadd.f32 %v1622, %v1652
    %v1655 = vadd.f32 %v1623, %v1653
    %s1656 = sld [smem:[#allocation7 + $0x28]]
    %s1657 = sld [smem:[#allocation7 + $0x59]]
    %v1658 = vld [vmem:[#allocation5 + $0x5] sm:$0xff]
    %v1659 = vld [vmem:[#allocation5 + $0xd] sm:$0xff]
    %v1660 = vld [vmem:[#allocation5 + $0x1b] sm:$0xff]
    %v1661 = vld [vmem:[#allocation5 + $0x23] sm:$0xff]
    %v1662 = vstv %s1656
    %v1663 = vmul.f32 %v1662, %v1658
    %v1664 = vmul.f32 %v1662, %v1659
    %v1665 = vadd.f32 %v1633, %v1663
    %v1666 = vadd.f32 %v1634, %v1664
    %v1667 = vstv %s1657
    %v1668 = vmul.f32 %v1667, %v1660
    %v1669 = vmul.f32 %v1667, %v1661
    %v1670 = vadd.f32 %v1638, %v1668
    %v1671 = vadd.f32 %v1639, %v1669
    %s1672 = sld [smem:[#allocation7 + $0x2f]]
    %s1673 = sld [smem:[#allocation7 + $0x60]]
    %v1674 = vld [vmem:[#allocation5 + $0x6] sm:$0xff]
    %v1675 = vld [vmem:[#allocation5 + $0xe] sm:$0xff]
    %v1676 = vld [vmem:[#allocation5 + $0x1c] sm:$0xff]
    %v1677 = vld [vmem:[#allocation5 + $0x24] sm:$0xff]
    %v1678 = vstv %s1672
    %v1679 = vmul.f32 %v1678, %v1674
    %v1680 = vmul.f32 %v1678, %v1675
    %v1681 = vadd.f32 %v1649, %v1679
    %v1682 = vadd.f32 %v1650, %v1680
    %v1683 = vstv %s1673
    %v1684 = vmul.f32 %v1683, %v1676
    %v1685 = vmul.f32 %v1683, %v1677
    %v1686 = vadd.f32 %v1654, %v1684
    %v1687 = vadd.f32 %v1655, %v1685
    %v1688 = vld [vmem:[#allocation4] sm:$0xff]
    %v1689 = vld [vmem:[#allocation4 + $0x8] sm:$0xff]
    %v1690 = vld [vmem:[#allocation4 + $0x10] sm:$0xff]
    %v1691 = vld [vmem:[#allocation4 + $0x18] sm:$0xff]
    %v1692 = vld [vmem:[#allocation4 + $0x20] sm:$0xff]
    %v1693 = vld [vmem:[#allocation4 + $0x28] sm:$0xff]
    %v1694 = vld [vmem:[#allocation4 + $0x30] sm:$0xff]
    %v1695 = vld [vmem:[#allocation4 + $0x38] sm:$0xff]
    %v1696 = vld [vmem:[#allocation4 + $0x40] sm:$0xff]
    %v1697 = vld [vmem:[#allocation4 + $0x48] sm:$0xff]
    %v1698 = vld [vmem:[#allocation4 + $0x50] sm:$0xff]
    %v1699 = vld [vmem:[#allocation4 + $0x58] sm:$0xff]
    %1712 = vrot.lane.b32.xlu0 %v1688, 122
    %v1713 = vpop.permute.xlu0 %1712
    %1714 = vrot.lane.b32.xlu0 %v1689, 122
    %v1715 = vpop.permute.xlu0 %1714
    %1716 = vrot.lane.b32.xlu0 %v1690, 122
    %v1717 = vpop.permute.xlu0 %1716
    %1718 = vrot.lane.b32.xlu0 %v1691, 122
    %v1719 = vpop.permute.xlu0 %1718
    %1720 = vrot.lane.b32.xlu0 %v1692, 122
    %v1721 = vpop.permute.xlu0 %1720
    %1722 = vrot.lane.b32.xlu0 %v1693, 122
    %v1723 = vpop.permute.xlu0 %1722
    %1724 = vrot.lane.b32.xlu0 %v1694, 122
    %v1725 = vpop.permute.xlu0 %1724
    %1726 = vrot.lane.b32.xlu0 %v1695, 122
    %v1727 = vpop.permute.xlu0 %1726
    %1728 = vrot.lane.b32.xlu0 %v1696, 122
    %v1729 = vpop.permute.xlu0 %1728
    %1730 = vrot.lane.b32.xlu0 %v1697, 122
    %v1731 = vpop.permute.xlu0 %1730
    %1732 = vrot.lane.b32.xlu0 %v1698, 122
    %v1733 = vpop.permute.xlu0 %1732
    %1734 = vrot.lane.b32.xlu0 %v1699, 122
    %v1735 = vpop.permute.xlu0 %1734
    %vm1736 = vcmask 998400
    %v1737 = vsel %vm1736, %v1713, %v1715
    %v1738 = vsel %vm1736, %v1717, %v1719
    %v1739 = vsel %vm1736, %v1721, %v1723
    %v1740 = vsel %vm1736, %v1725, %v1727
    %v1741 = vsel %vm1736, %v1729, %v1731
    %v1742 = vsel %vm1736, %v1733, %v1735
    %1749 = vst [vmem:[#allocation5] sm:$0xff] %v1737
    %1750 = vst [vmem:[#allocation5 + $0x8] sm:$0xff] %v1738
    %1751 = vst [vmem:[#allocation5 + $0x10] sm:$0xff] %v1739
    %1752 = vst [vmem:[#allocation5 + $0x18] sm:$0xff] %v1740
    %1753 = vst [vmem:[#allocation5 + $0x20] sm:$0xff] %v1741
    %1754 = vst [vmem:[#allocation5 + $0x28] sm:$0xff] %v1742
    %s1755 = sld [smem:[#allocation7 + $0x6]]
    %s1756 = sld [smem:[#allocation7 + $0x37]]
    %v1757 = vld [vmem:[#allocation5] sm:$0xff]
    %v1758 = vld [vmem:[#allocation5 + $0x8] sm:$0xff]
    %v1759 = vld [vmem:[#allocation5 + $0x16] sm:$0xff]
    %v1760 = vld [vmem:[#allocation5 + $0x1e] sm:$0xff]
    %v1761 = vstv %s1755
    %v1762 = vmul.f32 %v1761, %v1757
    %v1763 = vmul.f32 %v1761, %v1758
    %v1764 = vadd.f32 %v1681, %v1762
    %v1765 = vadd.f32 %v1682, %v1763
    %v1766 = vstv %s1756
    %v1767 = vmul.f32 %v1766, %v1759
    %v1768 = vmul.f32 %v1766, %v1760
    %v1769 = vadd.f32 %v1686, %v1767
    %v1770 = vadd.f32 %v1687, %v1768
    %s1771 = sld [smem:[#allocation7 + $0xd]]
    %s1772 = sld [smem:[#allocation7 + $0x3e]]
    %v1773 = vld [vmem:[#allocation5 + $0x1] sm:$0xff]
    %v1774 = vld [vmem:[#allocation5 + $0x9] sm:$0xff]
    %v1775 = vld [vmem:[#allocation5 + $0x17] sm:$0xff]
    %v1776 = vld [vmem:[#allocation5 + $0x1f] sm:$0xff]
    %v1777 = vstv %s1771
    %v1778 = vmul.f32 %v1777, %v1773
    %v1779 = vmul.f32 %v1777, %v1774
    %v1780 = vadd.f32 %v1665, %v1778
    %v1781 = vadd.f32 %v1666, %v1779
    %v1782 = vstv %s1772
    %v1783 = vmul.f32 %v1782, %v1775
    %v1784 = vmul.f32 %v1782, %v1776
    %v1785 = vadd.f32 %v1670, %v1783
    %v1786 = vadd.f32 %v1671, %v1784
    %s1787 = sld [smem:[#allocation7 + $0x14]]
    %s1788 = sld [smem:[#allocation7 + $0x45]]
    %v1789 = vld [vmem:[#allocation5 + $0x2] sm:$0xff]
    %v1790 = vld [vmem:[#allocation5 + $0xa] sm:$0xff]
    %v1791 = vld [vmem:[#allocation5 + $0x18] sm:$0xff]
    %v1792 = vld [vmem:[#allocation5 + $0x20] sm:$0xff]
    %v1793 = vstv %s1787
    %v1794 = vmul.f32 %v1793, %v1789
    %v1795 = vmul.f32 %v1793, %v1790
    %v1796 = vadd.f32 %v1764, %v1794
    %v1797 = vadd.f32 %v1765, %v1795
    %v1798 = vstv %s1788
    %v1799 = vmul.f32 %v1798, %v1791
    %v1800 = vmul.f32 %v1798, %v1792
    %v1801 = vadd.f32 %v1769, %v1799
    %v1802 = vadd.f32 %v1770, %v1800
    %s1803 = sld [smem:[#allocation7 + $0x1b]]
    %s1804 = sld [smem:[#allocation7 + $0x4c]]
    %v1805 = vld [vmem:[#allocation5 + $0x3] sm:$0xff]
    %v1806 = vld [vmem:[#allocation5 + $0xb] sm:$0xff]
    %v1807 = vld [vmem:[#allocation5 + $0x19] sm:$0xff]
    %v1808 = vld [vmem:[#allocation5 + $0x21] sm:$0xff]
    %v1809 = vstv %s1803
    %v1810 = vmul.f32 %v1809, %v1805
    %v1811 = vmul.f32 %v1809, %v1806
    %v1812 = vadd.f32 %v1780, %v1810
    %v1813 = vadd.f32 %v1781, %v1811
    %v1814 = vstv %s1804
    %v1815 = vmul.f32 %v1814, %v1807
    %v1816 = vmul.f32 %v1814, %v1808
    %v1817 = vadd.f32 %v1785, %v1815
    %v1818 = vadd.f32 %v1786, %v1816
    %s1819 = sld [smem:[#allocation7 + $0x22]]
    %s1820 = sld [smem:[#allocation7 + $0x53]]
    %v1821 = vld [vmem:[#allocation5 + $0x4] sm:$0xff]
    %v1822 = vld [vmem:[#allocation5 + $0xc] sm:$0xff]
    %v1823 = vld [vmem:[#allocation5 + $0x1a] sm:$0xff]
    %v1824 = vld [vmem:[#allocation5 + $0x22] sm:$0xff]
    %v1825 = vstv %s1819
    %v1826 = vmul.f32 %v1825, %v1821
    %v1827 = vmul.f32 %v1825, %v1822
    %v1828 = vadd.f32 %v1796, %v1826
    %v1829 = vadd.f32 %v1797, %v1827
    %v1830 = vstv %s1820
    %v1831 = vmul.f32 %v1830, %v1823
    %v1832 = vmul.f32 %v1830, %v1824
    %v1833 = vadd.f32 %v1801, %v1831
    %v1834 = vadd.f32 %v1802, %v1832
    %s1835 = sld [smem:[#allocation7 + $0x29]]
    %s1836 = sld [smem:[#allocation7 + $0x5a]]
    %v1837 = vld [vmem:[#allocation5 + $0x5] sm:$0xff]
    %v1838 = vld [vmem:[#allocation5 + $0xd] sm:$0xff]
    %v1839 = vld [vmem:[#allocation5 + $0x1b] sm:$0xff]
    %v1840 = vld [vmem:[#allocation5 + $0x23] sm:$0xff]
    %v1841 = vstv %s1835
    %v1842 = vmul.f32 %v1841, %v1837
    %v1843 = vmul.f32 %v1841, %v1838
    %v1844 = vadd.f32 %v1812, %v1842
    %v1845 = vadd.f32 %v1813, %v1843
    %v1846 = vstv %s1836
    %v1847 = vmul.f32 %v1846, %v1839
    %v1848 = vmul.f32 %v1846, %v1840
    %v1849 = vadd.f32 %v1817, %v1847
    %v1850 = vadd.f32 %v1818, %v1848
    %s1851 = sld [smem:[#allocation7 + $0x30]]
    %s1852 = sld [smem:[#allocation7 + $0x61]]
    %v1853 = vld [vmem:[#allocation5 + $0x6] sm:$0xff]
    %v1854 = vld [vmem:[#allocation5 + $0xe] sm:$0xff]
    %v1855 = vld [vmem:[#allocation5 + $0x1c] sm:$0xff]
    %v1856 = vld [vmem:[#allocation5 + $0x24] sm:$0xff]
    %v1857 = vstv %s1851
    %v1858 = vmul.f32 %v1857, %v1853
    %v1859 = vmul.f32 %v1857, %v1854
    %v1860 = vadd.f32 %v1828, %v1858
    %v1861 = vadd.f32 %v1829, %v1859
    %v1862 = vstv %s1852
    %v1863 = vmul.f32 %v1862, %v1855
    %v1864 = vmul.f32 %v1862, %v1856
    %v1865 = vadd.f32 %v1833, %v1863
    %v1866 = vadd.f32 %v1834, %v1864
    %v1867 = vadd.f32 %v1860, %v1844
    %v1868 = vadd.f32 %v1861, %v1845
    %v1869 = vadd.f32 %v1865, %v1849
    %v1870 = vadd.f32 %v1866, %v1850
    %v1871 = vadd.f32 %v1867, %v1869
    %v1872 = vadd.f32 %v1868, %v1870
    %1875 = vrot.lane.b32.xlu0 %v1871, 106
    %v1876 = vpop.permute.xlu0 %1875
    %1877 = vrot.lane.b32.xlu0 %v1872, 106
    %v1878 = vpop.permute.xlu0 %1877
    %v1881 = vxor.u32 %v1871, 2147483648
    %v1882 = vxor.u32 %v1872, 2147483648
    %v1883 = vxor.u32 %v1876, 2147483648
    %v1884 = vxor.u32 %v1878, 2147483648
    %v1885 = vmul.f32 %v1881, 1.442695
    %v1886 = vpow.pop %v1885
    %v1887 = vmul.f32 %v1882, 1.442695
    %v1888 = vpow.pop %v1887
    %v1889 = vmul.f32 %v1883, 1.442695
    %v1890 = vpow.pop %v1889
    %v1891 = vmul.f32 %v1884, 1.442695
    %v1892 = vpow.pop %v1891
    %v1893 = vadd.f32 %v1886, 1.0
    %v1894 = vadd.f32 %v1888, 1.0
    %v1895 = vadd.f32 %v1890, 1.0
    %v1896 = vadd.f32 %v1892, 1.0
    %v1897 = vrcp.pop %v1893
    %v1898 = vmul.f32 1.0, %v1897
    %v1899 = vrcp.pop %v1894
    %v1900 = vmul.f32 1.0, %v1899
    %v1901 = vrcp.pop %v1895
    %v1902 = vmul.f32 1.0, %v1901
    %v1903 = vrcp.pop %v1896
    %v1904 = vmul.f32 1.0, %v1903
    %v1905 = vcombine.high %v1898, 0.0
    %v1907 = vunpack.c.l.s4 1983009808
    %v1908 = vunpack.c.0.s8 %v1907
    %v1909 = vlaneseq
    %v1910 = vshrl.u32 %v1909, 7
    %v1911 = vsub.s32 %v1908, %v1910
    %v1912 = vrot.slane %v1898, %v1911
    %v1914 = vunpack.c.l.s4 1983009808
    %v1915 = vunpack.c.0.s8 %v1914
    %v1916 = vlaneseq
    %v1917 = vshrl.u32 %v1916, 7
    %v1918 = vsub.s32 %v1915, %v1917
    %v1919 = vrot.slane %v1905, %v1918
    %v1920 = vcombine.high %v1912, 0.0
    %v1922 = vunpack.c.l.s4 1934713408
    %v1923 = vunpack.c.0.s8 %v1922
    %v1924 = vlaneseq
    %v1925 = vshrl.u32 %v1924, 7
    %v1926 = vsub.s32 %v1923, %v1925
    %v1927 = vrot.slane %v1912, %v1926
    %v1929 = vunpack.c.l.s4 1934713408
    %v1930 = vunpack.c.0.s8 %v1929
    %v1931 = vlaneseq
    %v1932 = vshrl.u32 %v1931, 7
    %v1933 = vsub.s32 %v1930, %v1932
    %v1934 = vrot.slane %v1920, %v1933
    %v1935 = vcombine.high %v1919, 0.0
    %v1937 = vunpack.c.l.s4 1934713408
    %v1938 = vunpack.c.0.s8 %v1937
    %v1939 = vlaneseq
    %v1940 = vshrl.u32 %v1939, 7
    %v1941 = vsub.s32 %v1938, %v1940
    %v1942 = vrot.slane %v1919, %v1941
    %v1944 = vunpack.c.l.s4 1934713408
    %v1945 = vunpack.c.0.s8 %v1944
    %v1946 = vlaneseq
    %v1947 = vshrl.u32 %v1946, 7
    %v1948 = vsub.s32 %v1945, %v1947
    %v1949 = vrot.slane %v1935, %v1948
    %v1950 = vcombine.high %v1927, 0.0
    %v1951 = vcombine.high %v1934, 0.0
    %v1952 = vcombine.high %v1942, 0.0
    %v1953 = vcombine.high %v1949, 0.0
    %v1954 = vcombine.high %v1900, 0.0
    %v1956 = vunpack.c.l.s4 1983009808
    %v1957 = vunpack.c.0.s8 %v1956
    %v1958 = vlaneseq
    %v1959 = vshrl.u32 %v1958, 7
    %v1960 = vsub.s32 %v1957, %v1959
    %v1961 = vrot.slane %v1900, %v1960
    %v1963 = vunpack.c.l.s4 1983009808
    %v1964 = vunpack.c.0.s8 %v1963
    %v1965 = vlaneseq
    %v1966 = vshrl.u32 %v1965, 7
    %v1967 = vsub.s32 %v1964, %v1966
    %v1968 = vrot.slane %v1954, %v1967
    %v1969 = vcombine.high %v1961, 0.0
    %v1971 = vunpack.c.l.s4 1934713408
    %v1972 = vunpack.c.0.s8 %v1971
    %v1973 = vlaneseq
    %v1974 = vshrl.u32 %v1973, 7
    %v1975 = vsub.s32 %v1972, %v1974
    %v1976 = vrot.slane %v1961, %v1975
    %v1978 = vunpack.c.l.s4 1934713408
    %v1979 = vunpack.c.0.s8 %v1978
    %v1980 = vlaneseq
    %v1981 = vshrl.u32 %v1980, 7
    %v1982 = vsub.s32 %v1979, %v1981
    %v1983 = vrot.slane %v1969, %v1982
    %v1984 = vcombine.high %v1968, 0.0
    %v1986 = vunpack.c.l.s4 1934713408
    %v1987 = vunpack.c.0.s8 %v1986
    %v1988 = vlaneseq
    %v1989 = vshrl.u32 %v1988, 7
    %v1990 = vsub.s32 %v1987, %v1989
    %v1991 = vrot.slane %v1968, %v1990
    %v1993 = vunpack.c.l.s4 1934713408
    %v1994 = vunpack.c.0.s8 %v1993
    %v1995 = vlaneseq
    %v1996 = vshrl.u32 %v1995, 7
    %v1997 = vsub.s32 %v1994, %v1996
    %v1998 = vrot.slane %v1984, %v1997
    %v1999 = vcombine.high %v1976, 0.0
    %v2000 = vcombine.high %v1983, 0.0
    %v2001 = vcombine.high %v1991, 0.0
    %v2002 = vcombine.high %v1998, 0.0
    %v2003 = vcombine.high %v1902, 0.0
    %v2005 = vunpack.c.l.s4 1983009808
    %v2006 = vunpack.c.0.s8 %v2005
    %v2007 = vlaneseq
    %v2008 = vshrl.u32 %v2007, 7
    %v2009 = vsub.s32 %v2006, %v2008
    %v2010 = vrot.slane %v1902, %v2009
    %v2012 = vunpack.c.l.s4 1983009808
    %v2013 = vunpack.c.0.s8 %v2012
    %v2014 = vlaneseq
    %v2015 = vshrl.u32 %v2014, 7
    %v2016 = vsub.s32 %v2013, %v2015
    %v2017 = vrot.slane %v2003, %v2016
    %v2018 = vcombine.high %v2010, 0.0
    %v2020 = vunpack.c.l.s4 1934713408
    %v2021 = vunpack.c.0.s8 %v2020
    %v2022 = vlaneseq
    %v2023 = vshrl.u32 %v2022, 7
    %v2024 = vsub.s32 %v2021, %v2023
    %v2025 = vrot.slane %v2010, %v2024
    %v2027 = vunpack.c.l.s4 1934713408
    %v2028 = vunpack.c.0.s8 %v2027
    %v2029 = vlaneseq
    %v2030 = vshrl.u32 %v2029, 7
    %v2031 = vsub.s32 %v2028, %v2030
    %v2032 = vrot.slane %v2018, %v2031
    %v2033 = vcombine.high %v2017, 0.0
    %v2035 = vunpack.c.l.s4 1934713408
    %v2036 = vunpack.c.0.s8 %v2035
    %v2037 = vlaneseq
    %v2038 = vshrl.u32 %v2037, 7
    %v2039 = vsub.s32 %v2036, %v2038
    %v2040 = vrot.slane %v2017, %v2039
    %v2042 = vunpack.c.l.s4 1934713408
    %v2043 = vunpack.c.0.s8 %v2042
    %v2044 = vlaneseq
    %v2045 = vshrl.u32 %v2044, 7
    %v2046 = vsub.s32 %v2043, %v2045
    %v2047 = vrot.slane %v2033, %v2046
    %v2048 = vcombine.high %v2025, 0.0
    %v2049 = vcombine.high %v2032, 0.0
    %v2050 = vcombine.high %v2040, 0.0
    %v2051 = vcombine.high %v2047, 0.0
    %v2052 = vcombine.high %v1904, 0.0
    %v2054 = vunpack.c.l.s4 1983009808
    %v2055 = vunpack.c.0.s8 %v2054
    %v2056 = vlaneseq
    %v2057 = vshrl.u32 %v2056, 7
    %v2058 = vsub.s32 %v2055, %v2057
    %v2059 = vrot.slane %v1904, %v2058
    %v2061 = vunpack.c.l.s4 1983009808
    %v2062 = vunpack.c.0.s8 %v2061
    %v2063 = vlaneseq
    %v2064 = vshrl.u32 %v2063, 7
    %v2065 = vsub.s32 %v2062, %v2064
    %v2066 = vrot.slane %v2052, %v2065
    %v2067 = vcombine.high %v2059, 0.0
    %v2069 = vunpack.c.l.s4 1934713408
    %v2070 = vunpack.c.0.s8 %v2069
    %v2071 = vlaneseq
    %v2072 = vshrl.u32 %v2071, 7
    %v2073 = vsub.s32 %v2070, %v2072
    %v2074 = vrot.slane %v2059, %v2073
    %v2076 = vunpack.c.l.s4 1934713408
    %v2077 = vunpack.c.0.s8 %v2076
    %v2078 = vlaneseq
    %v2079 = vshrl.u32 %v2078, 7
    %v2080 = vsub.s32 %v2077, %v2079
    %v2081 = vrot.slane %v2067, %v2080
    %v2082 = vcombine.high %v2066, 0.0
    %v2084 = vunpack.c.l.s4 1934713408
    %v2085 = vunpack.c.0.s8 %v2084
    %v2086 = vlaneseq
    %v2087 = vshrl.u32 %v2086, 7
    %v2088 = vsub.s32 %v2085, %v2087
    %v2089 = vrot.slane %v2066, %v2088
    %v2091 = vunpack.c.l.s4 1934713408
    %v2092 = vunpack.c.0.s8 %v2091
    %v2093 = vlaneseq
    %v2094 = vshrl.u32 %v2093, 7
    %v2095 = vsub.s32 %v2092, %v2094
    %v2096 = vrot.slane %v2082, %v2095
    %v2097 = vcombine.high %v2074, 0.0
    %v2098 = vcombine.high %v2081, 0.0
    %v2099 = vcombine.high %v2089, 0.0
    %v2100 = vcombine.high %v2096, 0.0
    %2103 = vrot.lane.b32.xlu0 %v1950, 16
    %v2104 = vpop.permute.xlu0 %2103
    %2105 = vrot.lane.b32.xlu0 %v2048, 16
    %v2106 = vpop.permute.xlu0 %2105
    %2111 = vrot.lane.b32.xlu0 %v1934, 32
    %v2112 = vpop.permute.xlu0 %2111
    %2113 = vrot.lane.b32.xlu0 %v2032, 32
    %v2114 = vpop.permute.xlu0 %2113
    %2119 = vrot.lane.b32.xlu0 %v1951, 48
    %v2120 = vpop.permute.xlu0 %2119
    %2121 = vrot.lane.b32.xlu0 %v2049, 48
    %v2122 = vpop.permute.xlu0 %2121
    %2127 = vrot.lane.b32.xlu0 %v1942, 64
    %v2128 = vpop.permute.xlu0 %2127
    %2129 = vrot.lane.b32.xlu0 %v2040, 64
    %v2130 = vpop.permute.xlu0 %2129
    %2135 = vrot.lane.b32.xlu0 %v1952, 80
    %v2136 = vpop.permute.xlu0 %2135
    %2137 = vrot.lane.b32.xlu0 %v2050, 80
    %v2138 = vpop.permute.xlu0 %2137
    %2143 = vrot.lane.b32.xlu0 %v1949, 96
    %v2144 = vpop.permute.xlu0 %2143
    %2145 = vrot.lane.b32.xlu0 %v2047, 96
    %v2146 = vpop.permute.xlu0 %2145
    %2151 = vrot.lane.b32.xlu0 %v1953, 112
    %v2152 = vpop.permute.xlu0 %2151
    %2153 = vrot.lane.b32.xlu0 %v2051, 112
    %v2154 = vpop.permute.xlu0 %2153
    %2159 = vrot.lane.b32.xlu0 %v1999, 16
    %v2160 = vpop.permute.xlu0 %2159
    %2161 = vrot.lane.b32.xlu0 %v2097, 16
    %v2162 = vpop.permute.xlu0 %2161
    %2167 = vrot.lane.b32.xlu0 %v1983, 32
    %v2168 = vpop.permute.xlu0 %2167
    %2169 = vrot.lane.b32.xlu0 %v2081, 32
    %v2170 = vpop.permute.xlu0 %2169
    %2175 = vrot.lane.b32.xlu0 %v2000, 48
    %v2176 = vpop.permute.xlu0 %2175
    %2177 = vrot.lane.b32.xlu0 %v2098, 48
    %v2178 = vpop.permute.xlu0 %2177
    %2183 = vrot.lane.b32.xlu0 %v1991, 64
    %v2184 = vpop.permute.xlu0 %2183
    %2185 = vrot.lane.b32.xlu0 %v2089, 64
    %v2186 = vpop.permute.xlu0 %2185
    %2191 = vrot.lane.b32.xlu0 %v2001, 80
    %v2192 = vpop.permute.xlu0 %2191
    %2193 = vrot.lane.b32.xlu0 %v2099, 80
    %v2194 = vpop.permute.xlu0 %2193
    %2199 = vrot.lane.b32.xlu0 %v1998, 96
    %v2200 = vpop.permute.xlu0 %2199
    %2201 = vrot.lane.b32.xlu0 %v2096, 96
    %v2202 = vpop.permute.xlu0 %2201
    %2207 = vrot.lane.b32.xlu0 %v2002, 112
    %v2208 = vpop.permute.xlu0 %2207
    %2209 = vrot.lane.b32.xlu0 %v2100, 112
    %v2210 = vpop.permute.xlu0 %2209
    %vm2213 = vcmask 130048
    %v2214 = vsel %vm2213, %v1927, %v2104
    %v2215 = vsel %vm2213, %v2025, %v2106
    %vm2216 = vcmask 261120
    %v2217 = vsel %vm2216, %v2214, %v2112
    %v2218 = vsel %vm2216, %v2215, %v2114
    %vm2219 = vcmask 392192
    %v2220 = vsel %vm2219, %v2217, %v2120
    %v2221 = vsel %vm2219, %v2218, %v2122
    %vm2222 = vcmask 523264
    %v2223 = vsel %vm2222, %v2220, %v2128
    %v2224 = vsel %vm2222, %v2221, %v2130
    %vm2225 = vcmask 654336
    %v2226 = vsel %vm2225, %v2223, %v2136
    %v2227 = vsel %vm2225, %v2224, %v2138
    %vm2228 = vcmask 785408
    %v2229 = vsel %vm2228, %v2226, %v2144
    %v2230 = vsel %vm2228, %v2227, %v2146
    %vm2231 = vcmask 916480
    %v2232 = vsel %vm2231, %v2229, %v2152
    %v2233 = vsel %vm2231, %v2230, %v2154
    %v2234 = vsel %vm2213, %v1976, %v2160
    %v2235 = vsel %vm2213, %v2074, %v2162
    %v2236 = vsel %vm2216, %v2234, %v2168
    %v2237 = vsel %vm2216, %v2235, %v2170
    %v2238 = vsel %vm2219, %v2236, %v2176
    %v2239 = vsel %vm2219, %v2237, %v2178
    %v2240 = vsel %vm2222, %v2238, %v2184
    %v2241 = vsel %vm2222, %v2239, %v2186
    %v2242 = vsel %vm2225, %v2240, %v2192
    %v2243 = vsel %vm2225, %v2241, %v2194
    %v2244 = vsel %vm2228, %v2242, %v2200
    %v2245 = vsel %vm2228, %v2243, %v2202
    %v2246 = vsel %vm2231, %v2244, %v2208
    %v2247 = vsel %vm2231, %v2245, %v2210
    %v2252 = vcombine.low %v2232, %v2246
    %v2254 = vunpack.c.l.s4 1966171168
    %v2255 = vunpack.c.0.s8 %v2254
    %v2256 = vlaneseq
    %v2257 = vshrl.u32 %v2256, 7
    %v2258 = vsub.s32 %v2255, %v2257
    %v2259 = vrot.slane %v2252, %v2258
    %v2261 = vunpack.c.l.s4 1966171168
    %v2262 = vunpack.c.0.s8 %v2261
    %v2263 = vlaneseq
    %v2264 = vshrl.u32 %v2263, 7
    %v2265 = vsub.s32 %v2262, %v2264
    %v2266 = vrot.slane %v2259, %v2265
    %v2267 = vcombine.low %v2233, %v2247
    %v2269 = vunpack.c.l.s4 1966171168
    %v2270 = vunpack.c.0.s8 %v2269
    %v2271 = vlaneseq
    %v2272 = vshrl.u32 %v2271, 7
    %v2273 = vsub.s32 %v2270, %v2272
    %v2274 = vrot.slane %v2267, %v2273
    %v2276 = vunpack.c.l.s4 1966171168
    %v2277 = vunpack.c.0.s8 %v2276
    %v2278 = vlaneseq
    %v2279 = vshrl.u32 %v2278, 7
    %v2280 = vsub.s32 %v2277, %v2279
    %v2281 = vrot.slane %v2274, %v2280
    %v2284 = vlaneseq
    %vm2285 = vcmp.ge.s32.totalorder %v2284, 0
    %vm2286 = vcmp.lt.s32.totalorder %v2284, 256
    %vm2287 = vmand %vm2285, %vm2286
    %2288 = vst.msk [vmem:[#allocation11] sm:$0x3] %vm2287, %v2266
    %2289 = vst.msk [vmem:[#allocation11 + $0x2] sm:$0x3] %vm2287, %v2281
    // Predicated region
    $region10: #{tpu_custom_call.1} parent=1 // pred_check
      _
    $region11: #{tpu_custom_call.1} parent=1 // pred_check_branch
      %2291 = sbr.rel (0) target = $region13
    $region12: #{tpu_custom_call.1} parent=1 // pred_region
      %s2293 = ssub.s32 64, 64
      %2294 = vsyncadd [#allocation10], %s2293
      %s2295 = sshll.u32 [#allocation11], 4
      %s2296 = int_to_ptr.vmem [resolvable:$true] %s2295
      %2301 = dma.vmem_to_hbm [thread:$0]  %s2296, 64, %s2, [#allocation10], 32, 32, 2
    $region13: #{tpu_custom_call.1} parent=1 // pred_fallthru
      _
    // Predicated region
    $region14: #{tpu_custom_call.1} parent=1 // pred_check
      _
    $region15: #{tpu_custom_call.1} parent=1 // pred_check_branch
      %2303 = sbr.rel (0) target = $region17
    $region16: #{tpu_custom_call.1} parent=1 // pred_region
      %2304 = dma.done [#allocation10], 64
    $region17: #{tpu_custom_call.1} parent=1 // pred_fallthru
      _
    %2305 = vsyncpa [#allocation9], 1
    %2306 = vsyncpa [#allocation10], 1

</llo_original>
